<compile_context>
chip_gen: v5e
topology: v5e:2x2
jax: 0.10.0
libtpu: 0.0.40
codegen_flags: <defaults>
</compile_context>

<pallas_src>
import jax
import jax.numpy as jnp
from jax.experimental import pallas as pl
from jax.experimental.pallas import tpu as pltpu

OCTUPLE_MAX_IDXS = (255, 127, 128, 255, 127, 31, 253, 48)
# nn.Embedding(d + 1 + 1 + 1 + 1, d_embed)  ->  vocab_i = max_idx_i + 4
VOCAB_SIZES = tuple(d + 4 for d in OCTUPLE_MAX_IDXS)
D_EMBED = 64
# Tables are packed in contiguous pairs -> K per pair rounded up to 128 lanes.
PAIR_K = tuple(
    -(-(VOCAB_SIZES[2 * p] + VOCAB_SIZES[2 * p + 1]) // 128) * 128
    for p in range(4))  # (512, 512, 256, 384), total 1664


def _octuple_embed_kernel(idx_ref, t0_ref, t1_ref, t2_ref, t3_ref, out_ref):
    # idx_ref : (TN, 8)             int32    — tokens on sublanes, octuple slot on lanes
    # tP_ref  : (PAIR_K[P], 256)    bfloat16 — cols [0:128]  = hi limbs, block-diag (2x64)
    #                                           cols [128:256] = lo limbs, block-diag (2x64)
    #                                           rows [0:V_i] table i, [V_i:V_i+V_j] table j
    # out_ref : (TN, 512)           float32  — lane-dense output slab
    tbls = (t0_ref, t1_ref, t2_ref, t3_ref)
    for p in range(4):  # static unroll over the 4 table pairs
        i, j = 2 * p, 2 * p + 1
        v_i = VOCAB_SIZES[i]
        idx_lo = idx_ref[:, i:i + 1]                                    # (TN, 1)
        idx_hi = idx_ref[:, j:j + 1] + v_i                              # (TN, 1), offset into pair
        iota = jax.lax.broadcasted_iota(jnp.int32, (1, PAIR_K[p]), 1)   # (1, K_p)
        # Two-hot row: one hit in the low-table region, one in the high-table
        # region; the block-diagonal column layout keeps them in separate halves.
        onehot = ((iota == idx_lo) | (iota == idx_hi)).astype(jnp.bfloat16)   # (TN, K_p)
        r = jnp.dot(onehot, tbls[p][...],
                    preferred_element_type=jnp.float32)                 # (TN, 256) bf16 MXU
        # hi limb + lo limb -> near-exact f32 embedding row.
        out_ref[:, p * 128:(p + 1) * 128] = r[:, :128] + r[:, 128:]     # 128-lane store


def octuple_embedding(x, packed_tables, d_embed=D_EMBED, tn=1024):
    """x: (B, 8, S) int indices; packed_tables: 4 bf16 (PAIR_K[p], 4*d_embed) limb tables.

    Returns (B, S, 8 * d_embed) float32, matching the PyTorch module.
    tn: token tile size — use 1024-2048 on all generations (per-step overhead
    is fixed ~0.35us; VMEM footprint at tn=2048 is still well under limits).
    """
    assert d_embed == D_EMBED
    B, eight, S = x.shape
    assert eight == 8
    assert tn % 8 == 0
    n = B * S
    # (B, 8, S) -> (N, 8): tokens on the sublane axis, octuple slot on lanes.
    idx = jnp.transpose(x, (0, 2, 1)).reshape(n, 8).astype(jnp.int32)

    n_tiles = pl.cdiv(n, tn)   # ragged final block: no padding, no post-slice copy

    total_k = sum(PAIR_K)
    cost = pl.CostEstimate(
        flops=2 * n * (4 * d_embed) * total_k,           # bf16 MACs (2 limbs stacked in N)
        transcendentals=0,
        bytes_accessed=(n * 8 * 4                        # idx read
                        + n * 8 * d_embed * 4            # f32 output write
                        + total_k * 4 * d_embed * 2),    # resident bf16 limb tables
    )

    out_flat = pl.pallas_call(
        _octuple_embed_kernel,
        out_shape=jax.ShapeDtypeStruct((n, 8 * d_embed), jnp.float32),
        grid=(n_tiles,),
        in_specs=[pl.BlockSpec((tn, 8), lambda i: (i, 0))]
        + [pl.BlockSpec(t.shape, lambda i: (0, 0)) for t in packed_tables],
        out_specs=pl.BlockSpec((tn, 8 * d_embed), lambda i: (i, 0)),
        compiler_params=pltpu.CompilerParams(
            dimension_semantics=("parallel",)),
        cost_estimate=cost,
    )(idx, *packed_tables)

    return out_flat.reshape(B, S, 8 * d_embed)


def make_params(key, d_embed=D_EMBED):
    """Deterministic stand-in for nn.Embedding weights (N(0,1) init).

    Returns (packed_pair_tables, per_table):
      per_table          : list of 8 unpadded (V_i, d_embed) f32 weights
      packed_pair_tables : tuple of 4 bf16 (PAIR_K[p], 4*d_embed) limb tables:
                           cols [0:2D]  = hi bf16 limbs (block-diag over the pair)
                           cols [2D:4D] = lo bf16 limbs (block-diag over the pair)
    """
    per_table = []
    for i, v in enumerate(VOCAB_SIZES):
        k = jax.random.fold_in(key, i)
        per_table.append(jax.random.normal(k, (v, d_embed), dtype=jnp.float32))

    def limbs(w):
        hi = w.astype(jnp.bfloat16)
        lo = (w - hi.astype(jnp.float32)).astype(jnp.bfloat16)
        return hi, lo

    packed = []
    for p in range(4):
        i, j = 2 * p, 2 * p + 1
        v_i, v_j = VOCAB_SIZES[i], VOCAB_SIZES[j]
        k_p = PAIR_K[p]
        hi_i, lo_i = limbs(per_table[i])
        hi_j, lo_j = limbs(per_table[j])
        tbl = jnp.zeros((k_p, 4 * d_embed), jnp.bfloat16)
        tbl = tbl.at[:v_i, 0 * d_embed:1 * d_embed].set(hi_i)
        tbl = tbl.at[v_i:v_i + v_j, 1 * d_embed:2 * d_embed].set(hi_j)
        tbl = tbl.at[:v_i, 2 * d_embed:3 * d_embed].set(lo_i)
        tbl = tbl.at[v_i:v_i + v_j, 3 * d_embed:4 * d_embed].set(lo_j)
        packed.append(tbl)
    return tuple(packed), per_table


def reference(x, per_table):
    outs = []
    for i in range(8):
        outs.append(jnp.take(per_table[i], x[:, i], axis=0))  # (B, S, D) exact f32 gather
    return jnp.concatenate(outs, axis=2)


if __name__ == "__main__":
    key = jax.random.PRNGKey(0)
    # Small test shapes: N = B*S = 200 tokens -> 2 grid steps at tn=128,
    # exercising both the multi-step grid and the ragged-final-block path.
    B, S = 2, 100

    packed_tables, per_table = make_params(jax.random.fold_in(key, 100))

    # Build valid indices per octuple position: 0 <= idx < vocab_i.
    cols = []
    for i, v in enumerate(VOCAB_SIZES):
        ki = jax.random.fold_in(key, 200 + i)
        cols.append(jax.random.randint(ki, (B, 1, S), 0, v, dtype=jnp.int32))
    x = jnp.concatenate(cols, axis=1)  # (B, 8, S)

    out = octuple_embedding(x, packed_tables, tn=128)
    out = jax.block_until_ready(out)

    ref = reference(x, per_table)
    assert out.shape == (B, S, 8 * D_EMBED), out.shape
    # Tight tolerance: catches single-limb bf16 truncation (~2e-3 rel) but
    # passes the two-limb reconstruction (<= ~4e-6 rel).
    max_err = float(jnp.max(jnp.abs(out - ref)))
    assert jnp.allclose(out, ref, atol=1e-5, rtol=1e-5), max_err

    print("KERNEL_OK")
</pallas_src>

<mosaic_0001>
module attributes {stable_mosaic.version = 11 : i64} {
  func.func @_octuple_embed_kernel(%arg0: i32, %arg1: memref<128x8xi32, #tpu.memory_space<vmem>>, %arg2: memref<512x256xbf16, #tpu.memory_space<vmem>>, %arg3: memref<512x256xbf16, #tpu.memory_space<vmem>>, %arg4: memref<256x256xbf16, #tpu.memory_space<vmem>>, %arg5: memref<384x256xbf16, #tpu.memory_space<vmem>>, %arg6: memref<128x512xf32, #tpu.memory_space<vmem>>) attributes {dimension_semantics = [#tpu.dimension_semantics<parallel>], iteration_bounds = array<i64: 2>, scalar_prefetch = 0 : i64, scratch_operands = 0 : i64, tpu.core_type = #tpu.core_type<tc>, window_params = [{transform_indices = @transform_0, window_bounds = array<i64: 128, 8>}, {pipeline_mode = #tpu.pipeline_mode<synchronous>, transform_indices = @transform_1, window_bounds = array<i64: 512, 256>}, {pipeline_mode = #tpu.pipeline_mode<synchronous>, transform_indices = @transform_2, window_bounds = array<i64: 512, 256>}, {pipeline_mode = #tpu.pipeline_mode<synchronous>, transform_indices = @transform_3, window_bounds = array<i64: 256, 256>}, {pipeline_mode = #tpu.pipeline_mode<synchronous>, transform_indices = @transform_4, window_bounds = array<i64: 384, 256>}, {transform_indices = @transform_5, window_bounds = array<i64: 128, 512>}]} {
    %c0 = arith.constant 0 : index
    %c0_0 = arith.constant 0 : index
    %0 = vector.load %arg1[%c0, %c0_0] : memref<128x8xi32, #tpu.memory_space<vmem>>, vector<128x1xi32>
    %c0_1 = arith.constant 0 : index
    %c1 = arith.constant 1 : index
    %1 = vector.load %arg1[%c0_1, %c1] : memref<128x8xi32, #tpu.memory_space<vmem>>, vector<128x1xi32>
    %c259_i32 = arith.constant 259 : i32
    %2 = vector.broadcast %c259_i32 : i32 to vector<128x1xi32>
    %3 = arith.addi %1, %2 : vector<128x1xi32>
    %4 = tpu.iota {dimensions = array<i32: 1>} : vector<1x512xi32>
    %5 = vector.broadcast %4 : vector<1x512xi32> to vector<128x512xi32>
    %6 = vector.broadcast %0 : vector<128x1xi32> to vector<128x512xi32>
    %7 = arith.cmpi eq, %5, %6 : vector<128x512xi32>
    %8 = vector.broadcast %4 : vector<1x512xi32> to vector<128x512xi32>
    %9 = vector.broadcast %3 : vector<128x1xi32> to vector<128x512xi32>
    %10 = arith.cmpi eq, %8, %9 : vector<128x512xi32>
    %11 = arith.ori %7, %10 : vector<128x512xi1>
    %12 = arith.extui %11 : vector<128x512xi1> to vector<128x512xi32>
    %13 = arith.sitofp %12 : vector<128x512xi32> to vector<128x512xf32>
    %14 = arith.truncf %13 : vector<128x512xf32> to vector<128x512xbf16>
    %c0_2 = arith.constant 0 : index
    %c0_3 = arith.constant 0 : index
    %15 = vector.load %arg2[%c0_2, %c0_3] : memref<512x256xbf16, #tpu.memory_space<vmem>>, vector<512x256xbf16>
    %cst = arith.constant dense<0.000000e+00> : vector<128x256xf32>
    %16 = tpu.matmul %14, %15, %cst {dimension_numbers = #tpu.dot_dimension_numbers<[1], [0], [0], [1], [0, 0, 1, 1], [], []>} : vector<128x512xbf16>, vector<512x256xbf16>, vector<128x256xf32> -> vector<128x256xf32>
    %17 = vector.extract_strided_slice %16 {offsets = [0, 0], sizes = [128, 128], strides = [1, 1]} : vector<128x256xf32> to vector<128x128xf32>
    %18 = vector.extract_strided_slice %16 {offsets = [0, 128], sizes = [128, 128], strides = [1, 1]} : vector<128x256xf32> to vector<128x128xf32>
    %19 = arith.addf %17, %18 : vector<128x128xf32>
    %c0_4 = arith.constant 0 : index
    %c0_5 = arith.constant 0 : index
    %20 = vector.load %arg6[%c0_4, %c0_5] : memref<128x512xf32, #tpu.memory_space<vmem>>, vector<128x128xf32>
    tpu.vector_store %arg6[%c0_4, %c0_5], %19 {strides = array<i32>} : memref<128x512xf32, #tpu.memory_space<vmem>>, vector<128x128xf32>,
    %c0_6 = arith.constant 0 : index
    %c2 = arith.constant 2 : index
    %21 = vector.load %arg1[%c0_6, %c2] : memref<128x8xi32, #tpu.memory_space<vmem>>, vector<128x1xi32>
    %c0_7 = arith.constant 0 : index
    %c3 = arith.constant 3 : index
    %22 = vector.load %arg1[%c0_7, %c3] : memref<128x8xi32, #tpu.memory_space<vmem>>, vector<128x1xi32>
    %c132_i32 = arith.constant 132 : i32
    %23 = vector.broadcast %c132_i32 : i32 to vector<128x1xi32>
    %24 = arith.addi %22, %23 : vector<128x1xi32>
    %25 = tpu.iota {dimensions = array<i32: 1>} : vector<1x512xi32>
    %26 = vector.broadcast %25 : vector<1x512xi32> to vector<128x512xi32>
    %27 = vector.broadcast %21 : vector<128x1xi32> to vector<128x512xi32>
    %28 = arith.cmpi eq, %26, %27 : vector<128x512xi32>
    %29 = vector.broadcast %25 : vector<1x512xi32> to vector<128x512xi32>
    %30 = vector.broadcast %24 : vector<128x1xi32> to vector<128x512xi32>
    %31 = arith.cmpi eq, %29, %30 : vector<128x512xi32>
    %32 = arith.ori %28, %31 : vector<128x512xi1>
    %33 = arith.extui %32 : vector<128x512xi1> to vector<128x512xi32>
    %34 = arith.sitofp %33 : vector<128x512xi32> to vector<128x512xf32>
    %35 = arith.truncf %34 : vector<128x512xf32> to vector<128x512xbf16>
    %c0_8 = arith.constant 0 : index
    %c0_9 = arith.constant 0 : index
    %36 = vector.load %arg3[%c0_8, %c0_9] : memref<512x256xbf16, #tpu.memory_space<vmem>>, vector<512x256xbf16>
    %cst_10 = arith.constant dense<0.000000e+00> : vector<128x256xf32>
    %37 = tpu.matmul %35, %36, %cst_10 {dimension_numbers = #tpu.dot_dimension_numbers<[1], [0], [0], [1], [0, 0, 1, 1], [], []>} : vector<128x512xbf16>, vector<512x256xbf16>, vector<128x256xf32> -> vector<128x256xf32>
    %38 = vector.extract_strided_slice %37 {offsets = [0, 0], sizes = [128, 128], strides = [1, 1]} : vector<128x256xf32> to vector<128x128xf32>
    %39 = vector.extract_strided_slice %37 {offsets = [0, 128], sizes = [128, 128], strides = [1, 1]} : vector<128x256xf32> to vector<128x128xf32>
    %40 = arith.addf %38, %39 : vector<128x128xf32>
    %c0_11 = arith.constant 0 : index
    %c128 = arith.constant 128 : index
    %41 = vector.load %arg6[%c0_11, %c128] : memref<128x512xf32, #tpu.memory_space<vmem>>, vector<128x128xf32>
    tpu.vector_store %arg6[%c0_11, %c128], %40 {strides = array<i32>} : memref<128x512xf32, #tpu.memory_space<vmem>>, vector<128x128xf32>,
    %c0_12 = arith.constant 0 : index
    %c4 = arith.constant 4 : index
    %42 = vector.load %arg1[%c0_12, %c4] : memref<128x8xi32, #tpu.memory_space<vmem>>, vector<128x1xi32>
    %c0_13 = arith.constant 0 : index
    %c5 = arith.constant 5 : index
    %43 = vector.load %arg1[%c0_13, %c5] : memref<128x8xi32, #tpu.memory_space<vmem>>, vector<128x1xi32>
    %c131_i32 = arith.constant 131 : i32
    %44 = vector.broadcast %c131_i32 : i32 to vector<128x1xi32>
    %45 = arith.addi %43, %44 : vector<128x1xi32>
    %46 = tpu.iota {dimensions = array<i32: 1>} : vector<1x256xi32>
    %47 = vector.broadcast %46 : vector<1x256xi32> to vector<128x256xi32>
    %48 = vector.broadcast %42 : vector<128x1xi32> to vector<128x256xi32>
    %49 = arith.cmpi eq, %47, %48 : vector<128x256xi32>
    %50 = vector.broadcast %46 : vector<1x256xi32> to vector<128x256xi32>
    %51 = vector.broadcast %45 : vector<128x1xi32> to vector<128x256xi32>
    %52 = arith.cmpi eq, %50, %51 : vector<128x256xi32>
    %53 = arith.ori %49, %52 : vector<128x256xi1>
    %54 = arith.extui %53 : vector<128x256xi1> to vector<128x256xi32>
    %55 = arith.sitofp %54 : vector<128x256xi32> to vector<128x256xf32>
    %56 = arith.truncf %55 : vector<128x256xf32> to vector<128x256xbf16>
    %c0_14 = arith.constant 0 : index
    %c0_15 = arith.constant 0 : index
    %57 = vector.load %arg4[%c0_14, %c0_15] : memref<256x256xbf16, #tpu.memory_space<vmem>>, vector<256x256xbf16>
    %cst_16 = arith.constant dense<0.000000e+00> : vector<128x256xf32>
    %58 = tpu.matmul %56, %57, %cst_16 {dimension_numbers = #tpu.dot_dimension_numbers<[1], [0], [0], [1], [0, 0, 1, 1], [], []>} : vector<128x256xbf16>, vector<256x256xbf16>, vector<128x256xf32> -> vector<128x256xf32>
    %59 = vector.extract_strided_slice %58 {offsets = [0, 0], sizes = [128, 128], strides = [1, 1]} : vector<128x256xf32> to vector<128x128xf32>
    %60 = vector.extract_strided_slice %58 {offsets = [0, 128], sizes = [128, 128], strides = [1, 1]} : vector<128x256xf32> to vector<128x128xf32>
    %61 = arith.addf %59, %60 : vector<128x128xf32>
    %c0_17 = arith.constant 0 : index
    %c256 = arith.constant 256 : index
    %62 = vector.load %arg6[%c0_17, %c256] : memref<128x512xf32, #tpu.memory_space<vmem>>, vector<128x128xf32>
    tpu.vector_store %arg6[%c0_17, %c256], %61 {strides = array<i32>} : memref<128x512xf32, #tpu.memory_space<vmem>>, vector<128x128xf32>,
    %c0_18 = arith.constant 0 : index
    %c6 = arith.constant 6 : index
    %63 = vector.load %arg1[%c0_18, %c6] : memref<128x8xi32, #tpu.memory_space<vmem>>, vector<128x1xi32>
    %c0_19 = arith.constant 0 : index
    %c7 = arith.constant 7 : index
    %64 = vector.load %arg1[%c0_19, %c7] : memref<128x8xi32, #tpu.memory_space<vmem>>, vector<128x1xi32>
    %c257_i32 = arith.constant 257 : i32
    %65 = vector.broadcast %c257_i32 : i32 to vector<128x1xi32>
    %66 = arith.addi %64, %65 : vector<128x1xi32>
    %67 = tpu.iota {dimensions = array<i32: 1>} : vector<1x384xi32>
    %68 = vector.broadcast %67 : vector<1x384xi32> to vector<128x384xi32>
    %69 = vector.broadcast %63 : vector<128x1xi32> to vector<128x384xi32>
    %70 = arith.cmpi eq, %68, %69 : vector<128x384xi32>
    %71 = vector.broadcast %67 : vector<1x384xi32> to vector<128x384xi32>
    %72 = vector.broadcast %66 : vector<128x1xi32> to vector<128x384xi32>
    %73 = arith.cmpi eq, %71, %72 : vector<128x384xi32>
    %74 = arith.ori %70, %73 : vector<128x384xi1>
    %75 = arith.extui %74 : vector<128x384xi1> to vector<128x384xi32>
    %76 = arith.sitofp %75 : vector<128x384xi32> to vector<128x384xf32>
    %77 = arith.truncf %76 : vector<128x384xf32> to vector<128x384xbf16>
    %c0_20 = arith.constant 0 : index
    %c0_21 = arith.constant 0 : index
    %78 = vector.load %arg5[%c0_20, %c0_21] : memref<384x256xbf16, #tpu.memory_space<vmem>>, vector<384x256xbf16>
    %cst_22 = arith.constant dense<0.000000e+00> : vector<128x256xf32>
    %79 = tpu.matmul %77, %78, %cst_22 {dimension_numbers = #tpu.dot_dimension_numbers<[1], [0], [0], [1], [0, 0, 1, 1], [], []>} : vector<128x384xbf16>, vector<384x256xbf16>, vector<128x256xf32> -> vector<128x256xf32>
    %80 = vector.extract_strided_slice %79 {offsets = [0, 0], sizes = [128, 128], strides = [1, 1]} : vector<128x256xf32> to vector<128x128xf32>
    %81 = vector.extract_strided_slice %79 {offsets = [0, 128], sizes = [128, 128], strides = [1, 1]} : vector<128x256xf32> to vector<128x128xf32>
    %82 = arith.addf %80, %81 : vector<128x128xf32>
    %c0_23 = arith.constant 0 : index
    %c384 = arith.constant 384 : index
    %83 = vector.load %arg6[%c0_23, %c384] : memref<128x512xf32, #tpu.memory_space<vmem>>, vector<128x128xf32>
    tpu.vector_store %arg6[%c0_23, %c384], %82 {strides = array<i32>} : memref<128x512xf32, #tpu.memory_space<vmem>>, vector<128x128xf32>,
    return
  }
  func.func @transform_0(%arg0: i32) -> (i32, i32) {
    %c0_i32 = arith.constant 0 : i32
    %c0_i32_0 = arith.constant 0 : i32
    return %arg0, %c0_i32 : i32, i32
  }
  func.func @transform_1(%arg0: i32) -> (i32, i32) {
    %c0_i32 = arith.constant 0 : i32
    %c0_i32_0 = arith.constant 0 : i32
    %c0_i32_1 = arith.constant 0 : i32
    return %c0_i32, %c0_i32_0 : i32, i32
  }
  func.func @transform_2(%arg0: i32) -> (i32, i32) {
    %c0_i32 = arith.constant 0 : i32
    %c0_i32_0 = arith.constant 0 : i32
    %c0_i32_1 = arith.constant 0 : i32
    return %c0_i32, %c0_i32_0 : i32, i32
  }
  func.func @transform_3(%arg0: i32) -> (i32, i32) {
    %c0_i32 = arith.constant 0 : i32
    %c0_i32_0 = arith.constant 0 : i32
    %c0_i32_1 = arith.constant 0 : i32
    return %c0_i32, %c0_i32_0 : i32, i32
  }
  func.func @transform_4(%arg0: i32) -> (i32, i32) {
    %c0_i32 = arith.constant 0 : i32
    %c0_i32_0 = arith.constant 0 : i32
    %c0_i32_1 = arith.constant 0 : i32
    return %c0_i32, %c0_i32_0 : i32, i32
  }
  func.func @transform_5(%arg0: i32) -> (i32, i32) {
    %c0_i32 = arith.constant 0 : i32
    %c0_i32_0 = arith.constant 0 : i32
    return %arg0, %c0_i32 : i32, i32
  }
}

</mosaic_0001>

<llo_original>
// kernel: tpu_custom_call.1
$region0: #{tpu_custom_call.1}
  #allocation0 [shape = 'u32[]', space=smem, size = 0x4, offset = 0x4, fixed_abs, tag = 'smem constant byte address 0x4 - core index']
  #allocation1 [shape = 'u32[72,128]{1,0:T(1,128)}', space=vmem, size = 0x9000, scoped, tag = 'internal scratch']
  %s0 = inlined_call_operand.vmem [shape: s32[200,8], index: 0, kind: input, shape index: {}]
  %s1 = inlined_call_operand.hbm [shape: bf16[512,256], index: 1, kind: input, shape index: {}]
  %s2 = inlined_call_operand.hbm [shape: bf16[512,256], index: 2, kind: input, shape index: {}]
  %s3 = inlined_call_operand.hbm [shape: bf16[256,256], index: 3, kind: input, shape index: {}]
  %s4 = inlined_call_operand.hbm [shape: bf16[384,256], index: 4, kind: input, shape index: {}]
  %s5 = inlined_call_operand.hbm [shape: f32[200,512], index: 5, kind: output, shape index: {}]
  %s6 = sld [smem:[#allocation0]]
  $region69: #{tpu_custom_call.1} parent=0
    _
  %s8 = ssub.s32 1, %s6
  %s9 = scalar_select 0, %s8, %s6
  $region1: #{tpu_custom_call.1} parent=0
    #allocation2 [shape = 'u8[262144]{0}', space=vmem, size = 0x40000, scoped, tag = 'input window, operand 1, single buffered']
    #allocation3 [shape = 's32[2]{0}', space=sflag, size = 0x8, scoped, tag = 'scoped memory for tpu_custom_call.1']
    #allocation4 [shape = 's32[2]{0}', space=sflag, size = 0x8, scoped, tag = 'scoped memory for tpu_custom_call.1']
    #allocation5 [shape = 'u8[262144]{0}', space=vmem, size = 0x40000, scoped, tag = 'input window, operand 2, single buffered']
    #allocation6 [shape = 's32[1]{0}', space=sflag, size = 0x4, scoped, tag = 'scoped memory for tpu_custom_call.1']
    #allocation7 [shape = 'u8[131072]{0}', space=vmem, size = 0x20000, scoped, tag = 'input window, operand 3, single buffered']
    #allocation8 [shape = 'u8[196608]{0}', space=vmem, size = 0x30000, scoped, tag = 'input window, operand 4, single buffered']
    #allocation9 [shape = 's32[1]{0}', space=sflag, size = 0x4, scoped, tag = 'scoped memory for tpu_custom_call.1']
    #allocation10 [shape = 'u8[524288]{0}', space=vmem, size = 0x80000, scoped, tag = 'output window, operand 0']
    %10 = vsyncpa [#allocation3], 0
    %11 = vsyncpa [#allocation6], 0
    %12 = vsyncpa [#allocation9], 0
    %13 = vsyncpa [#allocation4], 0
    %s14 = scalar_lea.sflag [#allocation4], 1
    %15 = vsyncpa %s14, 0
    loop: start=0, step=1, limit=4
    $region2: #{tpu_custom_call.1} parent=1 // loop_pre_header
      _
    $region3: #{tpu_custom_call.1} parent=1 // loop_header
      %s17 = sphi 0, %s21
      %p18 = scmp.ge.s32.totalorder %s17, 4
      %s27 = sphi 0, %s29
      %s30 = sphi 0, %s27
      %s31 = sphi 0, %s30
      %s47 = sphi 0, %s31
      %s51 = sphi 0, %s51
      %s53 = sphi 0, %s51
      %s54 = sphi 0, %s53
      %s68 = sphi 0, %s54
      %s72 = sphi 0, %s72
      %s74 = sphi 0, %s72
      %s75 = sphi 0, %s74
      %s89 = sphi 0, %s75
      %s93 = sphi 0, %s93
      %s95 = sphi 0, %s93
      %s96 = sphi 0, %s95
      %s110 = sphi 0, %s96
      %s114 = sphi 0, %s114
      %s116 = sphi 0, %s114
      %s117 = sphi 0, %s116
      %s131 = sphi 0, %s117
      %s137 = sphi 0, %s139
      %s140 = sphi 0, %s137
      %s141 = sphi 0, %s140
      %s157 = sphi 0, %s141
    $region4: #{tpu_custom_call.1} parent=1 // loop_header_branch
      %20 = sbr.rel (%p18) target = $region8
    $region5: #{tpu_custom_call.1} parent=1 // loop_body
      %s22 = ssub.s32 %s17, 1
      %s23 = ssub.s32 %s17, 2
      %s24 = sadd.s32 %s17, 1
      %s25 = ssub.s32 %s17, %s24
      %p26 = scmp.eq.s32.totalorder %s25, 0
      %s28 = sadd.s32 %s27, 1
      %s29 = scalar_select %p26, %s27, %s28
      %p32 = pneg %p26
      %p33 = scmp.eq.s32.totalorder %s17, 1
      %p34 = por %p32, %p33
      %p35 = scmp.ne.s32.totalorder %s27, %s30
      %p36 = scmp.eq.s32.totalorder %s17, 0
      %p37 = por %p35, %p36
      %p38 = scmp.ne.s32.totalorder %s27, %s30
      %p39 = scmp.eq.s32.totalorder %s22, 1
      %p40 = por %p38, %p39
      %p41 = scmp.ne.s32.totalorder %s30, %s31
      %p42 = scmp.eq.s32.totalorder %s22, 0
      %p43 = por %p41, %p42
      %p44 = scmp.ne.s32.totalorder %s30, %s31
      %p45 = scmp.eq.s32.totalorder %s23, 1
      %p46 = por %p44, %p45
      %p48 = scmp.ne.s32.totalorder %s31, %s47
      %p49 = scmp.eq.s32.totalorder %s23, 0
      %p50 = por %p48, %p49
      %s52 = sadd.s32 %s51, 1
      %p55 = scmp.eq.s32.totalorder %s17, 1
      %p56 = scmp.ne.s32.totalorder %s51, %s53
      %p57 = scmp.eq.s32.totalorder %s17, 0
      %p58 = por %p56, %p57
      %p59 = scmp.ne.s32.totalorder %s51, %s53
      %p60 = scmp.eq.s32.totalorder %s22, 1
      %p61 = por %p59, %p60
      %p62 = scmp.ne.s32.totalorder %s53, %s54
      %p63 = scmp.eq.s32.totalorder %s22, 0
      %p64 = por %p62, %p63
      %p65 = scmp.ne.s32.totalorder %s53, %s54
      %p66 = scmp.eq.s32.totalorder %s23, 1
      %p67 = por %p65, %p66
      %p69 = scmp.ne.s32.totalorder %s54, %s68
      %p70 = scmp.eq.s32.totalorder %s23, 0
      %p71 = por %p69, %p70
      %s73 = sadd.s32 %s72, 1
      %p76 = scmp.eq.s32.totalorder %s17, 1
      %p77 = scmp.ne.s32.totalorder %s72, %s74
      %p78 = scmp.eq.s32.totalorder %s17, 0
      %p79 = por %p77, %p78
      %p80 = scmp.ne.s32.totalorder %s72, %s74
      %p81 = scmp.eq.s32.totalorder %s22, 1
      %p82 = por %p80, %p81
      %p83 = scmp.ne.s32.totalorder %s74, %s75
      %p84 = scmp.eq.s32.totalorder %s22, 0
      %p85 = por %p83, %p84
      %p86 = scmp.ne.s32.totalorder %s74, %s75
      %p87 = scmp.eq.s32.totalorder %s23, 1
      %p88 = por %p86, %p87
      %p90 = scmp.ne.s32.totalorder %s75, %s89
      %p91 = scmp.eq.s32.totalorder %s23, 0
      %p92 = por %p90, %p91
      %s94 = sadd.s32 %s93, 1
      %p97 = scmp.eq.s32.totalorder %s17, 1
      %p98 = scmp.ne.s32.totalorder %s93, %s95
      %p99 = scmp.eq.s32.totalorder %s17, 0
      %p100 = por %p98, %p99
      %p101 = scmp.ne.s32.totalorder %s93, %s95
      %p102 = scmp.eq.s32.totalorder %s22, 1
      %p103 = por %p101, %p102
      %p104 = scmp.ne.s32.totalorder %s95, %s96
      %p105 = scmp.eq.s32.totalorder %s22, 0
      %p106 = por %p104, %p105
      %p107 = scmp.ne.s32.totalorder %s95, %s96
      %p108 = scmp.eq.s32.totalorder %s23, 1
      %p109 = por %p107, %p108
      %p111 = scmp.ne.s32.totalorder %s96, %s110
      %p112 = scmp.eq.s32.totalorder %s23, 0
      %p113 = por %p111, %p112
      %s115 = sadd.s32 %s114, 1
      %p118 = scmp.eq.s32.totalorder %s17, 1
      %p119 = scmp.ne.s32.totalorder %s114, %s116
      %p120 = scmp.eq.s32.totalorder %s17, 0
      %p121 = por %p119, %p120
      %p122 = scmp.ne.s32.totalorder %s114, %s116
      %p123 = scmp.eq.s32.totalorder %s22, 1
      %p124 = por %p122, %p123
      %p125 = scmp.ne.s32.totalorder %s116, %s117
      %p126 = scmp.eq.s32.totalorder %s22, 0
      %p127 = por %p125, %p126
      %p128 = scmp.ne.s32.totalorder %s116, %s117
      %p129 = scmp.eq.s32.totalorder %s23, 1
      %p130 = por %p128, %p129
      %p132 = scmp.ne.s32.totalorder %s117, %s131
      %p133 = scmp.eq.s32.totalorder %s23, 0
      %p134 = por %p132, %p133
      %s135 = ssub.s32 %s17, %s24
      %p136 = scmp.eq.s32.totalorder %s135, 0
      %s138 = sadd.s32 %s137, 1
      %s139 = scalar_select %p136, %s137, %s138
      %p142 = pneg %p136
      %p143 = scmp.eq.s32.totalorder %s17, 1
      %p144 = por %p142, %p143
      %p145 = scmp.ne.s32.totalorder %s137, %s140
      %p146 = scmp.eq.s32.totalorder %s17, 0
      %p147 = por %p145, %p146
      %p148 = scmp.ne.s32.totalorder %s137, %s140
      %p149 = scmp.eq.s32.totalorder %s22, 1
      %p150 = por %p148, %p149
      %p151 = scmp.ne.s32.totalorder %s140, %s141
      %p152 = scmp.eq.s32.totalorder %s22, 0
      %p153 = por %p151, %p152
      %p154 = scmp.ne.s32.totalorder %s140, %s141
      %p155 = scmp.eq.s32.totalorder %s23, 1
      %p156 = por %p154, %p155
      %p158 = scmp.ne.s32.totalorder %s141, %s157
      %p159 = scmp.eq.s32.totalorder %s23, 0
      %p160 = por %p158, %p159
      %p161 = scmp.le.s32.totalorder 1, %s17
      %p162 = scmp.lt.s32.totalorder %s17, 3
      %p163 = pnand %p161, %p162
      %p164 = pneg %p163
      // Predicated region
      $region9: #{tpu_custom_call.1} parent=5 // pred_check
        _
      $region10: #{tpu_custom_call.1} parent=5 // pred_check_branch
        %166 = sbr.rel (%p163) target = $region12
      $region11: #{tpu_custom_call.1} parent=5 // pred_region
        %s167 = ssub.s32 %s17, 1
        // Predicated region
        $region13: #{tpu_custom_call.1} parent=11 // pred_check
          %p168 = pneg %p64
        $region14: #{tpu_custom_call.1} parent=11 // pred_check_branch
          %170 = sbr.rel (%p168) target = $region16
        $region15: #{tpu_custom_call.1} parent=11 // pred_region
          %172 = vsyncadd [#allocation3], 0
          %s173 = sshll.u32 %s1, 4
          %s174 = int_to_ptr.hbm [resolvable:$true] %s173
          %s175 = sshll.u32 [#allocation2], 4
          %s176 = int_to_ptr.vmem [resolvable:$true] %s175
          %181 = dma.hbm_to_vmem [thread:$0]  %s174, 8192, %s176, [#allocation3], 128, 128, 8
        $region16: #{tpu_custom_call.1} parent=11 // pred_fallthru
          _
        // Predicated region
        $region17: #{tpu_custom_call.1} parent=11 // pred_check
          %p182 = pneg %p85
        $region18: #{tpu_custom_call.1} parent=11 // pred_check_branch
          %184 = sbr.rel (%p182) target = $region20
        $region19: #{tpu_custom_call.1} parent=11 // pred_region
          %186 = vsyncadd [#allocation6], 0
          %s187 = sshll.u32 %s2, 4
          %s188 = int_to_ptr.hbm [resolvable:$true] %s187
          %s189 = sshll.u32 [#allocation5], 4
          %s190 = int_to_ptr.vmem [resolvable:$true] %s189
          %195 = dma.hbm_to_vmem [thread:$0]  %s188, 8192, %s190, [#allocation6], 128, 128, 8
        $region20: #{tpu_custom_call.1} parent=11 // pred_fallthru
          _
        // Predicated region
        $region21: #{tpu_custom_call.1} parent=11 // pred_check
          %p196 = pneg %p106
        $region22: #{tpu_custom_call.1} parent=11 // pred_check_branch
          %198 = sbr.rel (%p196) target = $region24
        $region23: #{tpu_custom_call.1} parent=11 // pred_region
          %200 = vsyncadd [#allocation6], 0
          %s201 = sshll.u32 %s3, 4
          %s202 = int_to_ptr.hbm [resolvable:$true] %s201
          %s203 = sshll.u32 [#allocation7], 4
          %s204 = int_to_ptr.vmem [resolvable:$true] %s203
          %209 = dma.hbm_to_vmem [thread:$0]  %s202, 4096, %s204, [#allocation6], 128, 128, 8
        $region24: #{tpu_custom_call.1} parent=11 // pred_fallthru
          _
        // Predicated region
        $region25: #{tpu_custom_call.1} parent=11 // pred_check
          %p210 = pneg %p127
        $region26: #{tpu_custom_call.1} parent=11 // pred_check_branch
          %212 = sbr.rel (%p210) target = $region28
        $region27: #{tpu_custom_call.1} parent=11 // pred_region
          %214 = vsyncadd [#allocation9], 0
          %s215 = sshll.u32 %s4, 4
          %s216 = int_to_ptr.hbm [resolvable:$true] %s215
          %s217 = sshll.u32 [#allocation8], 4
          %s218 = int_to_ptr.vmem [resolvable:$true] %s217
          %223 = dma.hbm_to_vmem [thread:$0]  %s216, 6144, %s218, [#allocation9], 128, 128, 8
        $region28: #{tpu_custom_call.1} parent=11 // pred_fallthru
          _
      $region12: #{tpu_custom_call.1} parent=5 // pred_fallthru
        _
      %p224 = scmp.lt.s32.totalorder %s17, 2
      // Predicated region
      $region29: #{tpu_custom_call.1} parent=5 // pred_check
        %p225 = pneg %p224
      $region30: #{tpu_custom_call.1} parent=5 // pred_check_branch
        %227 = sbr.rel (%p225) target = $region32
      $region31: #{tpu_custom_call.1} parent=5 // pred_region
        // Predicated region
        $region33: #{tpu_custom_call.1} parent=31 // pred_check
          %p228 = pneg %p37
        $region34: #{tpu_custom_call.1} parent=31 // pred_check_branch
          %230 = sbr.rel (%p228) target = $region36
        $region35: #{tpu_custom_call.1} parent=31 // pred_region
          %s231 = smul.u32 16, %s17
          %s232 = ssub.s32 25, %s231
          %p233 = scmp.lt.s32.totalorder %s232, 16
          %s234 = scalar_select %p233, %s232, 16
          %s235 = smul.u32 8, %s234
          %p236 = scmp.lt.s32.totalorder %s231, 24
          %s237 = scalar_select %p236, %s231, 24
          %s238 = smul.addr %s237, 8
          %s239 = scalar_lea.vmem %s0, %s238
          %s240 = smul.u32 16, %s17
          %s241 = ssub.s32 25, %s240
          %p242 = scmp.lt.s32.totalorder %s241, 16
          %s243 = scalar_select %p242, %s241, 16
          %s244 = smul.u32 8, %s243
        $region36: #{tpu_custom_call.1} parent=31 // pred_fallthru
          _
      $region32: #{tpu_custom_call.1} parent=5 // pred_fallthru
        _
      %p245 = scmp.le.s32.totalorder 1, %s17
      %p246 = scmp.lt.s32.totalorder %s17, 3
      %p247 = pnand %p245, %p246
      %p248 = pneg %p247
      // Predicated region
      $region37: #{tpu_custom_call.1} parent=5 // pred_check
        _
      $region38: #{tpu_custom_call.1} parent=5 // pred_check_branch
        %250 = sbr.rel (%p247) target = $region40
      $region39: #{tpu_custom_call.1} parent=5 // pred_region
        %s251 = ssub.s32 %s17, 1
        // Predicated region
        $region41: #{tpu_custom_call.1} parent=39 // pred_check
          %p252 = pneg %p64
        $region42: #{tpu_custom_call.1} parent=39 // pred_check_branch
          %254 = sbr.rel (%p252) target = $region44
        $region43: #{tpu_custom_call.1} parent=39 // pred_region
          %256 = dma.done [#allocation3], 8192
        $region44: #{tpu_custom_call.1} parent=39 // pred_fallthru
          _
        // Predicated region
        $region45: #{tpu_custom_call.1} parent=39 // pred_check
          %p257 = pneg %p85
        $region46: #{tpu_custom_call.1} parent=39 // pred_check_branch
          %259 = sbr.rel (%p257) target = $region48
        $region47: #{tpu_custom_call.1} parent=39 // pred_region
          %261 = dma.done [#allocation6], 8192
        $region48: #{tpu_custom_call.1} parent=39 // pred_fallthru
          _
        // Predicated region
        $region49: #{tpu_custom_call.1} parent=39 // pred_check
          %p262 = pneg %p106
        $region50: #{tpu_custom_call.1} parent=39 // pred_check_branch
          %264 = sbr.rel (%p262) target = $region52
        $region51: #{tpu_custom_call.1} parent=39 // pred_region
          %266 = dma.done [#allocation6], 4096
        $region52: #{tpu_custom_call.1} parent=39 // pred_fallthru
          _
        // Predicated region
        $region53: #{tpu_custom_call.1} parent=39 // pred_check
          %p267 = pneg %p127
        $region54: #{tpu_custom_call.1} parent=39 // pred_check_branch
          %269 = sbr.rel (%p267) target = $region56
        $region55: #{tpu_custom_call.1} parent=39 // pred_region
          %271 = dma.done [#allocation9], 6144
        $region56: #{tpu_custom_call.1} parent=39 // pred_fallthru
          _
        %s272 = smul.u32 16, %s22
        %s273 = ssub.s32 25, %s272
        %p274 = scmp.lt.s32.totalorder %s273, 16
        %s275 = scalar_select %p274, %s273, 16
        %s276 = smul.u32 8, %s275
        %p277 = scmp.lt.s32.totalorder %s272, 24
        %s278 = scalar_select %p277, %s272, 24
        %s279 = smul.addr %s278, 8
        %s280 = scalar_lea.vmem %s0, %s279
        %p281 = pneg %p43
        %p282 = pneg %p40
        %p283 = pneg %p64
        %p284 = pneg %p61
        %p285 = pneg %p85
        %p286 = pneg %p82
        %p287 = pneg %p106
        %p288 = pneg %p103
        %p289 = pneg %p127
        %p290 = pneg %p124
        %p291 = pneg %p153
        %p292 = pneg %p150
        %s293 = sand.u32 %s140, 1
        %s294 = scalar_lea.sflag [#allocation4], %s293
        %s295 = sand.u32 %s140, 1
        %s296 = smul.addr %s295, 512
        %s297 = scalar_lea.vmem [#allocation10], %s296
        %s298 = smul.u32 16, %s22
        %s299 = ssub.s32 25, %s298
        %p300 = scmp.lt.s32.totalorder %s299, 16
        %s301 = scalar_select %p300, %s299, 16
        %s302 = smul.u32 8, %s301
        %p303 = scmp.lt.s32.totalorder %s298, 24
        %s304 = scalar_select %p303, %s298, 24
        %s305 = smul.addr %s304, 8
        %s306 = scalar_lea.vmem %s0, %s305
        %s307 = smul.u32 16, %s22
        %s308 = ssub.s32 25, %s307
        %p309 = scmp.lt.s32.totalorder %s308, 16
        %s310 = scalar_select %p309, %s308, 16
        %s311 = smul.u32 8, %s310
        %s312 = smul.u32 16, %s22
        %s313 = ssub.s32 25, %s312
        %p314 = scmp.lt.s32.totalorder %s313, 16
        %s315 = scalar_select %p314, %s313, 16
        %s316 = smul.u32 8, %s315
        %s317 = smul.u32 %s316, 4
        %v318 = vld [vmem:[%s306] sm:$0xff]
        %v319 = vld [vmem:[%s306 + $0x8] sm:$0xff]
        %v320 = vld [vmem:[%s306 + $0x10] sm:$0xff]
        %v321 = vld [vmem:[%s306 + $0x18] sm:$0xff]
        %v322 = vld [vmem:[%s306 + $0x20] sm:$0xff]
        %v323 = vld [vmem:[%s306 + $0x28] sm:$0xff]
        %v324 = vld [vmem:[%s306 + $0x30] sm:$0xff]
        %v325 = vld [vmem:[%s306 + $0x38] sm:$0xff]
        %v326 = vld [vmem:[%s306 + $0x40] sm:$0xff]
        %v327 = vld [vmem:[%s306 + $0x48] sm:$0xff]
        %v328 = vld [vmem:[%s306 + $0x50] sm:$0xff]
        %v329 = vld [vmem:[%s306 + $0x58] sm:$0xff]
        %v330 = vld [vmem:[%s306 + $0x60] sm:$0xff]
        %v331 = vld [vmem:[%s306 + $0x68] sm:$0xff]
        %v332 = vld [vmem:[%s306 + $0x70] sm:$0xff]
        %v333 = vld [vmem:[%s306 + $0x78] sm:$0xff]
        %v334 = vadd.s32 %v318, 259
        %v335 = vadd.s32 %v319, 259
        %v336 = vadd.s32 %v320, 259
        %v337 = vadd.s32 %v321, 259
        %v338 = vadd.s32 %v322, 259
        %v339 = vadd.s32 %v323, 259
        %v340 = vadd.s32 %v324, 259
        %v341 = vadd.s32 %v325, 259
        %v342 = vadd.s32 %v326, 259
        %v343 = vadd.s32 %v327, 259
        %v344 = vadd.s32 %v328, 259
        %v345 = vadd.s32 %v329, 259
        %v346 = vadd.s32 %v330, 259
        %v347 = vadd.s32 %v331, 259
        %v348 = vadd.s32 %v332, 259
        %v349 = vadd.s32 %v333, 259
        %v350 = vlaneseq
        %v351 = vand.u32 %v350, 127
        %v352 = vadd.s32 %v351, 128
        %v353 = vadd.s32 %v351, 256
        %v354 = vadd.s32 %v351, 384
        %355 = vset.pattern.permute.xlu0 0
        %356 = vperm.xlu0 %355, %v318
        %v357 = vpop.permute.xlu0 %356
        %358 = vset.pattern.permute.xlu0 0
        %359 = vperm.xlu0 %358, %v319
        %v360 = vpop.permute.xlu0 %359
        %361 = vset.pattern.permute.xlu0 0
        %362 = vperm.xlu0 %361, %v320
        %v363 = vpop.permute.xlu0 %362
        %364 = vset.pattern.permute.xlu0 0
        %365 = vperm.xlu0 %364, %v321
        %v366 = vpop.permute.xlu0 %365
        %367 = vset.pattern.permute.xlu0 0
        %368 = vperm.xlu0 %367, %v322
        %v369 = vpop.permute.xlu0 %368
        %370 = vset.pattern.permute.xlu0 0
        %371 = vperm.xlu0 %370, %v323
        %v372 = vpop.permute.xlu0 %371
        %373 = vset.pattern.permute.xlu0 0
        %374 = vperm.xlu0 %373, %v324
        %v375 = vpop.permute.xlu0 %374
        %376 = vset.pattern.permute.xlu0 0
        %377 = vperm.xlu0 %376, %v325
        %v378 = vpop.permute.xlu0 %377
        %379 = vset.pattern.permute.xlu0 0
        %380 = vperm.xlu0 %379, %v326
        %v381 = vpop.permute.xlu0 %380
        %382 = vset.pattern.permute.xlu0 0
        %383 = vperm.xlu0 %382, %v327
        %v384 = vpop.permute.xlu0 %383
        %385 = vset.pattern.permute.xlu0 0
        %386 = vperm.xlu0 %385, %v328
        %v387 = vpop.permute.xlu0 %386
        %388 = vset.pattern.permute.xlu0 0
        %389 = vperm.xlu0 %388, %v329
        %v390 = vpop.permute.xlu0 %389
        %391 = vset.pattern.permute.xlu0 0
        %392 = vperm.xlu0 %391, %v330
        %v393 = vpop.permute.xlu0 %392
        %394 = vset.pattern.permute.xlu0 0
        %395 = vperm.xlu0 %394, %v331
        %v396 = vpop.permute.xlu0 %395
        %397 = vset.pattern.permute.xlu0 0
        %398 = vperm.xlu0 %397, %v332
        %v399 = vpop.permute.xlu0 %398
        %400 = vset.pattern.permute.xlu0 0
        %401 = vperm.xlu0 %400, %v333
        %v402 = vpop.permute.xlu0 %401
        %vm403 = vcmp.eq.s32.totalorder %v351, %v357
        %vm404 = vcmp.eq.s32.totalorder %v352, %v357
        %vm405 = vcmp.eq.s32.totalorder %v353, %v357
        %vm406 = vcmp.eq.s32.totalorder %v354, %v357
        %vm407 = vcmp.eq.s32.totalorder %v351, %v360
        %vm408 = vcmp.eq.s32.totalorder %v352, %v360
        %vm409 = vcmp.eq.s32.totalorder %v353, %v360
        %vm410 = vcmp.eq.s32.totalorder %v354, %v360
        %vm411 = vcmp.eq.s32.totalorder %v351, %v363
        %vm412 = vcmp.eq.s32.totalorder %v352, %v363
        %vm413 = vcmp.eq.s32.totalorder %v353, %v363
        %vm414 = vcmp.eq.s32.totalorder %v354, %v363
        %vm415 = vcmp.eq.s32.totalorder %v351, %v366
        %vm416 = vcmp.eq.s32.totalorder %v352, %v366
        %vm417 = vcmp.eq.s32.totalorder %v353, %v366
        %vm418 = vcmp.eq.s32.totalorder %v354, %v366
        %vm419 = vcmp.eq.s32.totalorder %v351, %v369
        %vm420 = vcmp.eq.s32.totalorder %v352, %v369
        %vm421 = vcmp.eq.s32.totalorder %v353, %v369
        %vm422 = vcmp.eq.s32.totalorder %v354, %v369
        %vm423 = vcmp.eq.s32.totalorder %v351, %v372
        %vm424 = vcmp.eq.s32.totalorder %v352, %v372
        %vm425 = vcmp.eq.s32.totalorder %v353, %v372
        %vm426 = vcmp.eq.s32.totalorder %v354, %v372
        %vm427 = vcmp.eq.s32.totalorder %v351, %v375
        %vm428 = vcmp.eq.s32.totalorder %v352, %v375
        %vm429 = vcmp.eq.s32.totalorder %v353, %v375
        %vm430 = vcmp.eq.s32.totalorder %v354, %v375
        %vm431 = vcmp.eq.s32.totalorder %v351, %v378
        %vm432 = vcmp.eq.s32.totalorder %v352, %v378
        %vm433 = vcmp.eq.s32.totalorder %v353, %v378
        %vm434 = vcmp.eq.s32.totalorder %v354, %v378
        %vm435 = vcmp.eq.s32.totalorder %v351, %v381
        %vm436 = vcmp.eq.s32.totalorder %v352, %v381
        %vm437 = vcmp.eq.s32.totalorder %v353, %v381
        %vm438 = vcmp.eq.s32.totalorder %v354, %v381
        %vm439 = vcmp.eq.s32.totalorder %v351, %v384
        %vm440 = vcmp.eq.s32.totalorder %v352, %v384
        %vm441 = vcmp.eq.s32.totalorder %v353, %v384
        %vm442 = vcmp.eq.s32.totalorder %v354, %v384
        %vm443 = vcmp.eq.s32.totalorder %v351, %v387
        %vm444 = vcmp.eq.s32.totalorder %v352, %v387
        %vm445 = vcmp.eq.s32.totalorder %v353, %v387
        %vm446 = vcmp.eq.s32.totalorder %v354, %v387
        %vm447 = vcmp.eq.s32.totalorder %v351, %v390
        %vm448 = vcmp.eq.s32.totalorder %v352, %v390
        %vm449 = vcmp.eq.s32.totalorder %v353, %v390
        %vm450 = vcmp.eq.s32.totalorder %v354, %v390
        %vm451 = vcmp.eq.s32.totalorder %v351, %v393
        %vm452 = vcmp.eq.s32.totalorder %v352, %v393
        %vm453 = vcmp.eq.s32.totalorder %v353, %v393
        %vm454 = vcmp.eq.s32.totalorder %v354, %v393
        %vm455 = vcmp.eq.s32.totalorder %v351, %v396
        %vm456 = vcmp.eq.s32.totalorder %v352, %v396
        %vm457 = vcmp.eq.s32.totalorder %v353, %v396
        %vm458 = vcmp.eq.s32.totalorder %v354, %v396
        %vm459 = vcmp.eq.s32.totalorder %v351, %v399
        %vm460 = vcmp.eq.s32.totalorder %v352, %v399
        %vm461 = vcmp.eq.s32.totalorder %v353, %v399
        %vm462 = vcmp.eq.s32.totalorder %v354, %v399
        %vm463 = vcmp.eq.s32.totalorder %v351, %v402
        %vm464 = vcmp.eq.s32.totalorder %v352, %v402
        %vm465 = vcmp.eq.s32.totalorder %v353, %v402
        %vm466 = vcmp.eq.s32.totalorder %v354, %v402
        %467 = vset.pattern.permute.xlu0 1
        %468 = vperm.xlu0 %467, %v334
        %v469 = vpop.permute.xlu0 %468
        %470 = vset.pattern.permute.xlu0 1
        %471 = vperm.xlu0 %470, %v335
        %v472 = vpop.permute.xlu0 %471
        %473 = vset.pattern.permute.xlu0 1
        %474 = vperm.xlu0 %473, %v336
        %v475 = vpop.permute.xlu0 %474
        %476 = vset.pattern.permute.xlu0 1
        %477 = vperm.xlu0 %476, %v337
        %v478 = vpop.permute.xlu0 %477
        %479 = vset.pattern.permute.xlu0 1
        %480 = vperm.xlu0 %479, %v338
        %v481 = vpop.permute.xlu0 %480
        %482 = vset.pattern.permute.xlu0 1
        %483 = vperm.xlu0 %482, %v339
        %v484 = vpop.permute.xlu0 %483
        %485 = vset.pattern.permute.xlu0 1
        %486 = vperm.xlu0 %485, %v340
        %v487 = vpop.permute.xlu0 %486
        %488 = vset.pattern.permute.xlu0 1
        %489 = vperm.xlu0 %488, %v341
        %v490 = vpop.permute.xlu0 %489
        %491 = vset.pattern.permute.xlu0 1
        %492 = vperm.xlu0 %491, %v342
        %v493 = vpop.permute.xlu0 %492
        %494 = vset.pattern.permute.xlu0 1
        %495 = vperm.xlu0 %494, %v343
        %v496 = vpop.permute.xlu0 %495
        %497 = vset.pattern.permute.xlu0 1
        %498 = vperm.xlu0 %497, %v344
        %v499 = vpop.permute.xlu0 %498
        %500 = vset.pattern.permute.xlu0 1
        %501 = vperm.xlu0 %500, %v345
        %v502 = vpop.permute.xlu0 %501
        %503 = vset.pattern.permute.xlu0 1
        %504 = vperm.xlu0 %503, %v346
        %v505 = vpop.permute.xlu0 %504
        %506 = vset.pattern.permute.xlu0 1
        %507 = vperm.xlu0 %506, %v347
        %v508 = vpop.permute.xlu0 %507
        %509 = vset.pattern.permute.xlu0 1
        %510 = vperm.xlu0 %509, %v348
        %v511 = vpop.permute.xlu0 %510
        %512 = vset.pattern.permute.xlu0 1
        %513 = vperm.xlu0 %512, %v349
        %v514 = vpop.permute.xlu0 %513
        %vm515 = vcmp.eq.s32.totalorder %v351, %v469
        %vm516 = vcmp.eq.s32.totalorder %v352, %v469
        %vm517 = vcmp.eq.s32.totalorder %v353, %v469
        %vm518 = vcmp.eq.s32.totalorder %v354, %v469
        %vm519 = vcmp.eq.s32.totalorder %v351, %v472
        %vm520 = vcmp.eq.s32.totalorder %v352, %v472
        %vm521 = vcmp.eq.s32.totalorder %v353, %v472
        %vm522 = vcmp.eq.s32.totalorder %v354, %v472
        %vm523 = vcmp.eq.s32.totalorder %v351, %v475
        %vm524 = vcmp.eq.s32.totalorder %v352, %v475
        %vm525 = vcmp.eq.s32.totalorder %v353, %v475
        %vm526 = vcmp.eq.s32.totalorder %v354, %v475
        %vm527 = vcmp.eq.s32.totalorder %v351, %v478
        %vm528 = vcmp.eq.s32.totalorder %v352, %v478
        %vm529 = vcmp.eq.s32.totalorder %v353, %v478
        %vm530 = vcmp.eq.s32.totalorder %v354, %v478
        %vm531 = vcmp.eq.s32.totalorder %v351, %v481
        %vm532 = vcmp.eq.s32.totalorder %v352, %v481
        %vm533 = vcmp.eq.s32.totalorder %v353, %v481
        %vm534 = vcmp.eq.s32.totalorder %v354, %v481
        %vm535 = vcmp.eq.s32.totalorder %v351, %v484
        %vm536 = vcmp.eq.s32.totalorder %v352, %v484
        %vm537 = vcmp.eq.s32.totalorder %v353, %v484
        %vm538 = vcmp.eq.s32.totalorder %v354, %v484
        %vm539 = vcmp.eq.s32.totalorder %v351, %v487
        %vm540 = vcmp.eq.s32.totalorder %v352, %v487
        %vm541 = vcmp.eq.s32.totalorder %v353, %v487
        %vm542 = vcmp.eq.s32.totalorder %v354, %v487
        %vm543 = vcmp.eq.s32.totalorder %v351, %v490
        %vm544 = vcmp.eq.s32.totalorder %v352, %v490
        %vm545 = vcmp.eq.s32.totalorder %v353, %v490
        %vm546 = vcmp.eq.s32.totalorder %v354, %v490
        %vm547 = vcmp.eq.s32.totalorder %v351, %v493
        %vm548 = vcmp.eq.s32.totalorder %v352, %v493
        %vm549 = vcmp.eq.s32.totalorder %v353, %v493
        %vm550 = vcmp.eq.s32.totalorder %v354, %v493
        %vm551 = vcmp.eq.s32.totalorder %v351, %v496
        %vm552 = vcmp.eq.s32.totalorder %v352, %v496
        %vm553 = vcmp.eq.s32.totalorder %v353, %v496
        %vm554 = vcmp.eq.s32.totalorder %v354, %v496
        %vm555 = vcmp.eq.s32.totalorder %v351, %v499
        %vm556 = vcmp.eq.s32.totalorder %v352, %v499
        %vm557 = vcmp.eq.s32.totalorder %v353, %v499
        %vm558 = vcmp.eq.s32.totalorder %v354, %v499
        %vm559 = vcmp.eq.s32.totalorder %v351, %v502
        %vm560 = vcmp.eq.s32.totalorder %v352, %v502
        %vm561 = vcmp.eq.s32.totalorder %v353, %v502
        %vm562 = vcmp.eq.s32.totalorder %v354, %v502
        %vm563 = vcmp.eq.s32.totalorder %v351, %v505
        %vm564 = vcmp.eq.s32.totalorder %v352, %v505
        %vm565 = vcmp.eq.s32.totalorder %v353, %v505
        %vm566 = vcmp.eq.s32.totalorder %v354, %v505
        %vm567 = vcmp.eq.s32.totalorder %v351, %v508
        %vm568 = vcmp.eq.s32.totalorder %v352, %v508
        %vm569 = vcmp.eq.s32.totalorder %v353, %v508
        %vm570 = vcmp.eq.s32.totalorder %v354, %v508
        %vm571 = vcmp.eq.s32.totalorder %v351, %v511
        %vm572 = vcmp.eq.s32.totalorder %v352, %v511
        %vm573 = vcmp.eq.s32.totalorder %v353, %v511
        %vm574 = vcmp.eq.s32.totalorder %v354, %v511
        %vm575 = vcmp.eq.s32.totalorder %v351, %v514
        %vm576 = vcmp.eq.s32.totalorder %v352, %v514
        %vm577 = vcmp.eq.s32.totalorder %v353, %v514
        %vm578 = vcmp.eq.s32.totalorder %v354, %v514
        %vm579 = vmor %vm403, %vm515
        %vm580 = vmor %vm404, %vm516
        %vm581 = vmor %vm405, %vm517
        %vm582 = vmor %vm406, %vm518
        %vm583 = vmor %vm407, %vm519
        %vm584 = vmor %vm408, %vm520
        %vm585 = vmor %vm409, %vm521
        %vm586 = vmor %vm410, %vm522
        %vm587 = vmor %vm411, %vm523
        %vm588 = vmor %vm412, %vm524
        %vm589 = vmor %vm413, %vm525
        %vm590 = vmor %vm414, %vm526
        %vm591 = vmor %vm415, %vm527
        %vm592 = vmor %vm416, %vm528
        %vm593 = vmor %vm417, %vm529
        %vm594 = vmor %vm418, %vm530
        %vm595 = vmor %vm419, %vm531
        %vm596 = vmor %vm420, %vm532
        %vm597 = vmor %vm421, %vm533
        %vm598 = vmor %vm422, %vm534
        %vm599 = vmor %vm423, %vm535
        %vm600 = vmor %vm424, %vm536
        %vm601 = vmor %vm425, %vm537
        %vm602 = vmor %vm426, %vm538
        %vm603 = vmor %vm427, %vm539
        %vm604 = vmor %vm428, %vm540
        %vm605 = vmor %vm429, %vm541
        %vm606 = vmor %vm430, %vm542
        %vm607 = vmor %vm431, %vm543
        %vm608 = vmor %vm432, %vm544
        %vm609 = vmor %vm433, %vm545
        %vm610 = vmor %vm434, %vm546
        %vm611 = vmor %vm435, %vm547
        %vm612 = vmor %vm436, %vm548
        %vm613 = vmor %vm437, %vm549
        %vm614 = vmor %vm438, %vm550
        %vm615 = vmor %vm439, %vm551
        %vm616 = vmor %vm440, %vm552
        %vm617 = vmor %vm441, %vm553
        %vm618 = vmor %vm442, %vm554
        %vm619 = vmor %vm443, %vm555
        %vm620 = vmor %vm444, %vm556
        %vm621 = vmor %vm445, %vm557
        %vm622 = vmor %vm446, %vm558
        %vm623 = vmor %vm447, %vm559
        %vm624 = vmor %vm448, %vm560
        %vm625 = vmor %vm449, %vm561
        %vm626 = vmor %vm450, %vm562
        %vm627 = vmor %vm451, %vm563
        %vm628 = vmor %vm452, %vm564
        %vm629 = vmor %vm453, %vm565
        %vm630 = vmor %vm454, %vm566
        %vm631 = vmor %vm455, %vm567
        %vm632 = vmor %vm456, %vm568
        %vm633 = vmor %vm457, %vm569
        %vm634 = vmor %vm458, %vm570
        %vm635 = vmor %vm459, %vm571
        %vm636 = vmor %vm460, %vm572
        %vm637 = vmor %vm461, %vm573
        %vm638 = vmor %vm462, %vm574
        %vm639 = vmor %vm463, %vm575
        %vm640 = vmor %vm464, %vm576
        %vm641 = vmor %vm465, %vm577
        %vm642 = vmor %vm466, %vm578
        %v643 = vsel %vm579, 1, 0
        %v644 = vsel %vm580, 1, 0
        %v645 = vsel %vm581, 1, 0
        %v646 = vsel %vm582, 1, 0
        %v647 = vsel %vm583, 1, 0
        %v648 = vsel %vm584, 1, 0
        %v649 = vsel %vm585, 1, 0
        %v650 = vsel %vm586, 1, 0
        %v651 = vsel %vm587, 1, 0
        %v652 = vsel %vm588, 1, 0
        %v653 = vsel %vm589, 1, 0
        %v654 = vsel %vm590, 1, 0
        %v655 = vsel %vm591, 1, 0
        %v656 = vsel %vm592, 1, 0
        %v657 = vsel %vm593, 1, 0
        %v658 = vsel %vm594, 1, 0
        %v659 = vsel %vm595, 1, 0
        %v660 = vsel %vm596, 1, 0
        %v661 = vsel %vm597, 1, 0
        %v662 = vsel %vm598, 1, 0
        %v663 = vsel %vm599, 1, 0
        %v664 = vsel %vm600, 1, 0
        %v665 = vsel %vm601, 1, 0
        %v666 = vsel %vm602, 1, 0
        %v667 = vsel %vm603, 1, 0
        %v668 = vsel %vm604, 1, 0
        %v669 = vsel %vm605, 1, 0
        %v670 = vsel %vm606, 1, 0
        %v671 = vsel %vm607, 1, 0
        %v672 = vsel %vm608, 1, 0
        %v673 = vsel %vm609, 1, 0
        %v674 = vsel %vm610, 1, 0
        %v675 = vsel %vm611, 1, 0
        %v676 = vsel %vm612, 1, 0
        %v677 = vsel %vm613, 1, 0
        %v678 = vsel %vm614, 1, 0
        %v679 = vsel %vm615, 1, 0
        %v680 = vsel %vm616, 1, 0
        %v681 = vsel %vm617, 1, 0
        %v682 = vsel %vm618, 1, 0
        %v683 = vsel %vm619, 1, 0
        %v684 = vsel %vm620, 1, 0
        %v685 = vsel %vm621, 1, 0
        %v686 = vsel %vm622, 1, 0
        %v687 = vsel %vm623, 1, 0
        %v688 = vsel %vm624, 1, 0
        %v689 = vsel %vm625, 1, 0
        %v690 = vsel %vm626, 1, 0
        %v691 = vsel %vm627, 1, 0
        %v692 = vsel %vm628, 1, 0
        %v693 = vsel %vm629, 1, 0
        %v694 = vsel %vm630, 1, 0
        %v695 = vsel %vm631, 1, 0
        %v696 = vsel %vm632, 1, 0
        %v697 = vsel %vm633, 1, 0
        %v698 = vsel %vm634, 1, 0
        %v699 = vsel %vm635, 1, 0
        %v700 = vsel %vm636, 1, 0
        %v701 = vsel %vm637, 1, 0
        %v702 = vsel %vm638, 1, 0
        %v703 = vsel %vm639, 1, 0
        %v704 = vsel %vm640, 1, 0
        %v705 = vsel %vm641, 1, 0
        %v706 = vsel %vm642, 1, 0
        %v707 = vcvt.s32.f32 %v643
        %v708 = vcvt.s32.f32 %v644
        %v709 = vcvt.s32.f32 %v645
        %v710 = vcvt.s32.f32 %v646
        %v711 = vcvt.s32.f32 %v647
        %v712 = vcvt.s32.f32 %v648
        %v713 = vcvt.s32.f32 %v649
        %v714 = vcvt.s32.f32 %v650
        %v715 = vcvt.s32.f32 %v651
        %v716 = vcvt.s32.f32 %v652
        %v717 = vcvt.s32.f32 %v653
        %v718 = vcvt.s32.f32 %v654
        %v719 = vcvt.s32.f32 %v655
        %v720 = vcvt.s32.f32 %v656
        %v721 = vcvt.s32.f32 %v657
        %v722 = vcvt.s32.f32 %v658
        %v723 = vcvt.s32.f32 %v659
        %v724 = vcvt.s32.f32 %v660
        %v725 = vcvt.s32.f32 %v661
        %v726 = vcvt.s32.f32 %v662
        %v727 = vcvt.s32.f32 %v663
        %v728 = vcvt.s32.f32 %v664
        %v729 = vcvt.s32.f32 %v665
        %v730 = vcvt.s32.f32 %v666
        %v731 = vcvt.s32.f32 %v667
        %v732 = vcvt.s32.f32 %v668
        %v733 = vcvt.s32.f32 %v669
        %v734 = vcvt.s32.f32 %v670
        %v735 = vcvt.s32.f32 %v671
        %v736 = vcvt.s32.f32 %v672
        %v737 = vcvt.s32.f32 %v673
        %v738 = vcvt.s32.f32 %v674
        %v739 = vcvt.s32.f32 %v675
        %v740 = vcvt.s32.f32 %v676
        %v741 = vcvt.s32.f32 %v677
        %v742 = vcvt.s32.f32 %v678
        %v743 = vcvt.s32.f32 %v679
        %v744 = vcvt.s32.f32 %v680
        %v745 = vcvt.s32.f32 %v681
        %v746 = vcvt.s32.f32 %v682
        %v747 = vcvt.s32.f32 %v683
        %v748 = vcvt.s32.f32 %v684
        %v749 = vcvt.s32.f32 %v685
        %v750 = vcvt.s32.f32 %v686
        %v751 = vcvt.s32.f32 %v687
        %v752 = vcvt.s32.f32 %v688
        %v753 = vcvt.s32.f32 %v689
        %v754 = vcvt.s32.f32 %v690
        %v755 = vcvt.s32.f32 %v691
        %v756 = vcvt.s32.f32 %v692
        %v757 = vcvt.s32.f32 %v693
        %v758 = vcvt.s32.f32 %v694
        %v759 = vcvt.s32.f32 %v695
        %v760 = vcvt.s32.f32 %v696
        %v761 = vcvt.s32.f32 %v697
        %v762 = vcvt.s32.f32 %v698
        %v763 = vcvt.s32.f32 %v699
        %v764 = vcvt.s32.f32 %v700
        %v765 = vcvt.s32.f32 %v701
        %v766 = vcvt.s32.f32 %v702
        %v767 = vcvt.s32.f32 %v703
        %v768 = vcvt.s32.f32 %v704
        %v769 = vcvt.s32.f32 %v705
        %v770 = vcvt.s32.f32 %v706
        %v771 = vpack.c.bf16 %v711, %v707
        %v772 = vpack.c.bf16 %v712, %v708
        %v773 = vpack.c.bf16 %v713, %v709
        %v774 = vpack.c.bf16 %v714, %v710
        %v775 = vpack.c.bf16 %v719, %v715
        %v776 = vpack.c.bf16 %v720, %v716
        %v777 = vpack.c.bf16 %v721, %v717
        %v778 = vpack.c.bf16 %v722, %v718
        %v779 = vpack.c.bf16 %v727, %v723
        %v780 = vpack.c.bf16 %v728, %v724
        %v781 = vpack.c.bf16 %v729, %v725
        %v782 = vpack.c.bf16 %v730, %v726
        %v783 = vpack.c.bf16 %v735, %v731
        %v784 = vpack.c.bf16 %v736, %v732
        %v785 = vpack.c.bf16 %v737, %v733
        %v786 = vpack.c.bf16 %v738, %v734
        %v787 = vpack.c.bf16 %v743, %v739
        %v788 = vpack.c.bf16 %v744, %v740
        %v789 = vpack.c.bf16 %v745, %v741
        %v790 = vpack.c.bf16 %v746, %v742
        %v791 = vpack.c.bf16 %v751, %v747
        %v792 = vpack.c.bf16 %v752, %v748
        %v793 = vpack.c.bf16 %v753, %v749
        %v794 = vpack.c.bf16 %v754, %v750
        %v795 = vpack.c.bf16 %v759, %v755
        %v796 = vpack.c.bf16 %v760, %v756
        %v797 = vpack.c.bf16 %v761, %v757
        %v798 = vpack.c.bf16 %v762, %v758
        %v799 = vpack.c.bf16 %v767, %v763
        %v800 = vpack.c.bf16 %v768, %v764
        %v801 = vpack.c.bf16 %v769, %v765
        %v802 = vpack.c.bf16 %v770, %v766
        %v803 = vld [vmem:[#allocation2] sm:$0xff]
        %v804 = vld [vmem:[#allocation2 + $0x8] sm:$0xff]
        %v805 = vld [vmem:[#allocation2 + $0x10] sm:$0xff]
        %v806 = vld [vmem:[#allocation2 + $0x18] sm:$0xff]
        %v807 = vld [vmem:[#allocation2 + $0x20] sm:$0xff]
        %v808 = vld [vmem:[#allocation2 + $0x28] sm:$0xff]
        %v809 = vld [vmem:[#allocation2 + $0x30] sm:$0xff]
        %v810 = vld [vmem:[#allocation2 + $0x38] sm:$0xff]
        %v811 = vld [vmem:[#allocation2 + $0x40] sm:$0xff]
        %v812 = vld [vmem:[#allocation2 + $0x48] sm:$0xff]
        %v813 = vld [vmem:[#allocation2 + $0x50] sm:$0xff]
        %v814 = vld [vmem:[#allocation2 + $0x58] sm:$0xff]
        %v815 = vld [vmem:[#allocation2 + $0x60] sm:$0xff]
        %v816 = vld [vmem:[#allocation2 + $0x68] sm:$0xff]
        %v817 = vld [vmem:[#allocation2 + $0x70] sm:$0xff]
        %v818 = vld [vmem:[#allocation2 + $0x78] sm:$0xff]
        %v819 = vld [vmem:[#allocation2 + $0x80] sm:$0xff]
        %v820 = vld [vmem:[#allocation2 + $0x88] sm:$0xff]
        %v821 = vld [vmem:[#allocation2 + $0x90] sm:$0xff]
        %v822 = vld [vmem:[#allocation2 + $0x98] sm:$0xff]
        %v823 = vld [vmem:[#allocation2 + $0xa0] sm:$0xff]
        %v824 = vld [vmem:[#allocation2 + $0xa8] sm:$0xff]
        %v825 = vld [vmem:[#allocation2 + $0xb0] sm:$0xff]
        %v826 = vld [vmem:[#allocation2 + $0xb8] sm:$0xff]
        %v827 = vld [vmem:[#allocation2 + $0xc0] sm:$0xff]
        %v828 = vld [vmem:[#allocation2 + $0xc8] sm:$0xff]
        %v829 = vld [vmem:[#allocation2 + $0xd0] sm:$0xff]
        %v830 = vld [vmem:[#allocation2 + $0xd8] sm:$0xff]
        %v831 = vld [vmem:[#allocation2 + $0xe0] sm:$0xff]
        %v832 = vld [vmem:[#allocation2 + $0xe8] sm:$0xff]
        %v833 = vld [vmem:[#allocation2 + $0xf0] sm:$0xff]
        %v834 = vld [vmem:[#allocation2 + $0xf8] sm:$0xff]
        %v835 = vld [vmem:[#allocation2 + $0x100] sm:$0xff]
        %v836 = vld [vmem:[#allocation2 + $0x108] sm:$0xff]
        %v837 = vld [vmem:[#allocation2 + $0x110] sm:$0xff]
        %v838 = vld [vmem:[#allocation2 + $0x118] sm:$0xff]
        %v839 = vld [vmem:[#allocation2 + $0x120] sm:$0xff]
        %v840 = vld [vmem:[#allocation2 + $0x128] sm:$0xff]
        %v841 = vld [vmem:[#allocation2 + $0x130] sm:$0xff]
        %v842 = vld [vmem:[#allocation2 + $0x138] sm:$0xff]
        %v843 = vld [vmem:[#allocation2 + $0x140] sm:$0xff]
        %v844 = vld [vmem:[#allocation2 + $0x148] sm:$0xff]
        %v845 = vld [vmem:[#allocation2 + $0x150] sm:$0xff]
        %v846 = vld [vmem:[#allocation2 + $0x158] sm:$0xff]
        %v847 = vld [vmem:[#allocation2 + $0x160] sm:$0xff]
        %v848 = vld [vmem:[#allocation2 + $0x168] sm:$0xff]
        %v849 = vld [vmem:[#allocation2 + $0x170] sm:$0xff]
        %v850 = vld [vmem:[#allocation2 + $0x178] sm:$0xff]
        %v851 = vld [vmem:[#allocation2 + $0x180] sm:$0xff]
        %v852 = vld [vmem:[#allocation2 + $0x188] sm:$0xff]
        %v853 = vld [vmem:[#allocation2 + $0x190] sm:$0xff]
        %v854 = vld [vmem:[#allocation2 + $0x198] sm:$0xff]
        %v855 = vld [vmem:[#allocation2 + $0x1a0] sm:$0xff]
        %v856 = vld [vmem:[#allocation2 + $0x1a8] sm:$0xff]
        %v857 = vld [vmem:[#allocation2 + $0x1b0] sm:$0xff]
        %v858 = vld [vmem:[#allocation2 + $0x1b8] sm:$0xff]
        %v859 = vld [vmem:[#allocation2 + $0x1c0] sm:$0xff]
        %v860 = vld [vmem:[#allocation2 + $0x1c8] sm:$0xff]
        %v861 = vld [vmem:[#allocation2 + $0x1d0] sm:$0xff]
        %v862 = vld [vmem:[#allocation2 + $0x1d8] sm:$0xff]
        %v863 = vld [vmem:[#allocation2 + $0x1e0] sm:$0xff]
        %v864 = vld [vmem:[#allocation2 + $0x1e8] sm:$0xff]
        %v865 = vld [vmem:[#allocation2 + $0x1f0] sm:$0xff]
        %v866 = vld [vmem:[#allocation2 + $0x1f8] sm:$0xff]
        %v931 = vunpack.c.l.b16 %v803
        %v932 = vunpack.c.h.b16 %v803
        %v933 = vunpack.c.l.b16 %v804
        %v934 = vunpack.c.h.b16 %v804
        %v935 = vunpack.c.l.b16 %v805
        %v936 = vunpack.c.h.b16 %v805
        %v937 = vunpack.c.l.b16 %v806
        %v938 = vunpack.c.h.b16 %v806
        %v939 = vunpack.c.l.b16 %v807
        %v940 = vunpack.c.h.b16 %v807
        %v941 = vunpack.c.l.b16 %v808
        %v942 = vunpack.c.h.b16 %v808
        %v943 = vunpack.c.l.b16 %v809
        %v944 = vunpack.c.h.b16 %v809
        %v945 = vunpack.c.l.b16 %v810
        %v946 = vunpack.c.h.b16 %v810
        %v947 = vunpack.c.l.b16 %v811
        %v948 = vunpack.c.h.b16 %v811
        %v949 = vunpack.c.l.b16 %v812
        %v950 = vunpack.c.h.b16 %v812
        %v951 = vunpack.c.l.b16 %v813
        %v952 = vunpack.c.h.b16 %v813
        %v953 = vunpack.c.l.b16 %v814
        %v954 = vunpack.c.h.b16 %v814
        %v955 = vunpack.c.l.b16 %v815
        %v956 = vunpack.c.h.b16 %v815
        %v957 = vunpack.c.l.b16 %v816
        %v958 = vunpack.c.h.b16 %v816
        %v959 = vunpack.c.l.b16 %v817
        %v960 = vunpack.c.h.b16 %v817
        %v961 = vunpack.c.l.b16 %v818
        %v962 = vunpack.c.h.b16 %v818
        %v963 = vunpack.c.l.b16 %v819
        %v964 = vunpack.c.h.b16 %v819
        %v965 = vunpack.c.l.b16 %v820
        %v966 = vunpack.c.h.b16 %v820
        %v967 = vunpack.c.l.b16 %v821
        %v968 = vunpack.c.h.b16 %v821
        %v969 = vunpack.c.l.b16 %v822
        %v970 = vunpack.c.h.b16 %v822
        %v971 = vunpack.c.l.b16 %v823
        %v972 = vunpack.c.h.b16 %v823
        %v973 = vunpack.c.l.b16 %v824
        %v974 = vunpack.c.h.b16 %v824
        %v975 = vunpack.c.l.b16 %v825
        %v976 = vunpack.c.h.b16 %v825
        %v977 = vunpack.c.l.b16 %v826
        %v978 = vunpack.c.h.b16 %v826
        %v979 = vunpack.c.l.b16 %v827
        %v980 = vunpack.c.h.b16 %v827
        %v981 = vunpack.c.l.b16 %v828
        %v982 = vunpack.c.h.b16 %v828
        %v983 = vunpack.c.l.b16 %v829
        %v984 = vunpack.c.h.b16 %v829
        %v985 = vunpack.c.l.b16 %v830
        %v986 = vunpack.c.h.b16 %v830
        %v987 = vunpack.c.l.b16 %v831
        %v988 = vunpack.c.h.b16 %v831
        %v989 = vunpack.c.l.b16 %v832
        %v990 = vunpack.c.h.b16 %v832
        %v991 = vunpack.c.l.b16 %v833
        %v992 = vunpack.c.h.b16 %v833
        %v993 = vunpack.c.l.b16 %v834
        %v994 = vunpack.c.h.b16 %v834
        %v995 = vunpack.c.l.b16 %v835
        %v996 = vunpack.c.h.b16 %v835
        %v997 = vunpack.c.l.b16 %v836
        %v998 = vunpack.c.h.b16 %v836
        %v999 = vunpack.c.l.b16 %v837
        %v1000 = vunpack.c.h.b16 %v837
        %v1001 = vunpack.c.l.b16 %v838
        %v1002 = vunpack.c.h.b16 %v838
        %v1003 = vunpack.c.l.b16 %v839
        %v1004 = vunpack.c.h.b16 %v839
        %v1005 = vunpack.c.l.b16 %v840
        %v1006 = vunpack.c.h.b16 %v840
        %v1007 = vunpack.c.l.b16 %v841
        %v1008 = vunpack.c.h.b16 %v841
        %v1009 = vunpack.c.l.b16 %v842
        %v1010 = vunpack.c.h.b16 %v842
        %v1011 = vunpack.c.l.b16 %v843
        %v1012 = vunpack.c.h.b16 %v843
        %v1013 = vunpack.c.l.b16 %v844
        %v1014 = vunpack.c.h.b16 %v844
        %v1015 = vunpack.c.l.b16 %v845
        %v1016 = vunpack.c.h.b16 %v845
        %v1017 = vunpack.c.l.b16 %v846
        %v1018 = vunpack.c.h.b16 %v846
        %v1019 = vunpack.c.l.b16 %v847
        %v1020 = vunpack.c.h.b16 %v847
        %v1021 = vunpack.c.l.b16 %v848
        %v1022 = vunpack.c.h.b16 %v848
        %v1023 = vunpack.c.l.b16 %v849
        %v1024 = vunpack.c.h.b16 %v849
        %v1025 = vunpack.c.l.b16 %v850
        %v1026 = vunpack.c.h.b16 %v850
        %v1027 = vunpack.c.l.b16 %v851
        %v1028 = vunpack.c.h.b16 %v851
        %v1029 = vunpack.c.l.b16 %v852
        %v1030 = vunpack.c.h.b16 %v852
        %v1031 = vunpack.c.l.b16 %v853
        %v1032 = vunpack.c.h.b16 %v853
        %v1033 = vunpack.c.l.b16 %v854
        %v1034 = vunpack.c.h.b16 %v854
        %v1035 = vunpack.c.l.b16 %v855
        %v1036 = vunpack.c.h.b16 %v855
        %v1037 = vunpack.c.l.b16 %v856
        %v1038 = vunpack.c.h.b16 %v856
        %v1039 = vunpack.c.l.b16 %v857
        %v1040 = vunpack.c.h.b16 %v857
        %v1041 = vunpack.c.l.b16 %v858
        %v1042 = vunpack.c.h.b16 %v858
        %v1043 = vunpack.c.l.b16 %v859
        %v1044 = vunpack.c.h.b16 %v859
        %v1045 = vunpack.c.l.b16 %v860
        %v1046 = vunpack.c.h.b16 %v860
        %v1047 = vunpack.c.l.b16 %v861
        %v1048 = vunpack.c.h.b16 %v861
        %v1049 = vunpack.c.l.b16 %v862
        %v1050 = vunpack.c.h.b16 %v862
        %v1051 = vunpack.c.l.b16 %v863
        %v1052 = vunpack.c.h.b16 %v863
        %v1053 = vunpack.c.l.b16 %v864
        %v1054 = vunpack.c.h.b16 %v864
        %v1055 = vunpack.c.l.b16 %v865
        %v1056 = vunpack.c.h.b16 %v865
        %v1057 = vunpack.c.l.b16 %v866
        %v1058 = vunpack.c.h.b16 %v866
        %v1059 = vpack.c.b16 %v933, %v931
        %v1060 = vpack.c.b16 %v934, %v932
        %v1061 = vpack.c.b16 %v937, %v935
        %v1062 = vpack.c.b16 %v938, %v936
        %v1063 = vpack.c.b16 %v941, %v939
        %v1064 = vpack.c.b16 %v942, %v940
        %v1065 = vpack.c.b16 %v945, %v943
        %v1066 = vpack.c.b16 %v946, %v944
        %v1067 = vpack.c.b16 %v949, %v947
        %v1068 = vpack.c.b16 %v950, %v948
        %v1069 = vpack.c.b16 %v953, %v951
        %v1070 = vpack.c.b16 %v954, %v952
        %v1071 = vpack.c.b16 %v957, %v955
        %v1072 = vpack.c.b16 %v958, %v956
        %v1073 = vpack.c.b16 %v961, %v959
        %v1074 = vpack.c.b16 %v962, %v960
        %v1075 = vpack.c.b16 %v965, %v963
        %v1076 = vpack.c.b16 %v966, %v964
        %v1077 = vpack.c.b16 %v969, %v967
        %v1078 = vpack.c.b16 %v970, %v968
        %v1079 = vpack.c.b16 %v973, %v971
        %v1080 = vpack.c.b16 %v974, %v972
        %v1081 = vpack.c.b16 %v977, %v975
        %v1082 = vpack.c.b16 %v978, %v976
        %v1083 = vpack.c.b16 %v981, %v979
        %v1084 = vpack.c.b16 %v982, %v980
        %v1085 = vpack.c.b16 %v985, %v983
        %v1086 = vpack.c.b16 %v986, %v984
        %v1087 = vpack.c.b16 %v989, %v987
        %v1088 = vpack.c.b16 %v990, %v988
        %v1089 = vpack.c.b16 %v993, %v991
        %v1090 = vpack.c.b16 %v994, %v992
        %v1091 = vpack.c.b16 %v997, %v995
        %v1092 = vpack.c.b16 %v998, %v996
        %v1093 = vpack.c.b16 %v1001, %v999
        %v1094 = vpack.c.b16 %v1002, %v1000
        %v1095 = vpack.c.b16 %v1005, %v1003
        %v1096 = vpack.c.b16 %v1006, %v1004
        %v1097 = vpack.c.b16 %v1009, %v1007
        %v1098 = vpack.c.b16 %v1010, %v1008
        %v1099 = vpack.c.b16 %v1013, %v1011
        %v1100 = vpack.c.b16 %v1014, %v1012
        %v1101 = vpack.c.b16 %v1017, %v1015
        %v1102 = vpack.c.b16 %v1018, %v1016
        %v1103 = vpack.c.b16 %v1021, %v1019
        %v1104 = vpack.c.b16 %v1022, %v1020
        %v1105 = vpack.c.b16 %v1025, %v1023
        %v1106 = vpack.c.b16 %v1026, %v1024
        %v1107 = vpack.c.b16 %v1029, %v1027
        %v1108 = vpack.c.b16 %v1030, %v1028
        %v1109 = vpack.c.b16 %v1033, %v1031
        %v1110 = vpack.c.b16 %v1034, %v1032
        %v1111 = vpack.c.b16 %v1037, %v1035
        %v1112 = vpack.c.b16 %v1038, %v1036
        %v1113 = vpack.c.b16 %v1041, %v1039
        %v1114 = vpack.c.b16 %v1042, %v1040
        %v1115 = vpack.c.b16 %v1045, %v1043
        %v1116 = vpack.c.b16 %v1046, %v1044
        %v1117 = vpack.c.b16 %v1049, %v1047
        %v1118 = vpack.c.b16 %v1050, %v1048
        %v1119 = vpack.c.b16 %v1053, %v1051
        %v1120 = vpack.c.b16 %v1054, %v1052
        %v1121 = vpack.c.b16 %v1057, %v1055
        %v1122 = vpack.c.b16 %v1058, %v1056
        %1187 = vmatpush.bf16.msra.mxu0 %v1073
        %1188 = vmatpush.bf16.msra.mxu0 %v1071
        %1189 = vmatpush.bf16.msra.mxu0 %v1069
        %1190 = vmatpush.bf16.msra.mxu0 %v1067
        %1191 = vmatpush.bf16.msra.mxu0 %v1065
        %1192 = vmatpush.bf16.msra.mxu0 %v1063
        %1193 = vmatpush.bf16.msra.mxu0 %v1061
        %1194 = vmatpush.bf16.msra.mxu0 %v1059
        %1195 = vmatmul.bf16.gmra.mxu0 %v771
        %v1196 = vpop.f32.mrf.mxu0
        %v1197 = vadd.f32 0.0, %v1196
        %v1198 = vpop.f32.mrf.mxu0
        %v1199 = vadd.f32 0.0, %v1198
        %1200 = vmatmul.bf16.gmra.mxu0 %v775
        %v1201 = vpop.f32.mrf.mxu0
        %v1202 = vadd.f32 0.0, %v1201
        %v1203 = vpop.f32.mrf.mxu0
        %v1204 = vadd.f32 0.0, %v1203
        %1205 = vmatmul.bf16.gmra.mxu0 %v779
        %v1206 = vpop.f32.mrf.mxu0
        %v1207 = vadd.f32 0.0, %v1206
        %v1208 = vpop.f32.mrf.mxu0
        %v1209 = vadd.f32 0.0, %v1208
        %1210 = vmatmul.bf16.gmra.mxu0 %v783
        %v1211 = vpop.f32.mrf.mxu0
        %v1212 = vadd.f32 0.0, %v1211
        %v1213 = vpop.f32.mrf.mxu0
        %v1214 = vadd.f32 0.0, %v1213
        %1215 = vmatmul.bf16.gmra.mxu0 %v787
        %v1216 = vpop.f32.mrf.mxu0
        %v1217 = vadd.f32 0.0, %v1216
        %v1218 = vpop.f32.mrf.mxu0
        %v1219 = vadd.f32 0.0, %v1218
        %1220 = vmatmul.bf16.gmra.mxu0 %v791
        %v1221 = vpop.f32.mrf.mxu0
        %v1222 = vadd.f32 0.0, %v1221
        %v1223 = vpop.f32.mrf.mxu0
        %v1224 = vadd.f32 0.0, %v1223
        %1225 = vmatmul.bf16.gmra.mxu0 %v795
        %v1226 = vpop.f32.mrf.mxu0
        %v1227 = vadd.f32 0.0, %v1226
        %v1228 = vpop.f32.mrf.mxu0
        %v1229 = vadd.f32 0.0, %v1228
        %1230 = vmatmul.bf16.gmra.mxu0 %v799
        %v1231 = vpop.f32.mrf.mxu0
        %v1232 = vadd.f32 0.0, %v1231
        %v1233 = vpop.f32.mrf.mxu0
        %v1234 = vadd.f32 0.0, %v1233
        %1235 = vdwg.mxu0
        %1236 = vmatpush.bf16.msra.mxu0 %v1089
        %1237 = vmatpush.bf16.msra.mxu0 %v1087
        %1238 = vmatpush.bf16.msra.mxu0 %v1085
        %1239 = vmatpush.bf16.msra.mxu0 %v1083
        %1240 = vmatpush.bf16.msra.mxu0 %v1081
        %1241 = vmatpush.bf16.msra.mxu0 %v1079
        %1242 = vmatpush.bf16.msra.mxu0 %v1077
        %1243 = vmatpush.bf16.msra.mxu0 %v1075
        %1244 = vmatmul.bf16.gmra.mxu0 %v772
        %v1245 = vpop.f32.mrf.mxu0
        %v1246 = vadd.f32 %v1197, %v1245
        %v1247 = vpop.f32.mrf.mxu0
        %v1248 = vadd.f32 %v1199, %v1247
        %1249 = vmatmul.bf16.gmra.mxu0 %v776
        %v1250 = vpop.f32.mrf.mxu0
        %v1251 = vadd.f32 %v1202, %v1250
        %v1252 = vpop.f32.mrf.mxu0
        %v1253 = vadd.f32 %v1204, %v1252
        %1254 = vmatmul.bf16.gmra.mxu0 %v780
        %v1255 = vpop.f32.mrf.mxu0
        %v1256 = vadd.f32 %v1207, %v1255
        %v1257 = vpop.f32.mrf.mxu0
        %v1258 = vadd.f32 %v1209, %v1257
        %1259 = vmatmul.bf16.gmra.mxu0 %v784
        %v1260 = vpop.f32.mrf.mxu0
        %v1261 = vadd.f32 %v1212, %v1260
        %v1262 = vpop.f32.mrf.mxu0
        %v1263 = vadd.f32 %v1214, %v1262
        %1264 = vmatmul.bf16.gmra.mxu0 %v788
        %v1265 = vpop.f32.mrf.mxu0
        %v1266 = vadd.f32 %v1217, %v1265
        %v1267 = vpop.f32.mrf.mxu0
        %v1268 = vadd.f32 %v1219, %v1267
        %1269 = vmatmul.bf16.gmra.mxu0 %v792
        %v1270 = vpop.f32.mrf.mxu0
        %v1271 = vadd.f32 %v1222, %v1270
        %v1272 = vpop.f32.mrf.mxu0
        %v1273 = vadd.f32 %v1224, %v1272
        %1274 = vmatmul.bf16.gmra.mxu0 %v796
        %v1275 = vpop.f32.mrf.mxu0
        %v1276 = vadd.f32 %v1227, %v1275
        %v1277 = vpop.f32.mrf.mxu0
        %v1278 = vadd.f32 %v1229, %v1277
        %1279 = vmatmul.bf16.gmra.mxu0 %v800
        %v1280 = vpop.f32.mrf.mxu0
        %v1281 = vadd.f32 %v1232, %v1280
        %v1282 = vpop.f32.mrf.mxu0
        %v1283 = vadd.f32 %v1234, %v1282
        %1284 = vdwg.mxu0
        %1285 = vmatpush.bf16.msra.mxu0 %v1105
        %1286 = vmatpush.bf16.msra.mxu0 %v1103
        %1287 = vmatpush.bf16.msra.mxu0 %v1101
        %1288 = vmatpush.bf16.msra.mxu0 %v1099
        %1289 = vmatpush.bf16.msra.mxu0 %v1097
        %1290 = vmatpush.bf16.msra.mxu0 %v1095
        %1291 = vmatpush.bf16.msra.mxu0 %v1093
        %1292 = vmatpush.bf16.msra.mxu0 %v1091
        %1293 = vmatmul.bf16.gmra.mxu0 %v773
        %v1294 = vpop.f32.mrf.mxu0
        %v1295 = vadd.f32 %v1246, %v1294
        %v1296 = vpop.f32.mrf.mxu0
        %v1297 = vadd.f32 %v1248, %v1296
        %1298 = vmatmul.bf16.gmra.mxu0 %v777
        %v1299 = vpop.f32.mrf.mxu0
        %v1300 = vadd.f32 %v1251, %v1299
        %v1301 = vpop.f32.mrf.mxu0
        %v1302 = vadd.f32 %v1253, %v1301
        %1303 = vmatmul.bf16.gmra.mxu0 %v781
        %v1304 = vpop.f32.mrf.mxu0
        %v1305 = vadd.f32 %v1256, %v1304
        %v1306 = vpop.f32.mrf.mxu0
        %v1307 = vadd.f32 %v1258, %v1306
        %1308 = vmatmul.bf16.gmra.mxu0 %v785
        %v1309 = vpop.f32.mrf.mxu0
        %v1310 = vadd.f32 %v1261, %v1309
        %v1311 = vpop.f32.mrf.mxu0
        %v1312 = vadd.f32 %v1263, %v1311
        %1313 = vmatmul.bf16.gmra.mxu0 %v789
        %v1314 = vpop.f32.mrf.mxu0
        %v1315 = vadd.f32 %v1266, %v1314
        %v1316 = vpop.f32.mrf.mxu0
        %v1317 = vadd.f32 %v1268, %v1316
        %1318 = vmatmul.bf16.gmra.mxu0 %v793
        %v1319 = vpop.f32.mrf.mxu0
        %v1320 = vadd.f32 %v1271, %v1319
        %v1321 = vpop.f32.mrf.mxu0
        %v1322 = vadd.f32 %v1273, %v1321
        %1323 = vmatmul.bf16.gmra.mxu0 %v797
        %v1324 = vpop.f32.mrf.mxu0
        %v1325 = vadd.f32 %v1276, %v1324
        %v1326 = vpop.f32.mrf.mxu0
        %v1327 = vadd.f32 %v1278, %v1326
        %1328 = vmatmul.bf16.gmra.mxu0 %v801
        %v1329 = vpop.f32.mrf.mxu0
        %v1330 = vadd.f32 %v1281, %v1329
        %v1331 = vpop.f32.mrf.mxu0
        %v1332 = vadd.f32 %v1283, %v1331
        %1333 = vdwg.mxu0
        %1334 = vmatpush.bf16.msra.mxu0 %v1121
        %1335 = vmatpush.bf16.msra.mxu0 %v1119
        %1336 = vmatpush.bf16.msra.mxu0 %v1117
        %1337 = vmatpush.bf16.msra.mxu0 %v1115
        %1338 = vmatpush.bf16.msra.mxu0 %v1113
        %1339 = vmatpush.bf16.msra.mxu0 %v1111
        %1340 = vmatpush.bf16.msra.mxu0 %v1109
        %1341 = vmatpush.bf16.msra.mxu0 %v1107
        %1342 = vmatmul.bf16.gmra.mxu0 %v774
        %v1343 = vpop.f32.mrf.mxu0
        %v1344 = vadd.f32 %v1295, %v1343
        %v1345 = vpop.f32.mrf.mxu0
        %v1346 = vadd.f32 %v1297, %v1345
        %1347 = vmatmul.bf16.gmra.mxu0 %v778
        %v1348 = vpop.f32.mrf.mxu0
        %v1349 = vadd.f32 %v1300, %v1348
        %v1350 = vpop.f32.mrf.mxu0
        %v1351 = vadd.f32 %v1302, %v1350
        %1352 = vmatmul.bf16.gmra.mxu0 %v782
        %v1353 = vpop.f32.mrf.mxu0
        %v1354 = vadd.f32 %v1305, %v1353
        %v1355 = vpop.f32.mrf.mxu0
        %v1356 = vadd.f32 %v1307, %v1355
        %1357 = vmatmul.bf16.gmra.mxu0 %v786
        %v1358 = vpop.f32.mrf.mxu0
        %v1359 = vadd.f32 %v1310, %v1358
        %v1360 = vpop.f32.mrf.mxu0
        %v1361 = vadd.f32 %v1312, %v1360
        %1362 = vmatmul.bf16.gmra.mxu0 %v790
        %v1363 = vpop.f32.mrf.mxu0
        %v1364 = vadd.f32 %v1315, %v1363
        %v1365 = vpop.f32.mrf.mxu0
        %v1366 = vadd.f32 %v1317, %v1365
        %1367 = vmatmul.bf16.gmra.mxu0 %v794
        %v1368 = vpop.f32.mrf.mxu0
        %v1369 = vadd.f32 %v1320, %v1368
        %v1370 = vpop.f32.mrf.mxu0
        %v1371 = vadd.f32 %v1322, %v1370
        %1372 = vmatmul.bf16.gmra.mxu0 %v798
        %v1373 = vpop.f32.mrf.mxu0
        %v1374 = vadd.f32 %v1325, %v1373
        %v1375 = vpop.f32.mrf.mxu0
        %v1376 = vadd.f32 %v1327, %v1375
        %1377 = vmatmul.bf16.gmra.mxu0 %v802
        %v1378 = vpop.f32.mrf.mxu0
        %v1379 = vadd.f32 %v1330, %v1378
        %v1380 = vpop.f32.mrf.mxu0
        %v1381 = vadd.f32 %v1332, %v1380
        %1382 = vdwg.mxu0
        %1383 = vmatpush.bf16.msra.mxu0 %v1074
        %1384 = vmatpush.bf16.msra.mxu0 %v1072
        %1385 = vmatpush.bf16.msra.mxu0 %v1070
        %1386 = vmatpush.bf16.msra.mxu0 %v1068
        %1387 = vmatpush.bf16.msra.mxu0 %v1066
        %1388 = vmatpush.bf16.msra.mxu0 %v1064
        %1389 = vmatpush.bf16.msra.mxu0 %v1062
        %1390 = vmatpush.bf16.msra.mxu0 %v1060
        %1391 = vmatmul.bf16.gmra.mxu0 %v771
        %v1392 = vpop.f32.mrf.mxu0
        %v1393 = vadd.f32 0.0, %v1392
        %v1394 = vpop.f32.mrf.mxu0
        %v1395 = vadd.f32 0.0, %v1394
        %1396 = vmatmul.bf16.gmra.mxu0 %v775
        %v1397 = vpop.f32.mrf.mxu0
        %v1398 = vadd.f32 0.0, %v1397
        %v1399 = vpop.f32.mrf.mxu0
        %v1400 = vadd.f32 0.0, %v1399
        %1401 = vmatmul.bf16.gmra.mxu0 %v779
        %v1402 = vpop.f32.mrf.mxu0
        %v1403 = vadd.f32 0.0, %v1402
        %v1404 = vpop.f32.mrf.mxu0
        %v1405 = vadd.f32 0.0, %v1404
        %1406 = vmatmul.bf16.gmra.mxu0 %v783
        %v1407 = vpop.f32.mrf.mxu0
        %v1408 = vadd.f32 0.0, %v1407
        %v1409 = vpop.f32.mrf.mxu0
        %v1410 = vadd.f32 0.0, %v1409
        %1411 = vmatmul.bf16.gmra.mxu0 %v787
        %v1412 = vpop.f32.mrf.mxu0
        %v1413 = vadd.f32 0.0, %v1412
        %v1414 = vpop.f32.mrf.mxu0
        %v1415 = vadd.f32 0.0, %v1414
        %1416 = vmatmul.bf16.gmra.mxu0 %v791
        %v1417 = vpop.f32.mrf.mxu0
        %v1418 = vadd.f32 0.0, %v1417
        %v1419 = vpop.f32.mrf.mxu0
        %v1420 = vadd.f32 0.0, %v1419
        %1421 = vmatmul.bf16.gmra.mxu0 %v795
        %v1422 = vpop.f32.mrf.mxu0
        %v1423 = vadd.f32 0.0, %v1422
        %v1424 = vpop.f32.mrf.mxu0
        %v1425 = vadd.f32 0.0, %v1424
        %1426 = vmatmul.bf16.gmra.mxu0 %v799
        %v1427 = vpop.f32.mrf.mxu0
        %v1428 = vadd.f32 0.0, %v1427
        %v1429 = vpop.f32.mrf.mxu0
        %v1430 = vadd.f32 0.0, %v1429
        %1431 = vdwg.mxu0
        %1432 = vmatpush.bf16.msra.mxu0 %v1090
        %1433 = vmatpush.bf16.msra.mxu0 %v1088
        %1434 = vmatpush.bf16.msra.mxu0 %v1086
        %1435 = vmatpush.bf16.msra.mxu0 %v1084
        %1436 = vmatpush.bf16.msra.mxu0 %v1082
        %1437 = vmatpush.bf16.msra.mxu0 %v1080
        %1438 = vmatpush.bf16.msra.mxu0 %v1078
        %1439 = vmatpush.bf16.msra.mxu0 %v1076
        %1440 = vmatmul.bf16.gmra.mxu0 %v772
        %v1441 = vpop.f32.mrf.mxu0
        %v1442 = vadd.f32 %v1393, %v1441
        %v1443 = vpop.f32.mrf.mxu0
        %v1444 = vadd.f32 %v1395, %v1443
        %1445 = vmatmul.bf16.gmra.mxu0 %v776
        %v1446 = vpop.f32.mrf.mxu0
        %v1447 = vadd.f32 %v1398, %v1446
        %v1448 = vpop.f32.mrf.mxu0
        %v1449 = vadd.f32 %v1400, %v1448
        %1450 = vmatmul.bf16.gmra.mxu0 %v780
        %v1451 = vpop.f32.mrf.mxu0
        %v1452 = vadd.f32 %v1403, %v1451
        %v1453 = vpop.f32.mrf.mxu0
        %v1454 = vadd.f32 %v1405, %v1453
        %1455 = vmatmul.bf16.gmra.mxu0 %v784
        %v1456 = vpop.f32.mrf.mxu0
        %v1457 = vadd.f32 %v1408, %v1456
        %v1458 = vpop.f32.mrf.mxu0
        %v1459 = vadd.f32 %v1410, %v1458
        %1460 = vmatmul.bf16.gmra.mxu0 %v788
        %v1461 = vpop.f32.mrf.mxu0
        %v1462 = vadd.f32 %v1413, %v1461
        %v1463 = vpop.f32.mrf.mxu0
        %v1464 = vadd.f32 %v1415, %v1463
        %1465 = vmatmul.bf16.gmra.mxu0 %v792
        %v1466 = vpop.f32.mrf.mxu0
        %v1467 = vadd.f32 %v1418, %v1466
        %v1468 = vpop.f32.mrf.mxu0
        %v1469 = vadd.f32 %v1420, %v1468
        %1470 = vmatmul.bf16.gmra.mxu0 %v796
        %v1471 = vpop.f32.mrf.mxu0
        %v1472 = vadd.f32 %v1423, %v1471
        %v1473 = vpop.f32.mrf.mxu0
        %v1474 = vadd.f32 %v1425, %v1473
        %1475 = vmatmul.bf16.gmra.mxu0 %v800
        %v1476 = vpop.f32.mrf.mxu0
        %v1477 = vadd.f32 %v1428, %v1476
        %v1478 = vpop.f32.mrf.mxu0
        %v1479 = vadd.f32 %v1430, %v1478
        %1480 = vdwg.mxu0
        %1481 = vmatpush.bf16.msra.mxu0 %v1106
        %1482 = vmatpush.bf16.msra.mxu0 %v1104
        %1483 = vmatpush.bf16.msra.mxu0 %v1102
        %1484 = vmatpush.bf16.msra.mxu0 %v1100
        %1485 = vmatpush.bf16.msra.mxu0 %v1098
        %1486 = vmatpush.bf16.msra.mxu0 %v1096
        %1487 = vmatpush.bf16.msra.mxu0 %v1094
        %1488 = vmatpush.bf16.msra.mxu0 %v1092
        %1489 = vmatmul.bf16.gmra.mxu0 %v773
        %v1490 = vpop.f32.mrf.mxu0
        %v1491 = vadd.f32 %v1442, %v1490
        %v1492 = vpop.f32.mrf.mxu0
        %v1493 = vadd.f32 %v1444, %v1492
        %1494 = vmatmul.bf16.gmra.mxu0 %v777
        %v1495 = vpop.f32.mrf.mxu0
        %v1496 = vadd.f32 %v1447, %v1495
        %v1497 = vpop.f32.mrf.mxu0
        %v1498 = vadd.f32 %v1449, %v1497
        %1499 = vmatmul.bf16.gmra.mxu0 %v781
        %v1500 = vpop.f32.mrf.mxu0
        %v1501 = vadd.f32 %v1452, %v1500
        %v1502 = vpop.f32.mrf.mxu0
        %v1503 = vadd.f32 %v1454, %v1502
        %1504 = vmatmul.bf16.gmra.mxu0 %v785
        %v1505 = vpop.f32.mrf.mxu0
        %v1506 = vadd.f32 %v1457, %v1505
        %v1507 = vpop.f32.mrf.mxu0
        %v1508 = vadd.f32 %v1459, %v1507
        %1509 = vmatmul.bf16.gmra.mxu0 %v789
        %v1510 = vpop.f32.mrf.mxu0
        %v1511 = vadd.f32 %v1462, %v1510
        %v1512 = vpop.f32.mrf.mxu0
        %v1513 = vadd.f32 %v1464, %v1512
        %1514 = vmatmul.bf16.gmra.mxu0 %v793
        %v1515 = vpop.f32.mrf.mxu0
        %v1516 = vadd.f32 %v1467, %v1515
        %v1517 = vpop.f32.mrf.mxu0
        %v1518 = vadd.f32 %v1469, %v1517
        %1519 = vmatmul.bf16.gmra.mxu0 %v797
        %v1520 = vpop.f32.mrf.mxu0
        %v1521 = vadd.f32 %v1472, %v1520
        %v1522 = vpop.f32.mrf.mxu0
        %v1523 = vadd.f32 %v1474, %v1522
        %1524 = vmatmul.bf16.gmra.mxu0 %v801
        %v1525 = vpop.f32.mrf.mxu0
        %v1526 = vadd.f32 %v1477, %v1525
        %v1527 = vpop.f32.mrf.mxu0
        %v1528 = vadd.f32 %v1479, %v1527
        %1529 = vdwg.mxu0
        %1530 = vmatpush.bf16.msra.mxu0 %v1122
        %1531 = vmatpush.bf16.msra.mxu0 %v1120
        %1532 = vmatpush.bf16.msra.mxu0 %v1118
        %1533 = vmatpush.bf16.msra.mxu0 %v1116
        %1534 = vmatpush.bf16.msra.mxu0 %v1114
        %1535 = vmatpush.bf16.msra.mxu0 %v1112
        %1536 = vmatpush.bf16.msra.mxu0 %v1110
        %1537 = vmatpush.bf16.msra.mxu0 %v1108
        %1538 = vmatmul.bf16.gmra.mxu0 %v774
        %v1539 = vpop.f32.mrf.mxu0
        %v1540 = vadd.f32 %v1491, %v1539
        %v1541 = vpop.f32.mrf.mxu0
        %v1542 = vadd.f32 %v1493, %v1541
        %1543 = vmatmul.bf16.gmra.mxu0 %v778
        %v1544 = vpop.f32.mrf.mxu0
        %v1545 = vadd.f32 %v1496, %v1544
        %v1546 = vpop.f32.mrf.mxu0
        %v1547 = vadd.f32 %v1498, %v1546
        %1548 = vmatmul.bf16.gmra.mxu0 %v782
        %v1549 = vpop.f32.mrf.mxu0
        %v1550 = vadd.f32 %v1501, %v1549
        %v1551 = vpop.f32.mrf.mxu0
        %v1552 = vadd.f32 %v1503, %v1551
        %1553 = vmatmul.bf16.gmra.mxu0 %v786
        %v1554 = vpop.f32.mrf.mxu0
        %v1555 = vadd.f32 %v1506, %v1554
        %v1556 = vpop.f32.mrf.mxu0
        %v1557 = vadd.f32 %v1508, %v1556
        %1558 = vmatmul.bf16.gmra.mxu0 %v790
        %v1559 = vpop.f32.mrf.mxu0
        %v1560 = vadd.f32 %v1511, %v1559
        %v1561 = vpop.f32.mrf.mxu0
        %v1562 = vadd.f32 %v1513, %v1561
        %1563 = vmatmul.bf16.gmra.mxu0 %v794
        %v1564 = vpop.f32.mrf.mxu0
        %v1565 = vadd.f32 %v1516, %v1564
        %v1566 = vpop.f32.mrf.mxu0
        %v1567 = vadd.f32 %v1518, %v1566
        %1568 = vmatmul.bf16.gmra.mxu0 %v798
        %v1569 = vpop.f32.mrf.mxu0
        %v1570 = vadd.f32 %v1521, %v1569
        %v1571 = vpop.f32.mrf.mxu0
        %v1572 = vadd.f32 %v1523, %v1571
        %1573 = vmatmul.bf16.gmra.mxu0 %v802
        %v1574 = vpop.f32.mrf.mxu0
        %v1575 = vadd.f32 %v1526, %v1574
        %v1576 = vpop.f32.mrf.mxu0
        %v1577 = vadd.f32 %v1528, %v1576
        %1578 = vdwg.mxu0
        %v1579 = vadd.f32 %v1344, %v1540
        %v1580 = vadd.f32 %v1346, %v1542
        %v1581 = vadd.f32 %v1349, %v1545
        %v1582 = vadd.f32 %v1351, %v1547
        %v1583 = vadd.f32 %v1354, %v1550
        %v1584 = vadd.f32 %v1356, %v1552
        %v1585 = vadd.f32 %v1359, %v1555
        %v1586 = vadd.f32 %v1361, %v1557
        %v1587 = vadd.f32 %v1364, %v1560
        %v1588 = vadd.f32 %v1366, %v1562
        %v1589 = vadd.f32 %v1369, %v1565
        %v1590 = vadd.f32 %v1371, %v1567
        %v1591 = vadd.f32 %v1374, %v1570
        %v1592 = vadd.f32 %v1376, %v1572
        %v1593 = vadd.f32 %v1379, %v1575
        %v1594 = vadd.f32 %v1381, %v1577
        %1595 = vst [vmem:[%s297] sm:$0xff] %v1579
        %1596 = vst [vmem:[%s297 + $0x20] sm:$0xff] %v1580
        %1597 = vst [vmem:[%s297 + $0x40] sm:$0xff] %v1581
        %1598 = vst [vmem:[%s297 + $0x60] sm:$0xff] %v1582
        %1599 = vst [vmem:[%s297 + $0x80] sm:$0xff] %v1583
        %1600 = vst [vmem:[%s297 + $0xa0] sm:$0xff] %v1584
        %1601 = vst [vmem:[%s297 + $0xc0] sm:$0xff] %v1585
        %1602 = vst [vmem:[%s297 + $0xe0] sm:$0xff] %v1586
        %1603 = vst [vmem:[%s297 + $0x100] sm:$0xff] %v1587
        %1604 = vst [vmem:[%s297 + $0x120] sm:$0xff] %v1588
        %1605 = vst [vmem:[%s297 + $0x140] sm:$0xff] %v1589
        %1606 = vst [vmem:[%s297 + $0x160] sm:$0xff] %v1590
        %1607 = vst [vmem:[%s297 + $0x180] sm:$0xff] %v1591
        %1608 = vst [vmem:[%s297 + $0x1a0] sm:$0xff] %v1592
        %1609 = vst [vmem:[%s297 + $0x1c0] sm:$0xff] %v1593
        %1610 = vst [vmem:[%s297 + $0x1e0] sm:$0xff] %v1594
        %v1611 = vld [vmem:[%s306] sm:$0xff]
        %v1612 = vld [vmem:[%s306 + $0x8] sm:$0xff]
        %v1613 = vld [vmem:[%s306 + $0x10] sm:$0xff]
        %v1614 = vld [vmem:[%s306 + $0x18] sm:$0xff]
        %v1615 = vld [vmem:[%s306 + $0x20] sm:$0xff]
        %v1616 = vld [vmem:[%s306 + $0x28] sm:$0xff]
        %v1617 = vld [vmem:[%s306 + $0x30] sm:$0xff]
        %v1618 = vld [vmem:[%s306 + $0x38] sm:$0xff]
        %v1619 = vld [vmem:[%s306 + $0x40] sm:$0xff]
        %v1620 = vld [vmem:[%s306 + $0x48] sm:$0xff]
        %v1621 = vld [vmem:[%s306 + $0x50] sm:$0xff]
        %v1622 = vld [vmem:[%s306 + $0x58] sm:$0xff]
        %v1623 = vld [vmem:[%s306 + $0x60] sm:$0xff]
        %v1624 = vld [vmem:[%s306 + $0x68] sm:$0xff]
        %v1625 = vld [vmem:[%s306 + $0x70] sm:$0xff]
        %v1626 = vld [vmem:[%s306 + $0x78] sm:$0xff]
        %v1627 = vadd.s32 %v1611, 132
        %v1628 = vadd.s32 %v1612, 132
        %v1629 = vadd.s32 %v1613, 132
        %v1630 = vadd.s32 %v1614, 132
        %v1631 = vadd.s32 %v1615, 132
        %v1632 = vadd.s32 %v1616, 132
        %v1633 = vadd.s32 %v1617, 132
        %v1634 = vadd.s32 %v1618, 132
        %v1635 = vadd.s32 %v1619, 132
        %v1636 = vadd.s32 %v1620, 132
        %v1637 = vadd.s32 %v1621, 132
        %v1638 = vadd.s32 %v1622, 132
        %v1639 = vadd.s32 %v1623, 132
        %v1640 = vadd.s32 %v1624, 132
        %v1641 = vadd.s32 %v1625, 132
        %v1642 = vadd.s32 %v1626, 132
        %1643 = vset.pattern.permute.xlu0 2
        %1644 = vperm.xlu0 %1643, %v1611
        %v1645 = vpop.permute.xlu0 %1644
        %1646 = vset.pattern.permute.xlu0 2
        %1647 = vperm.xlu0 %1646, %v1612
        %v1648 = vpop.permute.xlu0 %1647
        %1649 = vset.pattern.permute.xlu0 2
        %1650 = vperm.xlu0 %1649, %v1613
        %v1651 = vpop.permute.xlu0 %1650
        %1652 = vset.pattern.permute.xlu0 2
        %1653 = vperm.xlu0 %1652, %v1614
        %v1654 = vpop.permute.xlu0 %1653
        %1655 = vset.pattern.permute.xlu0 2
        %1656 = vperm.xlu0 %1655, %v1615
        %v1657 = vpop.permute.xlu0 %1656
        %1658 = vset.pattern.permute.xlu0 2
        %1659 = vperm.xlu0 %1658, %v1616
        %v1660 = vpop.permute.xlu0 %1659
        %1661 = vset.pattern.permute.xlu0 2
        %1662 = vperm.xlu0 %1661, %v1617
        %v1663 = vpop.permute.xlu0 %1662
        %1664 = vset.pattern.permute.xlu0 2
        %1665 = vperm.xlu0 %1664, %v1618
        %v1666 = vpop.permute.xlu0 %1665
        %1667 = vset.pattern.permute.xlu0 2
        %1668 = vperm.xlu0 %1667, %v1619
        %v1669 = vpop.permute.xlu0 %1668
        %1670 = vset.pattern.permute.xlu0 2
        %1671 = vperm.xlu0 %1670, %v1620
        %v1672 = vpop.permute.xlu0 %1671
        %1673 = vset.pattern.permute.xlu0 2
        %1674 = vperm.xlu0 %1673, %v1621
        %v1675 = vpop.permute.xlu0 %1674
        %1676 = vset.pattern.permute.xlu0 2
        %1677 = vperm.xlu0 %1676, %v1622
        %v1678 = vpop.permute.xlu0 %1677
        %1679 = vset.pattern.permute.xlu0 2
        %1680 = vperm.xlu0 %1679, %v1623
        %v1681 = vpop.permute.xlu0 %1680
        %1682 = vset.pattern.permute.xlu0 2
        %1683 = vperm.xlu0 %1682, %v1624
        %v1684 = vpop.permute.xlu0 %1683
        %1685 = vset.pattern.permute.xlu0 2
        %1686 = vperm.xlu0 %1685, %v1625
        %v1687 = vpop.permute.xlu0 %1686
        %1688 = vset.pattern.permute.xlu0 2
        %1689 = vperm.xlu0 %1688, %v1626
        %v1690 = vpop.permute.xlu0 %1689
        %vm1691 = vcmp.eq.s32.totalorder %v351, %v1645
        %vm1692 = vcmp.eq.s32.totalorder %v352, %v1645
        %vm1693 = vcmp.eq.s32.totalorder %v353, %v1645
        %vm1694 = vcmp.eq.s32.totalorder %v354, %v1645
        %vm1695 = vcmp.eq.s32.totalorder %v351, %v1648
        %vm1696 = vcmp.eq.s32.totalorder %v352, %v1648
        %vm1697 = vcmp.eq.s32.totalorder %v353, %v1648
        %vm1698 = vcmp.eq.s32.totalorder %v354, %v1648
        %vm1699 = vcmp.eq.s32.totalorder %v351, %v1651
        %vm1700 = vcmp.eq.s32.totalorder %v352, %v1651
        %vm1701 = vcmp.eq.s32.totalorder %v353, %v1651
        %vm1702 = vcmp.eq.s32.totalorder %v354, %v1651
        %vm1703 = vcmp.eq.s32.totalorder %v351, %v1654
        %vm1704 = vcmp.eq.s32.totalorder %v352, %v1654
        %vm1705 = vcmp.eq.s32.totalorder %v353, %v1654
        %vm1706 = vcmp.eq.s32.totalorder %v354, %v1654
        %vm1707 = vcmp.eq.s32.totalorder %v351, %v1657
        %vm1708 = vcmp.eq.s32.totalorder %v352, %v1657
        %vm1709 = vcmp.eq.s32.totalorder %v353, %v1657
        %vm1710 = vcmp.eq.s32.totalorder %v354, %v1657
        %vm1711 = vcmp.eq.s32.totalorder %v351, %v1660
        %vm1712 = vcmp.eq.s32.totalorder %v352, %v1660
        %vm1713 = vcmp.eq.s32.totalorder %v353, %v1660
        %vm1714 = vcmp.eq.s32.totalorder %v354, %v1660
        %vm1715 = vcmp.eq.s32.totalorder %v351, %v1663
        %vm1716 = vcmp.eq.s32.totalorder %v352, %v1663
        %vm1717 = vcmp.eq.s32.totalorder %v353, %v1663
        %vm1718 = vcmp.eq.s32.totalorder %v354, %v1663
        %vm1719 = vcmp.eq.s32.totalorder %v351, %v1666
        %vm1720 = vcmp.eq.s32.totalorder %v352, %v1666
        %vm1721 = vcmp.eq.s32.totalorder %v353, %v1666
        %vm1722 = vcmp.eq.s32.totalorder %v354, %v1666
        %vm1723 = vcmp.eq.s32.totalorder %v351, %v1669
        %vm1724 = vcmp.eq.s32.totalorder %v352, %v1669
        %vm1725 = vcmp.eq.s32.totalorder %v353, %v1669
        %vm1726 = vcmp.eq.s32.totalorder %v354, %v1669
        %vm1727 = vcmp.eq.s32.totalorder %v351, %v1672
        %vm1728 = vcmp.eq.s32.totalorder %v352, %v1672
        %vm1729 = vcmp.eq.s32.totalorder %v353, %v1672
        %vm1730 = vcmp.eq.s32.totalorder %v354, %v1672
        %vm1731 = vcmp.eq.s32.totalorder %v351, %v1675
        %vm1732 = vcmp.eq.s32.totalorder %v352, %v1675
        %vm1733 = vcmp.eq.s32.totalorder %v353, %v1675
        %vm1734 = vcmp.eq.s32.totalorder %v354, %v1675
        %vm1735 = vcmp.eq.s32.totalorder %v351, %v1678
        %vm1736 = vcmp.eq.s32.totalorder %v352, %v1678
        %vm1737 = vcmp.eq.s32.totalorder %v353, %v1678
        %vm1738 = vcmp.eq.s32.totalorder %v354, %v1678
        %vm1739 = vcmp.eq.s32.totalorder %v351, %v1681
        %vm1740 = vcmp.eq.s32.totalorder %v352, %v1681
        %vm1741 = vcmp.eq.s32.totalorder %v353, %v1681
        %vm1742 = vcmp.eq.s32.totalorder %v354, %v1681
        %vm1743 = vcmp.eq.s32.totalorder %v351, %v1684
        %vm1744 = vcmp.eq.s32.totalorder %v352, %v1684
        %vm1745 = vcmp.eq.s32.totalorder %v353, %v1684
        %vm1746 = vcmp.eq.s32.totalorder %v354, %v1684
        %vm1747 = vcmp.eq.s32.totalorder %v351, %v1687
        %vm1748 = vcmp.eq.s32.totalorder %v352, %v1687
        %vm1749 = vcmp.eq.s32.totalorder %v353, %v1687
        %vm1750 = vcmp.eq.s32.totalorder %v354, %v1687
        %vm1751 = vcmp.eq.s32.totalorder %v351, %v1690
        %vm1752 = vcmp.eq.s32.totalorder %v352, %v1690
        %vm1753 = vcmp.eq.s32.totalorder %v353, %v1690
        %vm1754 = vcmp.eq.s32.totalorder %v354, %v1690
        %1755 = vset.pattern.permute.xlu0 3
        %1756 = vperm.xlu0 %1755, %v1627
        %v1757 = vpop.permute.xlu0 %1756
        %1758 = vset.pattern.permute.xlu0 3
        %1759 = vperm.xlu0 %1758, %v1628
        %v1760 = vpop.permute.xlu0 %1759
        %1761 = vset.pattern.permute.xlu0 3
        %1762 = vperm.xlu0 %1761, %v1629
        %v1763 = vpop.permute.xlu0 %1762
        %1764 = vset.pattern.permute.xlu0 3
        %1765 = vperm.xlu0 %1764, %v1630
        %v1766 = vpop.permute.xlu0 %1765
        %1767 = vset.pattern.permute.xlu0 3
        %1768 = vperm.xlu0 %1767, %v1631
        %v1769 = vpop.permute.xlu0 %1768
        %1770 = vset.pattern.permute.xlu0 3
        %1771 = vperm.xlu0 %1770, %v1632
        %v1772 = vpop.permute.xlu0 %1771
        %1773 = vset.pattern.permute.xlu0 3
        %1774 = vperm.xlu0 %1773, %v1633
        %v1775 = vpop.permute.xlu0 %1774
        %1776 = vset.pattern.permute.xlu0 3
        %1777 = vperm.xlu0 %1776, %v1634
        %v1778 = vpop.permute.xlu0 %1777
        %1779 = vset.pattern.permute.xlu0 3
        %1780 = vperm.xlu0 %1779, %v1635
        %v1781 = vpop.permute.xlu0 %1780
        %1782 = vset.pattern.permute.xlu0 3
        %1783 = vperm.xlu0 %1782, %v1636
        %v1784 = vpop.permute.xlu0 %1783
        %1785 = vset.pattern.permute.xlu0 3
        %1786 = vperm.xlu0 %1785, %v1637
        %v1787 = vpop.permute.xlu0 %1786
        %1788 = vset.pattern.permute.xlu0 3
        %1789 = vperm.xlu0 %1788, %v1638
        %v1790 = vpop.permute.xlu0 %1789
        %1791 = vset.pattern.permute.xlu0 3
        %1792 = vperm.xlu0 %1791, %v1639
        %v1793 = vpop.permute.xlu0 %1792
        %1794 = vset.pattern.permute.xlu0 3
        %1795 = vperm.xlu0 %1794, %v1640
        %v1796 = vpop.permute.xlu0 %1795
        %1797 = vset.pattern.permute.xlu0 3
        %1798 = vperm.xlu0 %1797, %v1641
        %v1799 = vpop.permute.xlu0 %1798
        %1800 = vset.pattern.permute.xlu0 3
        %1801 = vperm.xlu0 %1800, %v1642
        %v1802 = vpop.permute.xlu0 %1801
        %vm1803 = vcmp.eq.s32.totalorder %v351, %v1757
        %vm1804 = vcmp.eq.s32.totalorder %v352, %v1757
        %vm1805 = vcmp.eq.s32.totalorder %v353, %v1757
        %vm1806 = vcmp.eq.s32.totalorder %v354, %v1757
        %vm1807 = vcmp.eq.s32.totalorder %v351, %v1760
        %vm1808 = vcmp.eq.s32.totalorder %v352, %v1760
        %vm1809 = vcmp.eq.s32.totalorder %v353, %v1760
        %vm1810 = vcmp.eq.s32.totalorder %v354, %v1760
        %vm1811 = vcmp.eq.s32.totalorder %v351, %v1763
        %vm1812 = vcmp.eq.s32.totalorder %v352, %v1763
        %vm1813 = vcmp.eq.s32.totalorder %v353, %v1763
        %vm1814 = vcmp.eq.s32.totalorder %v354, %v1763
        %vm1815 = vcmp.eq.s32.totalorder %v351, %v1766
        %vm1816 = vcmp.eq.s32.totalorder %v352, %v1766
        %vm1817 = vcmp.eq.s32.totalorder %v353, %v1766
        %vm1818 = vcmp.eq.s32.totalorder %v354, %v1766
        %vm1819 = vcmp.eq.s32.totalorder %v351, %v1769
        %vm1820 = vcmp.eq.s32.totalorder %v352, %v1769
        %vm1821 = vcmp.eq.s32.totalorder %v353, %v1769
        %vm1822 = vcmp.eq.s32.totalorder %v354, %v1769
        %vm1823 = vcmp.eq.s32.totalorder %v351, %v1772
        %vm1824 = vcmp.eq.s32.totalorder %v352, %v1772
        %vm1825 = vcmp.eq.s32.totalorder %v353, %v1772
        %vm1826 = vcmp.eq.s32.totalorder %v354, %v1772
        %vm1827 = vcmp.eq.s32.totalorder %v351, %v1775
        %vm1828 = vcmp.eq.s32.totalorder %v352, %v1775
        %vm1829 = vcmp.eq.s32.totalorder %v353, %v1775
        %vm1830 = vcmp.eq.s32.totalorder %v354, %v1775
        %vm1831 = vcmp.eq.s32.totalorder %v351, %v1778
        %vm1832 = vcmp.eq.s32.totalorder %v352, %v1778
        %vm1833 = vcmp.eq.s32.totalorder %v353, %v1778
        %vm1834 = vcmp.eq.s32.totalorder %v354, %v1778
        %vm1835 = vcmp.eq.s32.totalorder %v351, %v1781
        %vm1836 = vcmp.eq.s32.totalorder %v352, %v1781
        %vm1837 = vcmp.eq.s32.totalorder %v353, %v1781
        %vm1838 = vcmp.eq.s32.totalorder %v354, %v1781
        %vm1839 = vcmp.eq.s32.totalorder %v351, %v1784
        %vm1840 = vcmp.eq.s32.totalorder %v352, %v1784
        %vm1841 = vcmp.eq.s32.totalorder %v353, %v1784
        %vm1842 = vcmp.eq.s32.totalorder %v354, %v1784
        %vm1843 = vcmp.eq.s32.totalorder %v351, %v1787
        %vm1844 = vcmp.eq.s32.totalorder %v352, %v1787
        %vm1845 = vcmp.eq.s32.totalorder %v353, %v1787
        %vm1846 = vcmp.eq.s32.totalorder %v354, %v1787
        %vm1847 = vcmp.eq.s32.totalorder %v351, %v1790
        %vm1848 = vcmp.eq.s32.totalorder %v352, %v1790
        %vm1849 = vcmp.eq.s32.totalorder %v353, %v1790
        %vm1850 = vcmp.eq.s32.totalorder %v354, %v1790
        %vm1851 = vcmp.eq.s32.totalorder %v351, %v1793
        %vm1852 = vcmp.eq.s32.totalorder %v352, %v1793
        %vm1853 = vcmp.eq.s32.totalorder %v353, %v1793
        %vm1854 = vcmp.eq.s32.totalorder %v354, %v1793
        %vm1855 = vcmp.eq.s32.totalorder %v351, %v1796
        %vm1856 = vcmp.eq.s32.totalorder %v352, %v1796
        %vm1857 = vcmp.eq.s32.totalorder %v353, %v1796
        %vm1858 = vcmp.eq.s32.totalorder %v354, %v1796
        %vm1859 = vcmp.eq.s32.totalorder %v351, %v1799
        %vm1860 = vcmp.eq.s32.totalorder %v352, %v1799
        %vm1861 = vcmp.eq.s32.totalorder %v353, %v1799
        %vm1862 = vcmp.eq.s32.totalorder %v354, %v1799
        %vm1863 = vcmp.eq.s32.totalorder %v351, %v1802
        %vm1864 = vcmp.eq.s32.totalorder %v352, %v1802
        %vm1865 = vcmp.eq.s32.totalorder %v353, %v1802
        %vm1866 = vcmp.eq.s32.totalorder %v354, %v1802
        %vm1867 = vmor %vm1691, %vm1803
        %vm1868 = vmor %vm1692, %vm1804
        %vm1869 = vmor %vm1693, %vm1805
        %vm1870 = vmor %vm1694, %vm1806
        %vm1871 = vmor %vm1695, %vm1807
        %vm1872 = vmor %vm1696, %vm1808
        %vm1873 = vmor %vm1697, %vm1809
        %vm1874 = vmor %vm1698, %vm1810
        %vm1875 = vmor %vm1699, %vm1811
        %vm1876 = vmor %vm1700, %vm1812
        %vm1877 = vmor %vm1701, %vm1813
        %vm1878 = vmor %vm1702, %vm1814
        %vm1879 = vmor %vm1703, %vm1815
        %vm1880 = vmor %vm1704, %vm1816
        %vm1881 = vmor %vm1705, %vm1817
        %vm1882 = vmor %vm1706, %vm1818
        %vm1883 = vmor %vm1707, %vm1819
        %vm1884 = vmor %vm1708, %vm1820
        %vm1885 = vmor %vm1709, %vm1821
        %vm1886 = vmor %vm1710, %vm1822
        %vm1887 = vmor %vm1711, %vm1823
        %vm1888 = vmor %vm1712, %vm1824
        %vm1889 = vmor %vm1713, %vm1825
        %vm1890 = vmor %vm1714, %vm1826
        %vm1891 = vmor %vm1715, %vm1827
        %vm1892 = vmor %vm1716, %vm1828
        %vm1893 = vmor %vm1717, %vm1829
        %vm1894 = vmor %vm1718, %vm1830
        %vm1895 = vmor %vm1719, %vm1831
        %vm1896 = vmor %vm1720, %vm1832
        %vm1897 = vmor %vm1721, %vm1833
        %vm1898 = vmor %vm1722, %vm1834
        %vm1899 = vmor %vm1723, %vm1835
        %vm1900 = vmor %vm1724, %vm1836
        %vm1901 = vmor %vm1725, %vm1837
        %vm1902 = vmor %vm1726, %vm1838
        %vm1903 = vmor %vm1727, %vm1839
        %vm1904 = vmor %vm1728, %vm1840
        %vm1905 = vmor %vm1729, %vm1841
        %vm1906 = vmor %vm1730, %vm1842
        %vm1907 = vmor %vm1731, %vm1843
        %vm1908 = vmor %vm1732, %vm1844
        %vm1909 = vmor %vm1733, %vm1845
        %vm1910 = vmor %vm1734, %vm1846
        %vm1911 = vmor %vm1735, %vm1847
        %vm1912 = vmor %vm1736, %vm1848
        %vm1913 = vmor %vm1737, %vm1849
        %vm1914 = vmor %vm1738, %vm1850
        %vm1915 = vmor %vm1739, %vm1851
        %vm1916 = vmor %vm1740, %vm1852
        %vm1917 = vmor %vm1741, %vm1853
        %vm1918 = vmor %vm1742, %vm1854
        %vm1919 = vmor %vm1743, %vm1855
        %vm1920 = vmor %vm1744, %vm1856
        %vm1921 = vmor %vm1745, %vm1857
        %vm1922 = vmor %vm1746, %vm1858
        %vm1923 = vmor %vm1747, %vm1859
        %vm1924 = vmor %vm1748, %vm1860
        %vm1925 = vmor %vm1749, %vm1861
        %vm1926 = vmor %vm1750, %vm1862
        %vm1927 = vmor %vm1751, %vm1863
        %vm1928 = vmor %vm1752, %vm1864
        %vm1929 = vmor %vm1753, %vm1865
        %vm1930 = vmor %vm1754, %vm1866
        %v1931 = vsel %vm1867, 1, 0
        %v1932 = vsel %vm1868, 1, 0
        %v1933 = vsel %vm1869, 1, 0
        %v1934 = vsel %vm1870, 1, 0
        %v1935 = vsel %vm1871, 1, 0
        %v1936 = vsel %vm1872, 1, 0
        %v1937 = vsel %vm1873, 1, 0
        %v1938 = vsel %vm1874, 1, 0
        %v1939 = vsel %vm1875, 1, 0
        %v1940 = vsel %vm1876, 1, 0
        %v1941 = vsel %vm1877, 1, 0
        %v1942 = vsel %vm1878, 1, 0
        %v1943 = vsel %vm1879, 1, 0
        %v1944 = vsel %vm1880, 1, 0
        %v1945 = vsel %vm1881, 1, 0
        %v1946 = vsel %vm1882, 1, 0
        %v1947 = vsel %vm1883, 1, 0
        %v1948 = vsel %vm1884, 1, 0
        %v1949 = vsel %vm1885, 1, 0
        %v1950 = vsel %vm1886, 1, 0
        %v1951 = vsel %vm1887, 1, 0
        %v1952 = vsel %vm1888, 1, 0
        %v1953 = vsel %vm1889, 1, 0
        %v1954 = vsel %vm1890, 1, 0
        %v1955 = vsel %vm1891, 1, 0
        %v1956 = vsel %vm1892, 1, 0
        %v1957 = vsel %vm1893, 1, 0
        %v1958 = vsel %vm1894, 1, 0
        %v1959 = vsel %vm1895, 1, 0
        %v1960 = vsel %vm1896, 1, 0
        %v1961 = vsel %vm1897, 1, 0
        %v1962 = vsel %vm1898, 1, 0
        %v1963 = vsel %vm1899, 1, 0
        %v1964 = vsel %vm1900, 1, 0
        %v1965 = vsel %vm1901, 1, 0
        %v1966 = vsel %vm1902, 1, 0
        %v1967 = vsel %vm1903, 1, 0
        %v1968 = vsel %vm1904, 1, 0
        %v1969 = vsel %vm1905, 1, 0
        %v1970 = vsel %vm1906, 1, 0
        %v1971 = vsel %vm1907, 1, 0
        %v1972 = vsel %vm1908, 1, 0
        %v1973 = vsel %vm1909, 1, 0
        %v1974 = vsel %vm1910, 1, 0
        %v1975 = vsel %vm1911, 1, 0
        %v1976 = vsel %vm1912, 1, 0
        %v1977 = vsel %vm1913, 1, 0
        %v1978 = vsel %vm1914, 1, 0
        %v1979 = vsel %vm1915, 1, 0
        %v1980 = vsel %vm1916, 1, 0
        %v1981 = vsel %vm1917, 1, 0
        %v1982 = vsel %vm1918, 1, 0
        %v1983 = vsel %vm1919, 1, 0
        %v1984 = vsel %vm1920, 1, 0
        %v1985 = vsel %vm1921, 1, 0
        %v1986 = vsel %vm1922, 1, 0
        %v1987 = vsel %vm1923, 1, 0
        %v1988 = vsel %vm1924, 1, 0
        %v1989 = vsel %vm1925, 1, 0
        %v1990 = vsel %vm1926, 1, 0
        %v1991 = vsel %vm1927, 1, 0
        %v1992 = vsel %vm1928, 1, 0
        %v1993 = vsel %vm1929, 1, 0
        %v1994 = vsel %vm1930, 1, 0
        %v1995 = vcvt.s32.f32 %v1931
        %v1996 = vcvt.s32.f32 %v1932
        %v1997 = vcvt.s32.f32 %v1933
        %v1998 = vcvt.s32.f32 %v1934
        %v1999 = vcvt.s32.f32 %v1935
        %v2000 = vcvt.s32.f32 %v1936
        %v2001 = vcvt.s32.f32 %v1937
        %v2002 = vcvt.s32.f32 %v1938
        %v2003 = vcvt.s32.f32 %v1939
        %v2004 = vcvt.s32.f32 %v1940
        %v2005 = vcvt.s32.f32 %v1941
        %v2006 = vcvt.s32.f32 %v1942
        %v2007 = vcvt.s32.f32 %v1943
        %v2008 = vcvt.s32.f32 %v1944
        %v2009 = vcvt.s32.f32 %v1945
        %v2010 = vcvt.s32.f32 %v1946
        %v2011 = vcvt.s32.f32 %v1947
        %v2012 = vcvt.s32.f32 %v1948
        %v2013 = vcvt.s32.f32 %v1949
        %v2014 = vcvt.s32.f32 %v1950
        %v2015 = vcvt.s32.f32 %v1951
        %v2016 = vcvt.s32.f32 %v1952
        %v2017 = vcvt.s32.f32 %v1953
        %v2018 = vcvt.s32.f32 %v1954
        %v2019 = vcvt.s32.f32 %v1955
        %v2020 = vcvt.s32.f32 %v1956
        %v2021 = vcvt.s32.f32 %v1957
        %v2022 = vcvt.s32.f32 %v1958
        %v2023 = vcvt.s32.f32 %v1959
        %v2024 = vcvt.s32.f32 %v1960
        %v2025 = vcvt.s32.f32 %v1961
        %v2026 = vcvt.s32.f32 %v1962
        %v2027 = vcvt.s32.f32 %v1963
        %v2028 = vcvt.s32.f32 %v1964
        %v2029 = vcvt.s32.f32 %v1965
        %v2030 = vcvt.s32.f32 %v1966
        %v2031 = vcvt.s32.f32 %v1967
        %v2032 = vcvt.s32.f32 %v1968
        %v2033 = vcvt.s32.f32 %v1969
        %v2034 = vcvt.s32.f32 %v1970
        %v2035 = vcvt.s32.f32 %v1971
        %v2036 = vcvt.s32.f32 %v1972
        %v2037 = vcvt.s32.f32 %v1973
        %v2038 = vcvt.s32.f32 %v1974
        %v2039 = vcvt.s32.f32 %v1975
        %v2040 = vcvt.s32.f32 %v1976
        %v2041 = vcvt.s32.f32 %v1977
        %v2042 = vcvt.s32.f32 %v1978
        %v2043 = vcvt.s32.f32 %v1979
        %v2044 = vcvt.s32.f32 %v1980
        %v2045 = vcvt.s32.f32 %v1981
        %v2046 = vcvt.s32.f32 %v1982
        %v2047 = vcvt.s32.f32 %v1983
        %v2048 = vcvt.s32.f32 %v1984
        %v2049 = vcvt.s32.f32 %v1985
        %v2050 = vcvt.s32.f32 %v1986
        %v2051 = vcvt.s32.f32 %v1987
        %v2052 = vcvt.s32.f32 %v1988
        %v2053 = vcvt.s32.f32 %v1989
        %v2054 = vcvt.s32.f32 %v1990
        %v2055 = vcvt.s32.f32 %v1991
        %v2056 = vcvt.s32.f32 %v1992
        %v2057 = vcvt.s32.f32 %v1993
        %v2058 = vcvt.s32.f32 %v1994
        %v2059 = vpack.c.bf16 %v1999, %v1995
        %v2060 = vpack.c.bf16 %v2000, %v1996
        %v2061 = vpack.c.bf16 %v2001, %v1997
        %v2062 = vpack.c.bf16 %v2002, %v1998
        %v2063 = vpack.c.bf16 %v2007, %v2003
        %v2064 = vpack.c.bf16 %v2008, %v2004
        %v2065 = vpack.c.bf16 %v2009, %v2005
        %v2066 = vpack.c.bf16 %v2010, %v2006
        %v2067 = vpack.c.bf16 %v2015, %v2011
        %v2068 = vpack.c.bf16 %v2016, %v2012
        %v2069 = vpack.c.bf16 %v2017, %v2013
        %v2070 = vpack.c.bf16 %v2018, %v2014
        %v2071 = vpack.c.bf16 %v2023, %v2019
        %v2072 = vpack.c.bf16 %v2024, %v2020
        %v2073 = vpack.c.bf16 %v2025, %v2021
        %v2074 = vpack.c.bf16 %v2026, %v2022
        %v2075 = vpack.c.bf16 %v2031, %v2027
        %v2076 = vpack.c.bf16 %v2032, %v2028
        %v2077 = vpack.c.bf16 %v2033, %v2029
        %v2078 = vpack.c.bf16 %v2034, %v2030
        %v2079 = vpack.c.bf16 %v2039, %v2035
        %v2080 = vpack.c.bf16 %v2040, %v2036
        %v2081 = vpack.c.bf16 %v2041, %v2037
        %v2082 = vpack.c.bf16 %v2042, %v2038
        %v2083 = vpack.c.bf16 %v2047, %v2043
        %v2084 = vpack.c.bf16 %v2048, %v2044
        %v2085 = vpack.c.bf16 %v2049, %v2045
        %v2086 = vpack.c.bf16 %v2050, %v2046
        %v2087 = vpack.c.bf16 %v2055, %v2051
        %v2088 = vpack.c.bf16 %v2056, %v2052
        %v2089 = vpack.c.bf16 %v2057, %v2053
        %v2090 = vpack.c.bf16 %v2058, %v2054
        %v2091 = vld [vmem:[#allocation5] sm:$0xff]
        %v2092 = vld [vmem:[#allocation5 + $0x8] sm:$0xff]
        %v2093 = vld [vmem:[#allocation5 + $0x10] sm:$0xff]
        %v2094 = vld [vmem:[#allocation5 + $0x18] sm:$0xff]
        %v2095 = vld [vmem:[#allocation5 + $0x20] sm:$0xff]
        %v2096 = vld [vmem:[#allocation5 + $0x28] sm:$0xff]
        %v2097 = vld [vmem:[#allocation5 + $0x30] sm:$0xff]
        %v2098 = vld [vmem:[#allocation5 + $0x38] sm:$0xff]
        %v2099 = vld [vmem:[#allocation5 + $0x40] sm:$0xff]
        %v2100 = vld [vmem:[#allocation5 + $0x48] sm:$0xff]
        %v2101 = vld [vmem:[#allocation5 + $0x50] sm:$0xff]
        %v2102 = vld [vmem:[#allocation5 + $0x58] sm:$0xff]
        %v2103 = vld [vmem:[#allocation5 + $0x60] sm:$0xff]
        %v2104 = vld [vmem:[#allocation5 + $0x68] sm:$0xff]
        %v2105 = vld [vmem:[#allocation5 + $0x70] sm:$0xff]
        %v2106 = vld [vmem:[#allocation5 + $0x78] sm:$0xff]
        %v2107 = vld [vmem:[#allocation5 + $0x80] sm:$0xff]
        %v2108 = vld [vmem:[#allocation5 + $0x88] sm:$0xff]
        %v2109 = vld [vmem:[#allocation5 + $0x90] sm:$0xff]
        %v2110 = vld [vmem:[#allocation5 + $0x98] sm:$0xff]
        %v2111 = vld [vmem:[#allocation5 + $0xa0] sm:$0xff]
        %v2112 = vld [vmem:[#allocation5 + $0xa8] sm:$0xff]
        %v2113 = vld [vmem:[#allocation5 + $0xb0] sm:$0xff]
        %v2114 = vld [vmem:[#allocation5 + $0xb8] sm:$0xff]
        %v2115 = vld [vmem:[#allocation5 + $0xc0] sm:$0xff]
        %v2116 = vld [vmem:[#allocation5 + $0xc8] sm:$0xff]
        %v2117 = vld [vmem:[#allocation5 + $0xd0] sm:$0xff]
        %v2118 = vld [vmem:[#allocation5 + $0xd8] sm:$0xff]
        %v2119 = vld [vmem:[#allocation5 + $0xe0] sm:$0xff]
        %v2120 = vld [vmem:[#allocation5 + $0xe8] sm:$0xff]
        %v2121 = vld [vmem:[#allocation5 + $0xf0] sm:$0xff]
        %v2122 = vld [vmem:[#allocation5 + $0xf8] sm:$0xff]
        %v2123 = vld [vmem:[#allocation5 + $0x100] sm:$0xff]
        %v2124 = vld [vmem:[#allocation5 + $0x108] sm:$0xff]
        %v2125 = vld [vmem:[#allocation5 + $0x110] sm:$0xff]
        %v2126 = vld [vmem:[#allocation5 + $0x118] sm:$0xff]
        %v2127 = vld [vmem:[#allocation5 + $0x120] sm:$0xff]
        %v2128 = vld [vmem:[#allocation5 + $0x128] sm:$0xff]
        %v2129 = vld [vmem:[#allocation5 + $0x130] sm:$0xff]
        %v2130 = vld [vmem:[#allocation5 + $0x138] sm:$0xff]
        %v2131 = vld [vmem:[#allocation5 + $0x140] sm:$0xff]
        %v2132 = vld [vmem:[#allocation5 + $0x148] sm:$0xff]
        %v2133 = vld [vmem:[#allocation5 + $0x150] sm:$0xff]
        %v2134 = vld [vmem:[#allocation5 + $0x158] sm:$0xff]
        %v2135 = vld [vmem:[#allocation5 + $0x160] sm:$0xff]
        %v2136 = vld [vmem:[#allocation5 + $0x168] sm:$0xff]
        %v2137 = vld [vmem:[#allocation5 + $0x170] sm:$0xff]
        %v2138 = vld [vmem:[#allocation5 + $0x178] sm:$0xff]
        %v2139 = vld [vmem:[#allocation5 + $0x180] sm:$0xff]
        %v2140 = vld [vmem:[#allocation5 + $0x188] sm:$0xff]
        %v2141 = vld [vmem:[#allocation5 + $0x190] sm:$0xff]
        %v2142 = vld [vmem:[#allocation5 + $0x198] sm:$0xff]
        %v2143 = vld [vmem:[#allocation5 + $0x1a0] sm:$0xff]
        %v2144 = vld [vmem:[#allocation5 + $0x1a8] sm:$0xff]
        %v2145 = vld [vmem:[#allocation5 + $0x1b0] sm:$0xff]
        %v2146 = vld [vmem:[#allocation5 + $0x1b8] sm:$0xff]
        %v2147 = vld [vmem:[#allocation5 + $0x1c0] sm:$0xff]
        %v2148 = vld [vmem:[#allocation5 + $0x1c8] sm:$0xff]
        %v2149 = vld [vmem:[#allocation5 + $0x1d0] sm:$0xff]
        %v2150 = vld [vmem:[#allocation5 + $0x1d8] sm:$0xff]
        %v2151 = vld [vmem:[#allocation5 + $0x1e0] sm:$0xff]
        %v2152 = vld [vmem:[#allocation5 + $0x1e8] sm:$0xff]
        %v2153 = vld [vmem:[#allocation5 + $0x1f0] sm:$0xff]
        %v2154 = vld [vmem:[#allocation5 + $0x1f8] sm:$0xff]
        %v2219 = vunpack.c.l.b16 %v2091
        %v2220 = vunpack.c.h.b16 %v2091
        %v2221 = vunpack.c.l.b16 %v2092
        %v2222 = vunpack.c.h.b16 %v2092
        %v2223 = vunpack.c.l.b16 %v2093
        %v2224 = vunpack.c.h.b16 %v2093
        %v2225 = vunpack.c.l.b16 %v2094
        %v2226 = vunpack.c.h.b16 %v2094
        %v2227 = vunpack.c.l.b16 %v2095
        %v2228 = vunpack.c.h.b16 %v2095
        %v2229 = vunpack.c.l.b16 %v2096
        %v2230 = vunpack.c.h.b16 %v2096
        %v2231 = vunpack.c.l.b16 %v2097
        %v2232 = vunpack.c.h.b16 %v2097
        %v2233 = vunpack.c.l.b16 %v2098
        %v2234 = vunpack.c.h.b16 %v2098
        %v2235 = vunpack.c.l.b16 %v2099
        %v2236 = vunpack.c.h.b16 %v2099
        %v2237 = vunpack.c.l.b16 %v2100
        %v2238 = vunpack.c.h.b16 %v2100
        %v2239 = vunpack.c.l.b16 %v2101
        %v2240 = vunpack.c.h.b16 %v2101
        %v2241 = vunpack.c.l.b16 %v2102
        %v2242 = vunpack.c.h.b16 %v2102
        %v2243 = vunpack.c.l.b16 %v2103
        %v2244 = vunpack.c.h.b16 %v2103
        %v2245 = vunpack.c.l.b16 %v2104
        %v2246 = vunpack.c.h.b16 %v2104
        %v2247 = vunpack.c.l.b16 %v2105
        %v2248 = vunpack.c.h.b16 %v2105
        %v2249 = vunpack.c.l.b16 %v2106
        %v2250 = vunpack.c.h.b16 %v2106
        %v2251 = vunpack.c.l.b16 %v2107
        %v2252 = vunpack.c.h.b16 %v2107
        %v2253 = vunpack.c.l.b16 %v2108
        %v2254 = vunpack.c.h.b16 %v2108
        %v2255 = vunpack.c.l.b16 %v2109
        %v2256 = vunpack.c.h.b16 %v2109
        %v2257 = vunpack.c.l.b16 %v2110
        %v2258 = vunpack.c.h.b16 %v2110
        %v2259 = vunpack.c.l.b16 %v2111
        %v2260 = vunpack.c.h.b16 %v2111
        %v2261 = vunpack.c.l.b16 %v2112
        %v2262 = vunpack.c.h.b16 %v2112
        %v2263 = vunpack.c.l.b16 %v2113
        %v2264 = vunpack.c.h.b16 %v2113
        %v2265 = vunpack.c.l.b16 %v2114
        %v2266 = vunpack.c.h.b16 %v2114
        %v2267 = vunpack.c.l.b16 %v2115
        %v2268 = vunpack.c.h.b16 %v2115
        %v2269 = vunpack.c.l.b16 %v2116
        %v2270 = vunpack.c.h.b16 %v2116
        %v2271 = vunpack.c.l.b16 %v2117
        %v2272 = vunpack.c.h.b16 %v2117
        %v2273 = vunpack.c.l.b16 %v2118
        %v2274 = vunpack.c.h.b16 %v2118
        %v2275 = vunpack.c.l.b16 %v2119
        %v2276 = vunpack.c.h.b16 %v2119
        %v2277 = vunpack.c.l.b16 %v2120
        %v2278 = vunpack.c.h.b16 %v2120
        %v2279 = vunpack.c.l.b16 %v2121
        %v2280 = vunpack.c.h.b16 %v2121
        %v2281 = vunpack.c.l.b16 %v2122
        %v2282 = vunpack.c.h.b16 %v2122
        %v2283 = vunpack.c.l.b16 %v2123
        %v2284 = vunpack.c.h.b16 %v2123
        %v2285 = vunpack.c.l.b16 %v2124
        %v2286 = vunpack.c.h.b16 %v2124
        %v2287 = vunpack.c.l.b16 %v2125
        %v2288 = vunpack.c.h.b16 %v2125
        %v2289 = vunpack.c.l.b16 %v2126
        %v2290 = vunpack.c.h.b16 %v2126
        %v2291 = vunpack.c.l.b16 %v2127
        %v2292 = vunpack.c.h.b16 %v2127
        %v2293 = vunpack.c.l.b16 %v2128
        %v2294 = vunpack.c.h.b16 %v2128
        %v2295 = vunpack.c.l.b16 %v2129
        %v2296 = vunpack.c.h.b16 %v2129
        %v2297 = vunpack.c.l.b16 %v2130
        %v2298 = vunpack.c.h.b16 %v2130
        %v2299 = vunpack.c.l.b16 %v2131
        %v2300 = vunpack.c.h.b16 %v2131
        %v2301 = vunpack.c.l.b16 %v2132
        %v2302 = vunpack.c.h.b16 %v2132
        %v2303 = vunpack.c.l.b16 %v2133
        %v2304 = vunpack.c.h.b16 %v2133
        %v2305 = vunpack.c.l.b16 %v2134
        %v2306 = vunpack.c.h.b16 %v2134
        %v2307 = vunpack.c.l.b16 %v2135
        %v2308 = vunpack.c.h.b16 %v2135
        %v2309 = vunpack.c.l.b16 %v2136
        %v2310 = vunpack.c.h.b16 %v2136
        %v2311 = vunpack.c.l.b16 %v2137
        %v2312 = vunpack.c.h.b16 %v2137
        %v2313 = vunpack.c.l.b16 %v2138
        %v2314 = vunpack.c.h.b16 %v2138
        %v2315 = vunpack.c.l.b16 %v2139
        %v2316 = vunpack.c.h.b16 %v2139
        %v2317 = vunpack.c.l.b16 %v2140
        %v2318 = vunpack.c.h.b16 %v2140
        %v2319 = vunpack.c.l.b16 %v2141
        %v2320 = vunpack.c.h.b16 %v2141
        %v2321 = vunpack.c.l.b16 %v2142
        %v2322 = vunpack.c.h.b16 %v2142
        %v2323 = vunpack.c.l.b16 %v2143
        %v2324 = vunpack.c.h.b16 %v2143
        %v2325 = vunpack.c.l.b16 %v2144
        %v2326 = vunpack.c.h.b16 %v2144
        %v2327 = vunpack.c.l.b16 %v2145
        %v2328 = vunpack.c.h.b16 %v2145
        %v2329 = vunpack.c.l.b16 %v2146
        %v2330 = vunpack.c.h.b16 %v2146
        %v2331 = vunpack.c.l.b16 %v2147
        %v2332 = vunpack.c.h.b16 %v2147
        %v2333 = vunpack.c.l.b16 %v2148
        %v2334 = vunpack.c.h.b16 %v2148
        %v2335 = vunpack.c.l.b16 %v2149
        %v2336 = vunpack.c.h.b16 %v2149
        %v2337 = vunpack.c.l.b16 %v2150
        %v2338 = vunpack.c.h.b16 %v2150
        %v2339 = vunpack.c.l.b16 %v2151
        %v2340 = vunpack.c.h.b16 %v2151
        %v2341 = vunpack.c.l.b16 %v2152
        %v2342 = vunpack.c.h.b16 %v2152
        %v2343 = vunpack.c.l.b16 %v2153
        %v2344 = vunpack.c.h.b16 %v2153
        %v2345 = vunpack.c.l.b16 %v2154
        %v2346 = vunpack.c.h.b16 %v2154
        %v2347 = vpack.c.b16 %v2221, %v2219
        %v2348 = vpack.c.b16 %v2222, %v2220
        %v2349 = vpack.c.b16 %v2225, %v2223
        %v2350 = vpack.c.b16 %v2226, %v2224
        %v2351 = vpack.c.b16 %v2229, %v2227
        %v2352 = vpack.c.b16 %v2230, %v2228
        %v2353 = vpack.c.b16 %v2233, %v2231
        %v2354 = vpack.c.b16 %v2234, %v2232
        %v2355 = vpack.c.b16 %v2237, %v2235
        %v2356 = vpack.c.b16 %v2238, %v2236
        %v2357 = vpack.c.b16 %v2241, %v2239
        %v2358 = vpack.c.b16 %v2242, %v2240
        %v2359 = vpack.c.b16 %v2245, %v2243
        %v2360 = vpack.c.b16 %v2246, %v2244
        %v2361 = vpack.c.b16 %v2249, %v2247
        %v2362 = vpack.c.b16 %v2250, %v2248
        %v2363 = vpack.c.b16 %v2253, %v2251
        %v2364 = vpack.c.b16 %v2254, %v2252
        %v2365 = vpack.c.b16 %v2257, %v2255
        %v2366 = vpack.c.b16 %v2258, %v2256
        %v2367 = vpack.c.b16 %v2261, %v2259
        %v2368 = vpack.c.b16 %v2262, %v2260
        %v2369 = vpack.c.b16 %v2265, %v2263
        %v2370 = vpack.c.b16 %v2266, %v2264
        %v2371 = vpack.c.b16 %v2269, %v2267
        %v2372 = vpack.c.b16 %v2270, %v2268
        %v2373 = vpack.c.b16 %v2273, %v2271
        %v2374 = vpack.c.b16 %v2274, %v2272
        %v2375 = vpack.c.b16 %v2277, %v2275
        %v2376 = vpack.c.b16 %v2278, %v2276
        %v2377 = vpack.c.b16 %v2281, %v2279
        %v2378 = vpack.c.b16 %v2282, %v2280
        %v2379 = vpack.c.b16 %v2285, %v2283
        %v2380 = vpack.c.b16 %v2286, %v2284
        %v2381 = vpack.c.b16 %v2289, %v2287
        %v2382 = vpack.c.b16 %v2290, %v2288
        %v2383 = vpack.c.b16 %v2293, %v2291
        %v2384 = vpack.c.b16 %v2294, %v2292
        %v2385 = vpack.c.b16 %v2297, %v2295
        %v2386 = vpack.c.b16 %v2298, %v2296
        %v2387 = vpack.c.b16 %v2301, %v2299
        %v2388 = vpack.c.b16 %v2302, %v2300
        %v2389 = vpack.c.b16 %v2305, %v2303
        %v2390 = vpack.c.b16 %v2306, %v2304
        %v2391 = vpack.c.b16 %v2309, %v2307
        %v2392 = vpack.c.b16 %v2310, %v2308
        %v2393 = vpack.c.b16 %v2313, %v2311
        %v2394 = vpack.c.b16 %v2314, %v2312
        %v2395 = vpack.c.b16 %v2317, %v2315
        %v2396 = vpack.c.b16 %v2318, %v2316
        %v2397 = vpack.c.b16 %v2321, %v2319
        %v2398 = vpack.c.b16 %v2322, %v2320
        %v2399 = vpack.c.b16 %v2325, %v2323
        %v2400 = vpack.c.b16 %v2326, %v2324
        %v2401 = vpack.c.b16 %v2329, %v2327
        %v2402 = vpack.c.b16 %v2330, %v2328
        %v2403 = vpack.c.b16 %v2333, %v2331
        %v2404 = vpack.c.b16 %v2334, %v2332
        %v2405 = vpack.c.b16 %v2337, %v2335
        %v2406 = vpack.c.b16 %v2338, %v2336
        %v2407 = vpack.c.b16 %v2341, %v2339
        %v2408 = vpack.c.b16 %v2342, %v2340
        %v2409 = vpack.c.b16 %v2345, %v2343
        %v2410 = vpack.c.b16 %v2346, %v2344
        %2475 = vmatpush.bf16.msra.mxu0 %v2361
        %2476 = vmatpush.bf16.msra.mxu0 %v2359
        %2477 = vmatpush.bf16.msra.mxu0 %v2357
        %2478 = vmatpush.bf16.msra.mxu0 %v2355
        %2479 = vmatpush.bf16.msra.mxu0 %v2353
        %2480 = vmatpush.bf16.msra.mxu0 %v2351
        %2481 = vmatpush.bf16.msra.mxu0 %v2349
        %2482 = vmatpush.bf16.msra.mxu0 %v2347
        %2483 = vmatmul.bf16.gmra.mxu0 %v2059
        %v2484 = vpop.f32.mrf.mxu0
        %v2485 = vadd.f32 0.0, %v2484
        %v2486 = vpop.f32.mrf.mxu0
        %v2487 = vadd.f32 0.0, %v2486
        %2488 = vmatmul.bf16.gmra.mxu0 %v2063
        %v2489 = vpop.f32.mrf.mxu0
        %v2490 = vadd.f32 0.0, %v2489
        %v2491 = vpop.f32.mrf.mxu0
        %v2492 = vadd.f32 0.0, %v2491
        %2493 = vmatmul.bf16.gmra.mxu0 %v2067
        %v2494 = vpop.f32.mrf.mxu0
        %v2495 = vadd.f32 0.0, %v2494
        %v2496 = vpop.f32.mrf.mxu0
        %v2497 = vadd.f32 0.0, %v2496
        %2498 = vmatmul.bf16.gmra.mxu0 %v2071
        %v2499 = vpop.f32.mrf.mxu0
        %v2500 = vadd.f32 0.0, %v2499
        %v2501 = vpop.f32.mrf.mxu0
        %v2502 = vadd.f32 0.0, %v2501
        %2503 = vmatmul.bf16.gmra.mxu0 %v2075
        %v2504 = vpop.f32.mrf.mxu0
        %v2505 = vadd.f32 0.0, %v2504
        %v2506 = vpop.f32.mrf.mxu0
        %v2507 = vadd.f32 0.0, %v2506
        %2508 = vmatmul.bf16.gmra.mxu0 %v2079
        %v2509 = vpop.f32.mrf.mxu0
        %v2510 = vadd.f32 0.0, %v2509
        %v2511 = vpop.f32.mrf.mxu0
        %v2512 = vadd.f32 0.0, %v2511
        %2513 = vmatmul.bf16.gmra.mxu0 %v2083
        %v2514 = vpop.f32.mrf.mxu0
        %v2515 = vadd.f32 0.0, %v2514
        %v2516 = vpop.f32.mrf.mxu0
        %v2517 = vadd.f32 0.0, %v2516
        %2518 = vmatmul.bf16.gmra.mxu0 %v2087
        %v2519 = vpop.f32.mrf.mxu0
        %v2520 = vadd.f32 0.0, %v2519
        %v2521 = vpop.f32.mrf.mxu0
        %v2522 = vadd.f32 0.0, %v2521
        %2523 = vdwg.mxu0
        %2524 = vmatpush.bf16.msra.mxu0 %v2377
        %2525 = vmatpush.bf16.msra.mxu0 %v2375
        %2526 = vmatpush.bf16.msra.mxu0 %v2373
        %2527 = vmatpush.bf16.msra.mxu0 %v2371
        %2528 = vmatpush.bf16.msra.mxu0 %v2369
        %2529 = vmatpush.bf16.msra.mxu0 %v2367
        %2530 = vmatpush.bf16.msra.mxu0 %v2365
        %2531 = vmatpush.bf16.msra.mxu0 %v2363
        %2532 = vmatmul.bf16.gmra.mxu0 %v2060
        %v2533 = vpop.f32.mrf.mxu0
        %v2534 = vadd.f32 %v2485, %v2533
        %v2535 = vpop.f32.mrf.mxu0
        %v2536 = vadd.f32 %v2487, %v2535
        %2537 = vmatmul.bf16.gmra.mxu0 %v2064
        %v2538 = vpop.f32.mrf.mxu0
        %v2539 = vadd.f32 %v2490, %v2538
        %v2540 = vpop.f32.mrf.mxu0
        %v2541 = vadd.f32 %v2492, %v2540
        %2542 = vmatmul.bf16.gmra.mxu0 %v2068
        %v2543 = vpop.f32.mrf.mxu0
        %v2544 = vadd.f32 %v2495, %v2543
        %v2545 = vpop.f32.mrf.mxu0
        %v2546 = vadd.f32 %v2497, %v2545
        %2547 = vmatmul.bf16.gmra.mxu0 %v2072
        %v2548 = vpop.f32.mrf.mxu0
        %v2549 = vadd.f32 %v2500, %v2548
        %v2550 = vpop.f32.mrf.mxu0
        %v2551 = vadd.f32 %v2502, %v2550
        %2552 = vmatmul.bf16.gmra.mxu0 %v2076
        %v2553 = vpop.f32.mrf.mxu0
        %v2554 = vadd.f32 %v2505, %v2553
        %v2555 = vpop.f32.mrf.mxu0
        %v2556 = vadd.f32 %v2507, %v2555
        %2557 = vmatmul.bf16.gmra.mxu0 %v2080
        %v2558 = vpop.f32.mrf.mxu0
        %v2559 = vadd.f32 %v2510, %v2558
        %v2560 = vpop.f32.mrf.mxu0
        %v2561 = vadd.f32 %v2512, %v2560
        %2562 = vmatmul.bf16.gmra.mxu0 %v2084
        %v2563 = vpop.f32.mrf.mxu0
        %v2564 = vadd.f32 %v2515, %v2563
        %v2565 = vpop.f32.mrf.mxu0
        %v2566 = vadd.f32 %v2517, %v2565
        %2567 = vmatmul.bf16.gmra.mxu0 %v2088
        %v2568 = vpop.f32.mrf.mxu0
        %v2569 = vadd.f32 %v2520, %v2568
        %v2570 = vpop.f32.mrf.mxu0
        %v2571 = vadd.f32 %v2522, %v2570
        %2572 = vdwg.mxu0
        %2573 = vmatpush.bf16.msra.mxu0 %v2393
        %2574 = vmatpush.bf16.msra.mxu0 %v2391
        %2575 = vmatpush.bf16.msra.mxu0 %v2389
        %2576 = vmatpush.bf16.msra.mxu0 %v2387
        %2577 = vmatpush.bf16.msra.mxu0 %v2385
        %2578 = vmatpush.bf16.msra.mxu0 %v2383
        %2579 = vmatpush.bf16.msra.mxu0 %v2381
        %2580 = vmatpush.bf16.msra.mxu0 %v2379
        %2581 = vmatmul.bf16.gmra.mxu0 %v2061
        %v2582 = vpop.f32.mrf.mxu0
        %v2583 = vadd.f32 %v2534, %v2582
        %v2584 = vpop.f32.mrf.mxu0
        %v2585 = vadd.f32 %v2536, %v2584
        %2586 = vmatmul.bf16.gmra.mxu0 %v2065
        %v2587 = vpop.f32.mrf.mxu0
        %v2588 = vadd.f32 %v2539, %v2587
        %v2589 = vpop.f32.mrf.mxu0
        %v2590 = vadd.f32 %v2541, %v2589
        %2591 = vmatmul.bf16.gmra.mxu0 %v2069
        %v2592 = vpop.f32.mrf.mxu0
        %v2593 = vadd.f32 %v2544, %v2592
        %v2594 = vpop.f32.mrf.mxu0
        %v2595 = vadd.f32 %v2546, %v2594
        %2596 = vmatmul.bf16.gmra.mxu0 %v2073
        %v2597 = vpop.f32.mrf.mxu0
        %v2598 = vadd.f32 %v2549, %v2597
        %v2599 = vpop.f32.mrf.mxu0
        %v2600 = vadd.f32 %v2551, %v2599
        %2601 = vmatmul.bf16.gmra.mxu0 %v2077
        %v2602 = vpop.f32.mrf.mxu0
        %v2603 = vadd.f32 %v2554, %v2602
        %v2604 = vpop.f32.mrf.mxu0
        %v2605 = vadd.f32 %v2556, %v2604
        %2606 = vmatmul.bf16.gmra.mxu0 %v2081
        %v2607 = vpop.f32.mrf.mxu0
        %v2608 = vadd.f32 %v2559, %v2607
        %v2609 = vpop.f32.mrf.mxu0
        %v2610 = vadd.f32 %v2561, %v2609
        %2611 = vmatmul.bf16.gmra.mxu0 %v2085
        %v2612 = vpop.f32.mrf.mxu0
        %v2613 = vadd.f32 %v2564, %v2612
        %v2614 = vpop.f32.mrf.mxu0
        %v2615 = vadd.f32 %v2566, %v2614
        %2616 = vmatmul.bf16.gmra.mxu0 %v2089
        %v2617 = vpop.f32.mrf.mxu0
        %v2618 = vadd.f32 %v2569, %v2617
        %v2619 = vpop.f32.mrf.mxu0
        %v2620 = vadd.f32 %v2571, %v2619
        %2621 = vdwg.mxu0
        %2622 = vmatpush.bf16.msra.mxu0 %v2409
        %2623 = vmatpush.bf16.msra.mxu0 %v2407
        %2624 = vmatpush.bf16.msra.mxu0 %v2405
        %2625 = vmatpush.bf16.msra.mxu0 %v2403
        %2626 = vmatpush.bf16.msra.mxu0 %v2401
        %2627 = vmatpush.bf16.msra.mxu0 %v2399
        %2628 = vmatpush.bf16.msra.mxu0 %v2397
        %2629 = vmatpush.bf16.msra.mxu0 %v2395
        %2630 = vmatmul.bf16.gmra.mxu0 %v2062
        %v2631 = vpop.f32.mrf.mxu0
        %v2632 = vadd.f32 %v2583, %v2631
        %v2633 = vpop.f32.mrf.mxu0
        %v2634 = vadd.f32 %v2585, %v2633
        %2635 = vmatmul.bf16.gmra.mxu0 %v2066
        %v2636 = vpop.f32.mrf.mxu0
        %v2637 = vadd.f32 %v2588, %v2636
        %v2638 = vpop.f32.mrf.mxu0
        %v2639 = vadd.f32 %v2590, %v2638
        %2640 = vmatmul.bf16.gmra.mxu0 %v2070
        %v2641 = vpop.f32.mrf.mxu0
        %v2642 = vadd.f32 %v2593, %v2641
        %v2643 = vpop.f32.mrf.mxu0
        %v2644 = vadd.f32 %v2595, %v2643
        %2645 = vmatmul.bf16.gmra.mxu0 %v2074
        %v2646 = vpop.f32.mrf.mxu0
        %v2647 = vadd.f32 %v2598, %v2646
        %v2648 = vpop.f32.mrf.mxu0
        %v2649 = vadd.f32 %v2600, %v2648
        %2650 = vmatmul.bf16.gmra.mxu0 %v2078
        %v2651 = vpop.f32.mrf.mxu0
        %v2652 = vadd.f32 %v2603, %v2651
        %v2653 = vpop.f32.mrf.mxu0
        %v2654 = vadd.f32 %v2605, %v2653
        %2655 = vmatmul.bf16.gmra.mxu0 %v2082
        %v2656 = vpop.f32.mrf.mxu0
        %v2657 = vadd.f32 %v2608, %v2656
        %v2658 = vpop.f32.mrf.mxu0
        %v2659 = vadd.f32 %v2610, %v2658
        %2660 = vmatmul.bf16.gmra.mxu0 %v2086
        %v2661 = vpop.f32.mrf.mxu0
        %v2662 = vadd.f32 %v2613, %v2661
        %v2663 = vpop.f32.mrf.mxu0
        %v2664 = vadd.f32 %v2615, %v2663
        %2665 = vmatmul.bf16.gmra.mxu0 %v2090
        %v2666 = vpop.f32.mrf.mxu0
        %v2667 = vadd.f32 %v2618, %v2666
        %v2668 = vpop.f32.mrf.mxu0
        %v2669 = vadd.f32 %v2620, %v2668
        %2670 = vdwg.mxu0
        %2671 = vmatpush.bf16.msra.mxu0 %v2362
        %2672 = vmatpush.bf16.msra.mxu0 %v2360
        %2673 = vmatpush.bf16.msra.mxu0 %v2358
        %2674 = vmatpush.bf16.msra.mxu0 %v2356
        %2675 = vmatpush.bf16.msra.mxu0 %v2354
        %2676 = vmatpush.bf16.msra.mxu0 %v2352
        %2677 = vmatpush.bf16.msra.mxu0 %v2350
        %2678 = vmatpush.bf16.msra.mxu0 %v2348
        %2679 = vmatmul.bf16.gmra.mxu0 %v2059
        %v2680 = vpop.f32.mrf.mxu0
        %v2681 = vadd.f32 0.0, %v2680
        %v2682 = vpop.f32.mrf.mxu0
        %v2683 = vadd.f32 0.0, %v2682
        %2684 = vmatmul.bf16.gmra.mxu0 %v2063
        %v2685 = vpop.f32.mrf.mxu0
        %v2686 = vadd.f32 0.0, %v2685
        %v2687 = vpop.f32.mrf.mxu0
        %v2688 = vadd.f32 0.0, %v2687
        %2689 = vmatmul.bf16.gmra.mxu0 %v2067
        %v2690 = vpop.f32.mrf.mxu0
        %v2691 = vadd.f32 0.0, %v2690
        %v2692 = vpop.f32.mrf.mxu0
        %v2693 = vadd.f32 0.0, %v2692
        %2694 = vmatmul.bf16.gmra.mxu0 %v2071
        %v2695 = vpop.f32.mrf.mxu0
        %v2696 = vadd.f32 0.0, %v2695
        %v2697 = vpop.f32.mrf.mxu0
        %v2698 = vadd.f32 0.0, %v2697
        %2699 = vmatmul.bf16.gmra.mxu0 %v2075
        %v2700 = vpop.f32.mrf.mxu0
        %v2701 = vadd.f32 0.0, %v2700
        %v2702 = vpop.f32.mrf.mxu0
        %v2703 = vadd.f32 0.0, %v2702
        %2704 = vmatmul.bf16.gmra.mxu0 %v2079
        %v2705 = vpop.f32.mrf.mxu0
        %v2706 = vadd.f32 0.0, %v2705
        %v2707 = vpop.f32.mrf.mxu0
        %v2708 = vadd.f32 0.0, %v2707
        %2709 = vmatmul.bf16.gmra.mxu0 %v2083
        %v2710 = vpop.f32.mrf.mxu0
        %v2711 = vadd.f32 0.0, %v2710
        %v2712 = vpop.f32.mrf.mxu0
        %v2713 = vadd.f32 0.0, %v2712
        %2714 = vmatmul.bf16.gmra.mxu0 %v2087
        %v2715 = vpop.f32.mrf.mxu0
        %v2716 = vadd.f32 0.0, %v2715
        %v2717 = vpop.f32.mrf.mxu0
        %v2718 = vadd.f32 0.0, %v2717
        %2719 = vdwg.mxu0
        %2720 = vmatpush.bf16.msra.mxu0 %v2378
        %2721 = vmatpush.bf16.msra.mxu0 %v2376
        %2722 = vmatpush.bf16.msra.mxu0 %v2374
        %2723 = vmatpush.bf16.msra.mxu0 %v2372
        %2724 = vmatpush.bf16.msra.mxu0 %v2370
        %2725 = vmatpush.bf16.msra.mxu0 %v2368
        %2726 = vmatpush.bf16.msra.mxu0 %v2366
        %2727 = vmatpush.bf16.msra.mxu0 %v2364
        %2728 = vmatmul.bf16.gmra.mxu0 %v2060
        %v2729 = vpop.f32.mrf.mxu0
        %v2730 = vadd.f32 %v2681, %v2729
        %v2731 = vpop.f32.mrf.mxu0
        %v2732 = vadd.f32 %v2683, %v2731
        %2733 = vmatmul.bf16.gmra.mxu0 %v2064
        %v2734 = vpop.f32.mrf.mxu0
        %v2735 = vadd.f32 %v2686, %v2734
        %v2736 = vpop.f32.mrf.mxu0
        %v2737 = vadd.f32 %v2688, %v2736
        %2738 = vmatmul.bf16.gmra.mxu0 %v2068
        %v2739 = vpop.f32.mrf.mxu0
        %v2740 = vadd.f32 %v2691, %v2739
        %v2741 = vpop.f32.mrf.mxu0
        %v2742 = vadd.f32 %v2693, %v2741
        %2743 = vmatmul.bf16.gmra.mxu0 %v2072
        %v2744 = vpop.f32.mrf.mxu0
        %v2745 = vadd.f32 %v2696, %v2744
        %v2746 = vpop.f32.mrf.mxu0
        %v2747 = vadd.f32 %v2698, %v2746
        %2748 = vmatmul.bf16.gmra.mxu0 %v2076
        %v2749 = vpop.f32.mrf.mxu0
        %v2750 = vadd.f32 %v2701, %v2749
        %v2751 = vpop.f32.mrf.mxu0
        %v2752 = vadd.f32 %v2703, %v2751
        %2753 = vmatmul.bf16.gmra.mxu0 %v2080
        %v2754 = vpop.f32.mrf.mxu0
        %v2755 = vadd.f32 %v2706, %v2754
        %v2756 = vpop.f32.mrf.mxu0
        %v2757 = vadd.f32 %v2708, %v2756
        %2758 = vmatmul.bf16.gmra.mxu0 %v2084
        %v2759 = vpop.f32.mrf.mxu0
        %v2760 = vadd.f32 %v2711, %v2759
        %v2761 = vpop.f32.mrf.mxu0
        %v2762 = vadd.f32 %v2713, %v2761
        %2763 = vmatmul.bf16.gmra.mxu0 %v2088
        %v2764 = vpop.f32.mrf.mxu0
        %v2765 = vadd.f32 %v2716, %v2764
        %v2766 = vpop.f32.mrf.mxu0
        %v2767 = vadd.f32 %v2718, %v2766
        %2768 = vdwg.mxu0
        %2769 = vmatpush.bf16.msra.mxu0 %v2394
        %2770 = vmatpush.bf16.msra.mxu0 %v2392
        %2771 = vmatpush.bf16.msra.mxu0 %v2390
        %2772 = vmatpush.bf16.msra.mxu0 %v2388
        %2773 = vmatpush.bf16.msra.mxu0 %v2386
        %2774 = vmatpush.bf16.msra.mxu0 %v2384
        %2775 = vmatpush.bf16.msra.mxu0 %v2382
        %2776 = vmatpush.bf16.msra.mxu0 %v2380
        %2777 = vmatmul.bf16.gmra.mxu0 %v2061
        %v2778 = vpop.f32.mrf.mxu0
        %v2779 = vadd.f32 %v2730, %v2778
        %v2780 = vpop.f32.mrf.mxu0
        %v2781 = vadd.f32 %v2732, %v2780
        %2782 = vmatmul.bf16.gmra.mxu0 %v2065
        %v2783 = vpop.f32.mrf.mxu0
        %v2784 = vadd.f32 %v2735, %v2783
        %v2785 = vpop.f32.mrf.mxu0
        %v2786 = vadd.f32 %v2737, %v2785
        %2787 = vmatmul.bf16.gmra.mxu0 %v2069
        %v2788 = vpop.f32.mrf.mxu0
        %v2789 = vadd.f32 %v2740, %v2788
        %v2790 = vpop.f32.mrf.mxu0
        %v2791 = vadd.f32 %v2742, %v2790
        %2792 = vmatmul.bf16.gmra.mxu0 %v2073
        %v2793 = vpop.f32.mrf.mxu0
        %v2794 = vadd.f32 %v2745, %v2793
        %v2795 = vpop.f32.mrf.mxu0
        %v2796 = vadd.f32 %v2747, %v2795
        %2797 = vmatmul.bf16.gmra.mxu0 %v2077
        %v2798 = vpop.f32.mrf.mxu0
        %v2799 = vadd.f32 %v2750, %v2798
        %v2800 = vpop.f32.mrf.mxu0
        %v2801 = vadd.f32 %v2752, %v2800
        %2802 = vmatmul.bf16.gmra.mxu0 %v2081
        %v2803 = vpop.f32.mrf.mxu0
        %v2804 = vadd.f32 %v2755, %v2803
        %v2805 = vpop.f32.mrf.mxu0
        %v2806 = vadd.f32 %v2757, %v2805
        %2807 = vmatmul.bf16.gmra.mxu0 %v2085
        %v2808 = vpop.f32.mrf.mxu0
        %v2809 = vadd.f32 %v2760, %v2808
        %v2810 = vpop.f32.mrf.mxu0
        %v2811 = vadd.f32 %v2762, %v2810
        %2812 = vmatmul.bf16.gmra.mxu0 %v2089
        %v2813 = vpop.f32.mrf.mxu0
        %v2814 = vadd.f32 %v2765, %v2813
        %v2815 = vpop.f32.mrf.mxu0
        %v2816 = vadd.f32 %v2767, %v2815
        %2817 = vdwg.mxu0
        %2818 = vmatpush.bf16.msra.mxu0 %v2410
        %2819 = vmatpush.bf16.msra.mxu0 %v2408
        %2820 = vmatpush.bf16.msra.mxu0 %v2406
        %2821 = vmatpush.bf16.msra.mxu0 %v2404
        %2822 = vmatpush.bf16.msra.mxu0 %v2402
        %2823 = vmatpush.bf16.msra.mxu0 %v2400
        %2824 = vmatpush.bf16.msra.mxu0 %v2398
        %2825 = vmatpush.bf16.msra.mxu0 %v2396
        %2826 = vmatmul.bf16.gmra.mxu0 %v2062
        %v2827 = vpop.f32.mrf.mxu0
        %v2828 = vadd.f32 %v2779, %v2827
        %v2829 = vpop.f32.mrf.mxu0
        %v2830 = vadd.f32 %v2781, %v2829
        %2831 = vmatmul.bf16.gmra.mxu0 %v2066
        %v2832 = vpop.f32.mrf.mxu0
        %v2833 = vadd.f32 %v2784, %v2832
        %v2834 = vpop.f32.mrf.mxu0
        %v2835 = vadd.f32 %v2786, %v2834
        %2836 = vmatmul.bf16.gmra.mxu0 %v2070
        %v2837 = vpop.f32.mrf.mxu0
        %v2838 = vadd.f32 %v2789, %v2837
        %v2839 = vpop.f32.mrf.mxu0
        %v2840 = vadd.f32 %v2791, %v2839
        %2841 = vmatmul.bf16.gmra.mxu0 %v2074
        %v2842 = vpop.f32.mrf.mxu0
        %v2843 = vadd.f32 %v2794, %v2842
        %v2844 = vpop.f32.mrf.mxu0
        %v2845 = vadd.f32 %v2796, %v2844
        %2846 = vmatmul.bf16.gmra.mxu0 %v2078
        %v2847 = vpop.f32.mrf.mxu0
        %v2848 = vadd.f32 %v2799, %v2847
        %v2849 = vpop.f32.mrf.mxu0
        %v2850 = vadd.f32 %v2801, %v2849
        %2851 = vmatmul.bf16.gmra.mxu0 %v2082
        %v2852 = vpop.f32.mrf.mxu0
        %v2853 = vadd.f32 %v2804, %v2852
        %v2854 = vpop.f32.mrf.mxu0
        %v2855 = vadd.f32 %v2806, %v2854
        %2856 = vmatmul.bf16.gmra.mxu0 %v2086
        %v2857 = vpop.f32.mrf.mxu0
        %v2858 = vadd.f32 %v2809, %v2857
        %v2859 = vpop.f32.mrf.mxu0
        %v2860 = vadd.f32 %v2811, %v2859
        %2861 = vmatmul.bf16.gmra.mxu0 %v2090
        %v2862 = vpop.f32.mrf.mxu0
        %v2863 = vadd.f32 %v2814, %v2862
        %v2864 = vpop.f32.mrf.mxu0
        %v2865 = vadd.f32 %v2816, %v2864
        %2866 = vdwg.mxu0
        %v2867 = vadd.f32 %v2632, %v2828
        %v2868 = vadd.f32 %v2634, %v2830
        %v2869 = vadd.f32 %v2637, %v2833
        %v2870 = vadd.f32 %v2639, %v2835
        %v2871 = vadd.f32 %v2642, %v2838
        %v2872 = vadd.f32 %v2644, %v2840
        %v2873 = vadd.f32 %v2647, %v2843
        %v2874 = vadd.f32 %v2649, %v2845
        %v2875 = vadd.f32 %v2652, %v2848
        %v2876 = vadd.f32 %v2654, %v2850
        %v2877 = vadd.f32 %v2657, %v2853
        %v2878 = vadd.f32 %v2659, %v2855
        %v2879 = vadd.f32 %v2662, %v2858
        %v2880 = vadd.f32 %v2664, %v2860
        %v2881 = vadd.f32 %v2667, %v2863
        %v2882 = vadd.f32 %v2669, %v2865
        %2883 = vst [vmem:[%s297 + $0x8] sm:$0xff] %v2867
        %2884 = vst [vmem:[%s297 + $0x28] sm:$0xff] %v2868
        %2885 = vst [vmem:[%s297 + $0x48] sm:$0xff] %v2869
        %2886 = vst [vmem:[%s297 + $0x68] sm:$0xff] %v2870
        %2887 = vst [vmem:[%s297 + $0x88] sm:$0xff] %v2871
        %2888 = vst [vmem:[%s297 + $0xa8] sm:$0xff] %v2872
        %2889 = vst [vmem:[%s297 + $0xc8] sm:$0xff] %v2873
        %2890 = vst [vmem:[%s297 + $0xe8] sm:$0xff] %v2874
        %2891 = vst [vmem:[%s297 + $0x108] sm:$0xff] %v2875
        %2892 = vst [vmem:[%s297 + $0x128] sm:$0xff] %v2876
        %2893 = vst [vmem:[%s297 + $0x148] sm:$0xff] %v2877
        %2894 = vst [vmem:[%s297 + $0x168] sm:$0xff] %v2878
        %2895 = vst [vmem:[%s297 + $0x188] sm:$0xff] %v2879
        %2896 = vst [vmem:[%s297 + $0x1a8] sm:$0xff] %v2880
        %2897 = vst [vmem:[%s297 + $0x1c8] sm:$0xff] %v2881
        %2898 = vst [vmem:[%s297 + $0x1e8] sm:$0xff] %v2882
        %v2899 = vld [vmem:[%s306] sm:$0xff]
        %v2900 = vld [vmem:[%s306 + $0x8] sm:$0xff]
        %v2901 = vld [vmem:[%s306 + $0x10] sm:$0xff]
        %v2902 = vld [vmem:[%s306 + $0x18] sm:$0xff]
        %v2903 = vld [vmem:[%s306 + $0x20] sm:$0xff]
        %v2904 = vld [vmem:[%s306 + $0x28] sm:$0xff]
        %v2905 = vld [vmem:[%s306 + $0x30] sm:$0xff]
        %v2906 = vld [vmem:[%s306 + $0x38] sm:$0xff]
        %v2907 = vld [vmem:[%s306 + $0x40] sm:$0xff]
        %v2908 = vld [vmem:[%s306 + $0x48] sm:$0xff]
        %v2909 = vld [vmem:[%s306 + $0x50] sm:$0xff]
        %v2910 = vld [vmem:[%s306 + $0x58] sm:$0xff]
        %v2911 = vld [vmem:[%s306 + $0x60] sm:$0xff]
        %v2912 = vld [vmem:[%s306 + $0x68] sm:$0xff]
        %v2913 = vld [vmem:[%s306 + $0x70] sm:$0xff]
        %v2914 = vld [vmem:[%s306 + $0x78] sm:$0xff]
        %v2915 = vadd.s32 %v2899, 131
        %v2916 = vadd.s32 %v2900, 131
        %v2917 = vadd.s32 %v2901, 131
        %v2918 = vadd.s32 %v2902, 131
        %v2919 = vadd.s32 %v2903, 131
        %v2920 = vadd.s32 %v2904, 131
        %v2921 = vadd.s32 %v2905, 131
        %v2922 = vadd.s32 %v2906, 131
        %v2923 = vadd.s32 %v2907, 131
        %v2924 = vadd.s32 %v2908, 131
        %v2925 = vadd.s32 %v2909, 131
        %v2926 = vadd.s32 %v2910, 131
        %v2927 = vadd.s32 %v2911, 131
        %v2928 = vadd.s32 %v2912, 131
        %v2929 = vadd.s32 %v2913, 131
        %v2930 = vadd.s32 %v2914, 131
        %2931 = vset.pattern.permute.xlu0 4
        %2932 = vperm.xlu0 %2931, %v2899
        %v2933 = vpop.permute.xlu0 %2932
        %2934 = vset.pattern.permute.xlu0 4
        %2935 = vperm.xlu0 %2934, %v2900
        %v2936 = vpop.permute.xlu0 %2935
        %2937 = vset.pattern.permute.xlu0 4
        %2938 = vperm.xlu0 %2937, %v2901
        %v2939 = vpop.permute.xlu0 %2938
        %2940 = vset.pattern.permute.xlu0 4
        %2941 = vperm.xlu0 %2940, %v2902
        %v2942 = vpop.permute.xlu0 %2941
        %2943 = vset.pattern.permute.xlu0 4
        %2944 = vperm.xlu0 %2943, %v2903
        %v2945 = vpop.permute.xlu0 %2944
        %2946 = vset.pattern.permute.xlu0 4
        %2947 = vperm.xlu0 %2946, %v2904
        %v2948 = vpop.permute.xlu0 %2947
        %2949 = vset.pattern.permute.xlu0 4
        %2950 = vperm.xlu0 %2949, %v2905
        %v2951 = vpop.permute.xlu0 %2950
        %2952 = vset.pattern.permute.xlu0 4
        %2953 = vperm.xlu0 %2952, %v2906
        %v2954 = vpop.permute.xlu0 %2953
        %2955 = vset.pattern.permute.xlu0 4
        %2956 = vperm.xlu0 %2955, %v2907
        %v2957 = vpop.permute.xlu0 %2956
        %2958 = vset.pattern.permute.xlu0 4
        %2959 = vperm.xlu0 %2958, %v2908
        %v2960 = vpop.permute.xlu0 %2959
        %2961 = vset.pattern.permute.xlu0 4
        %2962 = vperm.xlu0 %2961, %v2909
        %v2963 = vpop.permute.xlu0 %2962
        %2964 = vset.pattern.permute.xlu0 4
        %2965 = vperm.xlu0 %2964, %v2910
        %v2966 = vpop.permute.xlu0 %2965
        %2967 = vset.pattern.permute.xlu0 4
        %2968 = vperm.xlu0 %2967, %v2911
        %v2969 = vpop.permute.xlu0 %2968
        %2970 = vset.pattern.permute.xlu0 4
        %2971 = vperm.xlu0 %2970, %v2912
        %v2972 = vpop.permute.xlu0 %2971
        %2973 = vset.pattern.permute.xlu0 4
        %2974 = vperm.xlu0 %2973, %v2913
        %v2975 = vpop.permute.xlu0 %2974
        %2976 = vset.pattern.permute.xlu0 4
        %2977 = vperm.xlu0 %2976, %v2914
        %v2978 = vpop.permute.xlu0 %2977
        %vm2979 = vcmp.eq.s32.totalorder %v351, %v2933
        %vm2980 = vcmp.eq.s32.totalorder %v352, %v2933
        %vm2981 = vcmp.eq.s32.totalorder %v351, %v2936
        %vm2982 = vcmp.eq.s32.totalorder %v352, %v2936
        %vm2983 = vcmp.eq.s32.totalorder %v351, %v2939
        %vm2984 = vcmp.eq.s32.totalorder %v352, %v2939
        %vm2985 = vcmp.eq.s32.totalorder %v351, %v2942
        %vm2986 = vcmp.eq.s32.totalorder %v352, %v2942
        %vm2987 = vcmp.eq.s32.totalorder %v351, %v2945
        %vm2988 = vcmp.eq.s32.totalorder %v352, %v2945
        %vm2989 = vcmp.eq.s32.totalorder %v351, %v2948
        %vm2990 = vcmp.eq.s32.totalorder %v352, %v2948
        %vm2991 = vcmp.eq.s32.totalorder %v351, %v2951
        %vm2992 = vcmp.eq.s32.totalorder %v352, %v2951
        %vm2993 = vcmp.eq.s32.totalorder %v351, %v2954
        %vm2994 = vcmp.eq.s32.totalorder %v352, %v2954
        %vm2995 = vcmp.eq.s32.totalorder %v351, %v2957
        %vm2996 = vcmp.eq.s32.totalorder %v352, %v2957
        %vm2997 = vcmp.eq.s32.totalorder %v351, %v2960
        %vm2998 = vcmp.eq.s32.totalorder %v352, %v2960
        %vm2999 = vcmp.eq.s32.totalorder %v351, %v2963
        %vm3000 = vcmp.eq.s32.totalorder %v352, %v2963
        %vm3001 = vcmp.eq.s32.totalorder %v351, %v2966
        %vm3002 = vcmp.eq.s32.totalorder %v352, %v2966
        %vm3003 = vcmp.eq.s32.totalorder %v351, %v2969
        %vm3004 = vcmp.eq.s32.totalorder %v352, %v2969
        %vm3005 = vcmp.eq.s32.totalorder %v351, %v2972
        %vm3006 = vcmp.eq.s32.totalorder %v352, %v2972
        %vm3007 = vcmp.eq.s32.totalorder %v351, %v2975
        %vm3008 = vcmp.eq.s32.totalorder %v352, %v2975
        %vm3009 = vcmp.eq.s32.totalorder %v351, %v2978
        %vm3010 = vcmp.eq.s32.totalorder %v352, %v2978
        %3011 = vset.pattern.permute.xlu0 5
        %3012 = vperm.xlu0 %3011, %v2915
        %v3013 = vpop.permute.xlu0 %3012
        %3014 = vset.pattern.permute.xlu0 5
        %3015 = vperm.xlu0 %3014, %v2916
        %v3016 = vpop.permute.xlu0 %3015
        %3017 = vset.pattern.permute.xlu0 5
        %3018 = vperm.xlu0 %3017, %v2917
        %v3019 = vpop.permute.xlu0 %3018
        %3020 = vset.pattern.permute.xlu0 5
        %3021 = vperm.xlu0 %3020, %v2918
        %v3022 = vpop.permute.xlu0 %3021
        %3023 = vset.pattern.permute.xlu0 5
        %3024 = vperm.xlu0 %3023, %v2919
        %v3025 = vpop.permute.xlu0 %3024
        %3026 = vset.pattern.permute.xlu0 5
        %3027 = vperm.xlu0 %3026, %v2920
        %v3028 = vpop.permute.xlu0 %3027
        %3029 = vset.pattern.permute.xlu0 5
        %3030 = vperm.xlu0 %3029, %v2921
        %v3031 = vpop.permute.xlu0 %3030
        %3032 = vset.pattern.permute.xlu0 5
        %3033 = vperm.xlu0 %3032, %v2922
        %v3034 = vpop.permute.xlu0 %3033
        %3035 = vset.pattern.permute.xlu0 5
        %3036 = vperm.xlu0 %3035, %v2923
        %v3037 = vpop.permute.xlu0 %3036
        %3038 = vset.pattern.permute.xlu0 5
        %3039 = vperm.xlu0 %3038, %v2924
        %v3040 = vpop.permute.xlu0 %3039
        %3041 = vset.pattern.permute.xlu0 5
        %3042 = vperm.xlu0 %3041, %v2925
        %v3043 = vpop.permute.xlu0 %3042
        %3044 = vset.pattern.permute.xlu0 5
        %3045 = vperm.xlu0 %3044, %v2926
        %v3046 = vpop.permute.xlu0 %3045
        %3047 = vset.pattern.permute.xlu0 5
        %3048 = vperm.xlu0 %3047, %v2927
        %v3049 = vpop.permute.xlu0 %3048
        %3050 = vset.pattern.permute.xlu0 5
        %3051 = vperm.xlu0 %3050, %v2928
        %v3052 = vpop.permute.xlu0 %3051
        %3053 = vset.pattern.permute.xlu0 5
        %3054 = vperm.xlu0 %3053, %v2929
        %v3055 = vpop.permute.xlu0 %3054
        %3056 = vset.pattern.permute.xlu0 5
        %3057 = vperm.xlu0 %3056, %v2930
        %v3058 = vpop.permute.xlu0 %3057
        %vm3059 = vcmp.eq.s32.totalorder %v351, %v3013
        %vm3060 = vcmp.eq.s32.totalorder %v352, %v3013
        %vm3061 = vcmp.eq.s32.totalorder %v351, %v3016
        %vm3062 = vcmp.eq.s32.totalorder %v352, %v3016
        %vm3063 = vcmp.eq.s32.totalorder %v351, %v3019
        %vm3064 = vcmp.eq.s32.totalorder %v352, %v3019
        %vm3065 = vcmp.eq.s32.totalorder %v351, %v3022
        %vm3066 = vcmp.eq.s32.totalorder %v352, %v3022
        %vm3067 = vcmp.eq.s32.totalorder %v351, %v3025
        %vm3068 = vcmp.eq.s32.totalorder %v352, %v3025
        %vm3069 = vcmp.eq.s32.totalorder %v351, %v3028
        %vm3070 = vcmp.eq.s32.totalorder %v352, %v3028
        %vm3071 = vcmp.eq.s32.totalorder %v351, %v3031
        %vm3072 = vcmp.eq.s32.totalorder %v352, %v3031
        %vm3073 = vcmp.eq.s32.totalorder %v351, %v3034
        %vm3074 = vcmp.eq.s32.totalorder %v352, %v3034
        %vm3075 = vcmp.eq.s32.totalorder %v351, %v3037
        %vm3076 = vcmp.eq.s32.totalorder %v352, %v3037
        %vm3077 = vcmp.eq.s32.totalorder %v351, %v3040
        %vm3078 = vcmp.eq.s32.totalorder %v352, %v3040
        %vm3079 = vcmp.eq.s32.totalorder %v351, %v3043
        %vm3080 = vcmp.eq.s32.totalorder %v352, %v3043
        %vm3081 = vcmp.eq.s32.totalorder %v351, %v3046
        %vm3082 = vcmp.eq.s32.totalorder %v352, %v3046
        %vm3083 = vcmp.eq.s32.totalorder %v351, %v3049
        %vm3084 = vcmp.eq.s32.totalorder %v352, %v3049
        %vm3085 = vcmp.eq.s32.totalorder %v351, %v3052
        %vm3086 = vcmp.eq.s32.totalorder %v352, %v3052
        %vm3087 = vcmp.eq.s32.totalorder %v351, %v3055
        %vm3088 = vcmp.eq.s32.totalorder %v352, %v3055
        %vm3089 = vcmp.eq.s32.totalorder %v351, %v3058
        %vm3090 = vcmp.eq.s32.totalorder %v352, %v3058
        %vm3091 = vmor %vm2979, %vm3059
        %vm3092 = vmor %vm2980, %vm3060
        %vm3093 = vmor %vm2981, %vm3061
        %vm3094 = vmor %vm2982, %vm3062
        %vm3095 = vmor %vm2983, %vm3063
        %vm3096 = vmor %vm2984, %vm3064
        %vm3097 = vmor %vm2985, %vm3065
        %vm3098 = vmor %vm2986, %vm3066
        %vm3099 = vmor %vm2987, %vm3067
        %vm3100 = vmor %vm2988, %vm3068
        %vm3101 = vmor %vm2989, %vm3069
        %vm3102 = vmor %vm2990, %vm3070
        %vm3103 = vmor %vm2991, %vm3071
        %vm3104 = vmor %vm2992, %vm3072
        %vm3105 = vmor %vm2993, %vm3073
        %vm3106 = vmor %vm2994, %vm3074
        %vm3107 = vmor %vm2995, %vm3075
        %vm3108 = vmor %vm2996, %vm3076
        %vm3109 = vmor %vm2997, %vm3077
        %vm3110 = vmor %vm2998, %vm3078
        %vm3111 = vmor %vm2999, %vm3079
        %vm3112 = vmor %vm3000, %vm3080
        %vm3113 = vmor %vm3001, %vm3081
        %vm3114 = vmor %vm3002, %vm3082
        %vm3115 = vmor %vm3003, %vm3083
        %vm3116 = vmor %vm3004, %vm3084
        %vm3117 = vmor %vm3005, %vm3085
        %vm3118 = vmor %vm3006, %vm3086
        %vm3119 = vmor %vm3007, %vm3087
        %vm3120 = vmor %vm3008, %vm3088
        %vm3121 = vmor %vm3009, %vm3089
        %vm3122 = vmor %vm3010, %vm3090
        %v3123 = vsel %vm3091, 1, 0
        %v3124 = vsel %vm3092, 1, 0
        %v3125 = vsel %vm3093, 1, 0
        %v3126 = vsel %vm3094, 1, 0
        %v3127 = vsel %vm3095, 1, 0
        %v3128 = vsel %vm3096, 1, 0
        %v3129 = vsel %vm3097, 1, 0
        %v3130 = vsel %vm3098, 1, 0
        %v3131 = vsel %vm3099, 1, 0
        %v3132 = vsel %vm3100, 1, 0
        %v3133 = vsel %vm3101, 1, 0
        %v3134 = vsel %vm3102, 1, 0
        %v3135 = vsel %vm3103, 1, 0
        %v3136 = vsel %vm3104, 1, 0
        %v3137 = vsel %vm3105, 1, 0
        %v3138 = vsel %vm3106, 1, 0
        %v3139 = vsel %vm3107, 1, 0
        %v3140 = vsel %vm3108, 1, 0
        %v3141 = vsel %vm3109, 1, 0
        %v3142 = vsel %vm3110, 1, 0
        %v3143 = vsel %vm3111, 1, 0
        %v3144 = vsel %vm3112, 1, 0
        %v3145 = vsel %vm3113, 1, 0
        %v3146 = vsel %vm3114, 1, 0
        %v3147 = vsel %vm3115, 1, 0
        %v3148 = vsel %vm3116, 1, 0
        %v3149 = vsel %vm3117, 1, 0
        %v3150 = vsel %vm3118, 1, 0
        %v3151 = vsel %vm3119, 1, 0
        %v3152 = vsel %vm3120, 1, 0
        %v3153 = vsel %vm3121, 1, 0
        %v3154 = vsel %vm3122, 1, 0
        %v3155 = vcvt.s32.f32 %v3123
        %v3156 = vcvt.s32.f32 %v3124
        %v3157 = vcvt.s32.f32 %v3125
        %v3158 = vcvt.s32.f32 %v3126
        %v3159 = vcvt.s32.f32 %v3127
        %v3160 = vcvt.s32.f32 %v3128
        %v3161 = vcvt.s32.f32 %v3129
        %v3162 = vcvt.s32.f32 %v3130
        %v3163 = vcvt.s32.f32 %v3131
        %v3164 = vcvt.s32.f32 %v3132
        %v3165 = vcvt.s32.f32 %v3133
        %v3166 = vcvt.s32.f32 %v3134
        %v3167 = vcvt.s32.f32 %v3135
        %v3168 = vcvt.s32.f32 %v3136
        %v3169 = vcvt.s32.f32 %v3137
        %v3170 = vcvt.s32.f32 %v3138
        %v3171 = vcvt.s32.f32 %v3139
        %v3172 = vcvt.s32.f32 %v3140
        %v3173 = vcvt.s32.f32 %v3141
        %v3174 = vcvt.s32.f32 %v3142
        %v3175 = vcvt.s32.f32 %v3143
        %v3176 = vcvt.s32.f32 %v3144
        %v3177 = vcvt.s32.f32 %v3145
        %v3178 = vcvt.s32.f32 %v3146
        %v3179 = vcvt.s32.f32 %v3147
        %v3180 = vcvt.s32.f32 %v3148
        %v3181 = vcvt.s32.f32 %v3149
        %v3182 = vcvt.s32.f32 %v3150
        %v3183 = vcvt.s32.f32 %v3151
        %v3184 = vcvt.s32.f32 %v3152
        %v3185 = vcvt.s32.f32 %v3153
        %v3186 = vcvt.s32.f32 %v3154
        %v3187 = vpack.c.bf16 %v3157, %v3155
        %v3188 = vpack.c.bf16 %v3158, %v3156
        %v3189 = vpack.c.bf16 %v3161, %v3159
        %v3190 = vpack.c.bf16 %v3162, %v3160
        %v3191 = vpack.c.bf16 %v3165, %v3163
        %v3192 = vpack.c.bf16 %v3166, %v3164
        %v3193 = vpack.c.bf16 %v3169, %v3167
        %v3194 = vpack.c.bf16 %v3170, %v3168
        %v3195 = vpack.c.bf16 %v3173, %v3171
        %v3196 = vpack.c.bf16 %v3174, %v3172
        %v3197 = vpack.c.bf16 %v3177, %v3175
        %v3198 = vpack.c.bf16 %v3178, %v3176
        %v3199 = vpack.c.bf16 %v3181, %v3179
        %v3200 = vpack.c.bf16 %v3182, %v3180
        %v3201 = vpack.c.bf16 %v3185, %v3183
        %v3202 = vpack.c.bf16 %v3186, %v3184
        %v3203 = vld [vmem:[#allocation7] sm:$0xff]
        %v3204 = vld [vmem:[#allocation7 + $0x8] sm:$0xff]
        %v3205 = vld [vmem:[#allocation7 + $0x10] sm:$0xff]
        %v3206 = vld [vmem:[#allocation7 + $0x18] sm:$0xff]
        %v3207 = vld [vmem:[#allocation7 + $0x20] sm:$0xff]
        %v3208 = vld [vmem:[#allocation7 + $0x28] sm:$0xff]
        %v3209 = vld [vmem:[#allocation7 + $0x30] sm:$0xff]
        %v3210 = vld [vmem:[#allocation7 + $0x38] sm:$0xff]
        %v3211 = vld [vmem:[#allocation7 + $0x40] sm:$0xff]
        %v3212 = vld [vmem:[#allocation7 + $0x48] sm:$0xff]
        %v3213 = vld [vmem:[#allocation7 + $0x50] sm:$0xff]
        %v3214 = vld [vmem:[#allocation7 + $0x58] sm:$0xff]
        %v3215 = vld [vmem:[#allocation7 + $0x60] sm:$0xff]
        %v3216 = vld [vmem:[#allocation7 + $0x68] sm:$0xff]
        %v3217 = vld [vmem:[#allocation7 + $0x70] sm:$0xff]
        %v3218 = vld [vmem:[#allocation7 + $0x78] sm:$0xff]
        %v3219 = vld [vmem:[#allocation7 + $0x80] sm:$0xff]
        %v3220 = vld [vmem:[#allocation7 + $0x88] sm:$0xff]
        %v3221 = vld [vmem:[#allocation7 + $0x90] sm:$0xff]
        %v3222 = vld [vmem:[#allocation7 + $0x98] sm:$0xff]
        %v3223 = vld [vmem:[#allocation7 + $0xa0] sm:$0xff]
        %v3224 = vld [vmem:[#allocation7 + $0xa8] sm:$0xff]
        %v3225 = vld [vmem:[#allocation7 + $0xb0] sm:$0xff]
        %v3226 = vld [vmem:[#allocation7 + $0xb8] sm:$0xff]
        %v3227 = vld [vmem:[#allocation7 + $0xc0] sm:$0xff]
        %v3228 = vld [vmem:[#allocation7 + $0xc8] sm:$0xff]
        %v3229 = vld [vmem:[#allocation7 + $0xd0] sm:$0xff]
        %v3230 = vld [vmem:[#allocation7 + $0xd8] sm:$0xff]
        %v3231 = vld [vmem:[#allocation7 + $0xe0] sm:$0xff]
        %v3232 = vld [vmem:[#allocation7 + $0xe8] sm:$0xff]
        %v3233 = vld [vmem:[#allocation7 + $0xf0] sm:$0xff]
        %v3234 = vld [vmem:[#allocation7 + $0xf8] sm:$0xff]
        %v3267 = vunpack.c.l.b16 %v3203
        %v3268 = vunpack.c.h.b16 %v3203
        %v3269 = vunpack.c.l.b16 %v3204
        %v3270 = vunpack.c.h.b16 %v3204
        %v3271 = vunpack.c.l.b16 %v3205
        %v3272 = vunpack.c.h.b16 %v3205
        %v3273 = vunpack.c.l.b16 %v3206
        %v3274 = vunpack.c.h.b16 %v3206
        %v3275 = vunpack.c.l.b16 %v3207
        %v3276 = vunpack.c.h.b16 %v3207
        %v3277 = vunpack.c.l.b16 %v3208
        %v3278 = vunpack.c.h.b16 %v3208
        %v3279 = vunpack.c.l.b16 %v3209
        %v3280 = vunpack.c.h.b16 %v3209
        %v3281 = vunpack.c.l.b16 %v3210
        %v3282 = vunpack.c.h.b16 %v3210
        %v3283 = vunpack.c.l.b16 %v3211
        %v3284 = vunpack.c.h.b16 %v3211
        %v3285 = vunpack.c.l.b16 %v3212
        %v3286 = vunpack.c.h.b16 %v3212
        %v3287 = vunpack.c.l.b16 %v3213
        %v3288 = vunpack.c.h.b16 %v3213
        %v3289 = vunpack.c.l.b16 %v3214
        %v3290 = vunpack.c.h.b16 %v3214
        %v3291 = vunpack.c.l.b16 %v3215
        %v3292 = vunpack.c.h.b16 %v3215
        %v3293 = vunpack.c.l.b16 %v3216
        %v3294 = vunpack.c.h.b16 %v3216
        %v3295 = vunpack.c.l.b16 %v3217
        %v3296 = vunpack.c.h.b16 %v3217
        %v3297 = vunpack.c.l.b16 %v3218
        %v3298 = vunpack.c.h.b16 %v3218
        %v3299 = vunpack.c.l.b16 %v3219
        %v3300 = vunpack.c.h.b16 %v3219
        %v3301 = vunpack.c.l.b16 %v3220
        %v3302 = vunpack.c.h.b16 %v3220
        %v3303 = vunpack.c.l.b16 %v3221
        %v3304 = vunpack.c.h.b16 %v3221
        %v3305 = vunpack.c.l.b16 %v3222
        %v3306 = vunpack.c.h.b16 %v3222
        %v3307 = vunpack.c.l.b16 %v3223
        %v3308 = vunpack.c.h.b16 %v3223
        %v3309 = vunpack.c.l.b16 %v3224
        %v3310 = vunpack.c.h.b16 %v3224
        %v3311 = vunpack.c.l.b16 %v3225
        %v3312 = vunpack.c.h.b16 %v3225
        %v3313 = vunpack.c.l.b16 %v3226
        %v3314 = vunpack.c.h.b16 %v3226
        %v3315 = vunpack.c.l.b16 %v3227
        %v3316 = vunpack.c.h.b16 %v3227
        %v3317 = vunpack.c.l.b16 %v3228
        %v3318 = vunpack.c.h.b16 %v3228
        %v3319 = vunpack.c.l.b16 %v3229
        %v3320 = vunpack.c.h.b16 %v3229
        %v3321 = vunpack.c.l.b16 %v3230
        %v3322 = vunpack.c.h.b16 %v3230
        %v3323 = vunpack.c.l.b16 %v3231
        %v3324 = vunpack.c.h.b16 %v3231
        %v3325 = vunpack.c.l.b16 %v3232
        %v3326 = vunpack.c.h.b16 %v3232
        %v3327 = vunpack.c.l.b16 %v3233
        %v3328 = vunpack.c.h.b16 %v3233
        %v3329 = vunpack.c.l.b16 %v3234
        %v3330 = vunpack.c.h.b16 %v3234
        %v3331 = vpack.c.b16 %v3269, %v3267
        %v3332 = vpack.c.b16 %v3270, %v3268
        %v3333 = vpack.c.b16 %v3273, %v3271
        %v3334 = vpack.c.b16 %v3274, %v3272
        %v3335 = vpack.c.b16 %v3277, %v3275
        %v3336 = vpack.c.b16 %v3278, %v3276
        %v3337 = vpack.c.b16 %v3281, %v3279
        %v3338 = vpack.c.b16 %v3282, %v3280
        %v3339 = vpack.c.b16 %v3285, %v3283
        %v3340 = vpack.c.b16 %v3286, %v3284
        %v3341 = vpack.c.b16 %v3289, %v3287
        %v3342 = vpack.c.b16 %v3290, %v3288
        %v3343 = vpack.c.b16 %v3293, %v3291
        %v3344 = vpack.c.b16 %v3294, %v3292
        %v3345 = vpack.c.b16 %v3297, %v3295
        %v3346 = vpack.c.b16 %v3298, %v3296
        %v3347 = vpack.c.b16 %v3301, %v3299
        %v3348 = vpack.c.b16 %v3302, %v3300
        %v3349 = vpack.c.b16 %v3305, %v3303
        %v3350 = vpack.c.b16 %v3306, %v3304
        %v3351 = vpack.c.b16 %v3309, %v3307
        %v3352 = vpack.c.b16 %v3310, %v3308
        %v3353 = vpack.c.b16 %v3313, %v3311
        %v3354 = vpack.c.b16 %v3314, %v3312
        %v3355 = vpack.c.b16 %v3317, %v3315
        %v3356 = vpack.c.b16 %v3318, %v3316
        %v3357 = vpack.c.b16 %v3321, %v3319
        %v3358 = vpack.c.b16 %v3322, %v3320
        %v3359 = vpack.c.b16 %v3325, %v3323
        %v3360 = vpack.c.b16 %v3326, %v3324
        %v3361 = vpack.c.b16 %v3329, %v3327
        %v3362 = vpack.c.b16 %v3330, %v3328
        %3395 = vmatpush.bf16.msra.mxu0 %v3345
        %3396 = vmatpush.bf16.msra.mxu0 %v3343
        %3397 = vmatpush.bf16.msra.mxu0 %v3341
        %3398 = vmatpush.bf16.msra.mxu0 %v3339
        %3399 = vmatpush.bf16.msra.mxu0 %v3337
        %3400 = vmatpush.bf16.msra.mxu0 %v3335
        %3401 = vmatpush.bf16.msra.mxu0 %v3333
        %3402 = vmatpush.bf16.msra.mxu0 %v3331
        %3403 = vmatmul.bf16.gmra.mxu0 %v3187
        %v3404 = vpop.f32.mrf.mxu0
        %v3405 = vadd.f32 0.0, %v3404
        %v3406 = vpop.f32.mrf.mxu0
        %v3407 = vadd.f32 0.0, %v3406
        %3408 = vmatmul.bf16.gmra.mxu0 %v3189
        %v3409 = vpop.f32.mrf.mxu0
        %v3410 = vadd.f32 0.0, %v3409
        %v3411 = vpop.f32.mrf.mxu0
        %v3412 = vadd.f32 0.0, %v3411
        %3413 = vmatmul.bf16.gmra.mxu0 %v3191
        %v3414 = vpop.f32.mrf.mxu0
        %v3415 = vadd.f32 0.0, %v3414
        %v3416 = vpop.f32.mrf.mxu0
        %v3417 = vadd.f32 0.0, %v3416
        %3418 = vmatmul.bf16.gmra.mxu0 %v3193
        %v3419 = vpop.f32.mrf.mxu0
        %v3420 = vadd.f32 0.0, %v3419
        %v3421 = vpop.f32.mrf.mxu0
        %v3422 = vadd.f32 0.0, %v3421
        %3423 = vmatmul.bf16.gmra.mxu0 %v3195
        %v3424 = vpop.f32.mrf.mxu0
        %v3425 = vadd.f32 0.0, %v3424
        %v3426 = vpop.f32.mrf.mxu0
        %v3427 = vadd.f32 0.0, %v3426
        %3428 = vmatmul.bf16.gmra.mxu0 %v3197
        %v3429 = vpop.f32.mrf.mxu0
        %v3430 = vadd.f32 0.0, %v3429
        %v3431 = vpop.f32.mrf.mxu0
        %v3432 = vadd.f32 0.0, %v3431
        %3433 = vmatmul.bf16.gmra.mxu0 %v3199
        %v3434 = vpop.f32.mrf.mxu0
        %v3435 = vadd.f32 0.0, %v3434
        %v3436 = vpop.f32.mrf.mxu0
        %v3437 = vadd.f32 0.0, %v3436
        %3438 = vmatmul.bf16.gmra.mxu0 %v3201
        %v3439 = vpop.f32.mrf.mxu0
        %v3440 = vadd.f32 0.0, %v3439
        %v3441 = vpop.f32.mrf.mxu0
        %v3442 = vadd.f32 0.0, %v3441
        %3443 = vdwg.mxu0
        %3444 = vmatpush.bf16.msra.mxu0 %v3361
        %3445 = vmatpush.bf16.msra.mxu0 %v3359
        %3446 = vmatpush.bf16.msra.mxu0 %v3357
        %3447 = vmatpush.bf16.msra.mxu0 %v3355
        %3448 = vmatpush.bf16.msra.mxu0 %v3353
        %3449 = vmatpush.bf16.msra.mxu0 %v3351
        %3450 = vmatpush.bf16.msra.mxu0 %v3349
        %3451 = vmatpush.bf16.msra.mxu0 %v3347
        %3452 = vmatmul.bf16.gmra.mxu0 %v3188
        %v3453 = vpop.f32.mrf.mxu0
        %v3454 = vadd.f32 %v3405, %v3453
        %v3455 = vpop.f32.mrf.mxu0
        %v3456 = vadd.f32 %v3407, %v3455
        %3457 = vmatmul.bf16.gmra.mxu0 %v3190
        %v3458 = vpop.f32.mrf.mxu0
        %v3459 = vadd.f32 %v3410, %v3458
        %v3460 = vpop.f32.mrf.mxu0
        %v3461 = vadd.f32 %v3412, %v3460
        %3462 = vmatmul.bf16.gmra.mxu0 %v3192
        %v3463 = vpop.f32.mrf.mxu0
        %v3464 = vadd.f32 %v3415, %v3463
        %v3465 = vpop.f32.mrf.mxu0
        %v3466 = vadd.f32 %v3417, %v3465
        %3467 = vmatmul.bf16.gmra.mxu0 %v3194
        %v3468 = vpop.f32.mrf.mxu0
        %v3469 = vadd.f32 %v3420, %v3468
        %v3470 = vpop.f32.mrf.mxu0
        %v3471 = vadd.f32 %v3422, %v3470
        %3472 = vmatmul.bf16.gmra.mxu0 %v3196
        %v3473 = vpop.f32.mrf.mxu0
        %v3474 = vadd.f32 %v3425, %v3473
        %v3475 = vpop.f32.mrf.mxu0
        %v3476 = vadd.f32 %v3427, %v3475
        %3477 = vmatmul.bf16.gmra.mxu0 %v3198
        %v3478 = vpop.f32.mrf.mxu0
        %v3479 = vadd.f32 %v3430, %v3478
        %v3480 = vpop.f32.mrf.mxu0
        %v3481 = vadd.f32 %v3432, %v3480
        %3482 = vmatmul.bf16.gmra.mxu0 %v3200
        %v3483 = vpop.f32.mrf.mxu0
        %v3484 = vadd.f32 %v3435, %v3483
        %v3485 = vpop.f32.mrf.mxu0
        %v3486 = vadd.f32 %v3437, %v3485
        %3487 = vmatmul.bf16.gmra.mxu0 %v3202
        %v3488 = vpop.f32.mrf.mxu0
        %v3489 = vadd.f32 %v3440, %v3488
        %v3490 = vpop.f32.mrf.mxu0
        %v3491 = vadd.f32 %v3442, %v3490
        %3492 = vdwg.mxu0
        %3493 = vmatpush.bf16.msra.mxu0 %v3346
        %3494 = vmatpush.bf16.msra.mxu0 %v3344
        %3495 = vmatpush.bf16.msra.mxu0 %v3342
        %3496 = vmatpush.bf16.msra.mxu0 %v3340
        %3497 = vmatpush.bf16.msra.mxu0 %v3338
        %3498 = vmatpush.bf16.msra.mxu0 %v3336
        %3499 = vmatpush.bf16.msra.mxu0 %v3334
        %3500 = vmatpush.bf16.msra.mxu0 %v3332
        %3501 = vmatmul.bf16.gmra.mxu0 %v3187
        %v3502 = vpop.f32.mrf.mxu0
        %v3503 = vadd.f32 0.0, %v3502
        %v3504 = vpop.f32.mrf.mxu0
        %v3505 = vadd.f32 0.0, %v3504
        %3506 = vmatmul.bf16.gmra.mxu0 %v3189
        %v3507 = vpop.f32.mrf.mxu0
        %v3508 = vadd.f32 0.0, %v3507
        %v3509 = vpop.f32.mrf.mxu0
        %v3510 = vadd.f32 0.0, %v3509
        %3511 = vmatmul.bf16.gmra.mxu0 %v3191
        %v3512 = vpop.f32.mrf.mxu0
        %v3513 = vadd.f32 0.0, %v3512
        %v3514 = vpop.f32.mrf.mxu0
        %v3515 = vadd.f32 0.0, %v3514
        %3516 = vmatmul.bf16.gmra.mxu0 %v3193
        %v3517 = vpop.f32.mrf.mxu0
        %v3518 = vadd.f32 0.0, %v3517
        %v3519 = vpop.f32.mrf.mxu0
        %v3520 = vadd.f32 0.0, %v3519
        %3521 = vmatmul.bf16.gmra.mxu0 %v3195
        %v3522 = vpop.f32.mrf.mxu0
        %v3523 = vadd.f32 0.0, %v3522
        %v3524 = vpop.f32.mrf.mxu0
        %v3525 = vadd.f32 0.0, %v3524
        %3526 = vmatmul.bf16.gmra.mxu0 %v3197
        %v3527 = vpop.f32.mrf.mxu0
        %v3528 = vadd.f32 0.0, %v3527
        %v3529 = vpop.f32.mrf.mxu0
        %v3530 = vadd.f32 0.0, %v3529
        %3531 = vmatmul.bf16.gmra.mxu0 %v3199
        %v3532 = vpop.f32.mrf.mxu0
        %v3533 = vadd.f32 0.0, %v3532
        %v3534 = vpop.f32.mrf.mxu0
        %v3535 = vadd.f32 0.0, %v3534
        %3536 = vmatmul.bf16.gmra.mxu0 %v3201
        %v3537 = vpop.f32.mrf.mxu0
        %v3538 = vadd.f32 0.0, %v3537
        %v3539 = vpop.f32.mrf.mxu0
        %v3540 = vadd.f32 0.0, %v3539
        %3541 = vdwg.mxu0
        %3542 = vmatpush.bf16.msra.mxu0 %v3362
        %3543 = vmatpush.bf16.msra.mxu0 %v3360
        %3544 = vmatpush.bf16.msra.mxu0 %v3358
        %3545 = vmatpush.bf16.msra.mxu0 %v3356
        %3546 = vmatpush.bf16.msra.mxu0 %v3354
        %3547 = vmatpush.bf16.msra.mxu0 %v3352
        %3548 = vmatpush.bf16.msra.mxu0 %v3350
        %3549 = vmatpush.bf16.msra.mxu0 %v3348
        %3550 = vmatmul.bf16.gmra.mxu0 %v3188
        %v3551 = vpop.f32.mrf.mxu0
        %v3552 = vadd.f32 %v3503, %v3551
        %v3553 = vpop.f32.mrf.mxu0
        %v3554 = vadd.f32 %v3505, %v3553
        %3555 = vmatmul.bf16.gmra.mxu0 %v3190
        %v3556 = vpop.f32.mrf.mxu0
        %v3557 = vadd.f32 %v3508, %v3556
        %v3558 = vpop.f32.mrf.mxu0
        %v3559 = vadd.f32 %v3510, %v3558
        %3560 = vmatmul.bf16.gmra.mxu0 %v3192
        %v3561 = vpop.f32.mrf.mxu0
        %v3562 = vadd.f32 %v3513, %v3561
        %v3563 = vpop.f32.mrf.mxu0
        %v3564 = vadd.f32 %v3515, %v3563
        %3565 = vmatmul.bf16.gmra.mxu0 %v3194
        %v3566 = vpop.f32.mrf.mxu0
        %v3567 = vadd.f32 %v3518, %v3566
        %v3568 = vpop.f32.mrf.mxu0
        %v3569 = vadd.f32 %v3520, %v3568
        %3570 = vmatmul.bf16.gmra.mxu0 %v3196
        %v3571 = vpop.f32.mrf.mxu0
        %v3572 = vadd.f32 %v3523, %v3571
        %v3573 = vpop.f32.mrf.mxu0
        %v3574 = vadd.f32 %v3525, %v3573
        %3575 = vmatmul.bf16.gmra.mxu0 %v3198
        %v3576 = vpop.f32.mrf.mxu0
        %v3577 = vadd.f32 %v3528, %v3576
        %v3578 = vpop.f32.mrf.mxu0
        %v3579 = vadd.f32 %v3530, %v3578
        %3580 = vmatmul.bf16.gmra.mxu0 %v3200
        %v3581 = vpop.f32.mrf.mxu0
        %v3582 = vadd.f32 %v3533, %v3581
        %v3583 = vpop.f32.mrf.mxu0
        %v3584 = vadd.f32 %v3535, %v3583
        %3585 = vmatmul.bf16.gmra.mxu0 %v3202
        %v3586 = vpop.f32.mrf.mxu0
        %v3587 = vadd.f32 %v3538, %v3586
        %v3588 = vpop.f32.mrf.mxu0
        %v3589 = vadd.f32 %v3540, %v3588
        %3590 = vdwg.mxu0
        %v3591 = vadd.f32 %v3454, %v3552
        %v3592 = vadd.f32 %v3456, %v3554
        %v3593 = vadd.f32 %v3459, %v3557
        %v3594 = vadd.f32 %v3461, %v3559
        %v3595 = vadd.f32 %v3464, %v3562
        %v3596 = vadd.f32 %v3466, %v3564
        %v3597 = vadd.f32 %v3469, %v3567
        %v3598 = vadd.f32 %v3471, %v3569
        %v3599 = vadd.f32 %v3474, %v3572
        %v3600 = vadd.f32 %v3476, %v3574
        %v3601 = vadd.f32 %v3479, %v3577
        %v3602 = vadd.f32 %v3481, %v3579
        %v3603 = vadd.f32 %v3484, %v3582
        %v3604 = vadd.f32 %v3486, %v3584
        %v3605 = vadd.f32 %v3489, %v3587
        %v3606 = vadd.f32 %v3491, %v3589
        %3607 = vst [vmem:[%s297 + $0x10] sm:$0xff] %v3591
        %3608 = vst [vmem:[%s297 + $0x30] sm:$0xff] %v3592
        %3609 = vst [vmem:[%s297 + $0x50] sm:$0xff] %v3593
        %3610 = vst [vmem:[%s297 + $0x70] sm:$0xff] %v3594
        %3611 = vst [vmem:[%s297 + $0x90] sm:$0xff] %v3595
        %3612 = vst [vmem:[%s297 + $0xb0] sm:$0xff] %v3596
        %3613 = vst [vmem:[%s297 + $0xd0] sm:$0xff] %v3597
        %3614 = vst [vmem:[%s297 + $0xf0] sm:$0xff] %v3598
        %3615 = vst [vmem:[%s297 + $0x110] sm:$0xff] %v3599
        %3616 = vst [vmem:[%s297 + $0x130] sm:$0xff] %v3600
        %3617 = vst [vmem:[%s297 + $0x150] sm:$0xff] %v3601
        %3618 = vst [vmem:[%s297 + $0x170] sm:$0xff] %v3602
        %3619 = vst [vmem:[%s297 + $0x190] sm:$0xff] %v3603
        %3620 = vst [vmem:[%s297 + $0x1b0] sm:$0xff] %v3604
        %3621 = vst [vmem:[%s297 + $0x1d0] sm:$0xff] %v3605
        %3622 = vst [vmem:[%s297 + $0x1f0] sm:$0xff] %v3606
        %v3623 = vld [vmem:[%s306] sm:$0xff]
        %v3624 = vld [vmem:[%s306 + $0x8] sm:$0xff]
        %v3625 = vld [vmem:[%s306 + $0x10] sm:$0xff]
        %v3626 = vld [vmem:[%s306 + $0x18] sm:$0xff]
        %v3627 = vld [vmem:[%s306 + $0x20] sm:$0xff]
        %v3628 = vld [vmem:[%s306 + $0x28] sm:$0xff]
        %v3629 = vld [vmem:[%s306 + $0x30] sm:$0xff]
        %v3630 = vld [vmem:[%s306 + $0x38] sm:$0xff]
        %v3631 = vld [vmem:[%s306 + $0x40] sm:$0xff]
        %v3632 = vld [vmem:[%s306 + $0x48] sm:$0xff]
        %v3633 = vld [vmem:[%s306 + $0x50] sm:$0xff]
        %v3634 = vld [vmem:[%s306 + $0x58] sm:$0xff]
        %v3635 = vld [vmem:[%s306 + $0x60] sm:$0xff]
        %v3636 = vld [vmem:[%s306 + $0x68] sm:$0xff]
        %v3637 = vld [vmem:[%s306 + $0x70] sm:$0xff]
        %v3638 = vld [vmem:[%s306 + $0x78] sm:$0xff]
        %v3639 = vadd.s32 %v3623, 257
        %v3640 = vadd.s32 %v3624, 257
        %v3641 = vadd.s32 %v3625, 257
        %v3642 = vadd.s32 %v3626, 257
        %v3643 = vadd.s32 %v3627, 257
        %v3644 = vadd.s32 %v3628, 257
        %v3645 = vadd.s32 %v3629, 257
        %v3646 = vadd.s32 %v3630, 257
        %v3647 = vadd.s32 %v3631, 257
        %v3648 = vadd.s32 %v3632, 257
        %v3649 = vadd.s32 %v3633, 257
        %v3650 = vadd.s32 %v3634, 257
        %v3651 = vadd.s32 %v3635, 257
        %v3652 = vadd.s32 %v3636, 257
        %v3653 = vadd.s32 %v3637, 257
        %v3654 = vadd.s32 %v3638, 257
        %3655 = vset.pattern.permute.xlu0 6
        %3656 = vperm.xlu0 %3655, %v3623
        %v3657 = vpop.permute.xlu0 %3656
        %3658 = vset.pattern.permute.xlu0 6
        %3659 = vperm.xlu0 %3658, %v3624
        %v3660 = vpop.permute.xlu0 %3659
        %3661 = vset.pattern.permute.xlu0 6
        %3662 = vperm.xlu0 %3661, %v3625
        %v3663 = vpop.permute.xlu0 %3662
        %3664 = vset.pattern.permute.xlu0 6
        %3665 = vperm.xlu0 %3664, %v3626
        %v3666 = vpop.permute.xlu0 %3665
        %3667 = vset.pattern.permute.xlu0 6
        %3668 = vperm.xlu0 %3667, %v3627
        %v3669 = vpop.permute.xlu0 %3668
        %3670 = vset.pattern.permute.xlu0 6
        %3671 = vperm.xlu0 %3670, %v3628
        %v3672 = vpop.permute.xlu0 %3671
        %3673 = vset.pattern.permute.xlu0 6
        %3674 = vperm.xlu0 %3673, %v3629
        %v3675 = vpop.permute.xlu0 %3674
        %3676 = vset.pattern.permute.xlu0 6
        %3677 = vperm.xlu0 %3676, %v3630
        %v3678 = vpop.permute.xlu0 %3677
        %3679 = vset.pattern.permute.xlu0 6
        %3680 = vperm.xlu0 %3679, %v3631
        %v3681 = vpop.permute.xlu0 %3680
        %3682 = vset.pattern.permute.xlu0 6
        %3683 = vperm.xlu0 %3682, %v3632
        %v3684 = vpop.permute.xlu0 %3683
        %3685 = vset.pattern.permute.xlu0 6
        %3686 = vperm.xlu0 %3685, %v3633
        %v3687 = vpop.permute.xlu0 %3686
        %3688 = vset.pattern.permute.xlu0 6
        %3689 = vperm.xlu0 %3688, %v3634
        %v3690 = vpop.permute.xlu0 %3689
        %3691 = vset.pattern.permute.xlu0 6
        %3692 = vperm.xlu0 %3691, %v3635
        %v3693 = vpop.permute.xlu0 %3692
        %3694 = vset.pattern.permute.xlu0 6
        %3695 = vperm.xlu0 %3694, %v3636
        %v3696 = vpop.permute.xlu0 %3695
        %3697 = vset.pattern.permute.xlu0 6
        %3698 = vperm.xlu0 %3697, %v3637
        %v3699 = vpop.permute.xlu0 %3698
        %3700 = vset.pattern.permute.xlu0 6
        %3701 = vperm.xlu0 %3700, %v3638
        %v3702 = vpop.permute.xlu0 %3701
        %vm3703 = vcmp.eq.s32.totalorder %v351, %v3657
        %vm3704 = vcmp.eq.s32.totalorder %v352, %v3657
        %vm3705 = vcmp.eq.s32.totalorder %v353, %v3657
        %vm3706 = vcmp.eq.s32.totalorder %v351, %v3660
        %vm3707 = vcmp.eq.s32.totalorder %v352, %v3660
        %vm3708 = vcmp.eq.s32.totalorder %v353, %v3660
        %vm3709 = vcmp.eq.s32.totalorder %v351, %v3663
        %vm3710 = vcmp.eq.s32.totalorder %v352, %v3663
        %vm3711 = vcmp.eq.s32.totalorder %v353, %v3663
        %vm3712 = vcmp.eq.s32.totalorder %v351, %v3666
        %vm3713 = vcmp.eq.s32.totalorder %v352, %v3666
        %vm3714 = vcmp.eq.s32.totalorder %v353, %v3666
        %vm3715 = vcmp.eq.s32.totalorder %v351, %v3669
        %vm3716 = vcmp.eq.s32.totalorder %v352, %v3669
        %vm3717 = vcmp.eq.s32.totalorder %v353, %v3669
        %vm3718 = vcmp.eq.s32.totalorder %v351, %v3672
        %vm3719 = vcmp.eq.s32.totalorder %v352, %v3672
        %vm3720 = vcmp.eq.s32.totalorder %v353, %v3672
        %vm3721 = vcmp.eq.s32.totalorder %v351, %v3675
        %vm3722 = vcmp.eq.s32.totalorder %v352, %v3675
        %vm3723 = vcmp.eq.s32.totalorder %v353, %v3675
        %vm3724 = vcmp.eq.s32.totalorder %v351, %v3678
        %vm3725 = vcmp.eq.s32.totalorder %v352, %v3678
        %vm3726 = vcmp.eq.s32.totalorder %v353, %v3678
        %vm3727 = vcmp.eq.s32.totalorder %v351, %v3681
        %vm3728 = vcmp.eq.s32.totalorder %v352, %v3681
        %vm3729 = vcmp.eq.s32.totalorder %v353, %v3681
        %vm3730 = vcmp.eq.s32.totalorder %v351, %v3684
        %vm3731 = vcmp.eq.s32.totalorder %v352, %v3684
        %vm3732 = vcmp.eq.s32.totalorder %v353, %v3684
        %vm3733 = vcmp.eq.s32.totalorder %v351, %v3687
        %vm3734 = vcmp.eq.s32.totalorder %v352, %v3687
        %vm3735 = vcmp.eq.s32.totalorder %v353, %v3687
        %vm3736 = vcmp.eq.s32.totalorder %v351, %v3690
        %vm3737 = vcmp.eq.s32.totalorder %v352, %v3690
        %vm3738 = vcmp.eq.s32.totalorder %v353, %v3690
        %vm3739 = vcmp.eq.s32.totalorder %v351, %v3693
        %vm3740 = vcmp.eq.s32.totalorder %v352, %v3693
        %vm3741 = vcmp.eq.s32.totalorder %v353, %v3693
        %vm3742 = vcmp.eq.s32.totalorder %v351, %v3696
        %vm3743 = vcmp.eq.s32.totalorder %v352, %v3696
        %vm3744 = vcmp.eq.s32.totalorder %v353, %v3696
        %vm3745 = vcmp.eq.s32.totalorder %v351, %v3699
        %vm3746 = vcmp.eq.s32.totalorder %v352, %v3699
        %vm3747 = vcmp.eq.s32.totalorder %v353, %v3699
        %vm3748 = vcmp.eq.s32.totalorder %v351, %v3702
        %vm3749 = vcmp.eq.s32.totalorder %v352, %v3702
        %vm3750 = vcmp.eq.s32.totalorder %v353, %v3702
        %3751 = vset.pattern.permute.xlu0 7
        %3752 = vperm.xlu0 %3751, %v3639
        %v3753 = vpop.permute.xlu0 %3752
        %3754 = vset.pattern.permute.xlu0 7
        %3755 = vperm.xlu0 %3754, %v3640
        %v3756 = vpop.permute.xlu0 %3755
        %3757 = vset.pattern.permute.xlu0 7
        %3758 = vperm.xlu0 %3757, %v3641
        %v3759 = vpop.permute.xlu0 %3758
        %3760 = vset.pattern.permute.xlu0 7
        %3761 = vperm.xlu0 %3760, %v3642
        %v3762 = vpop.permute.xlu0 %3761
        %3763 = vset.pattern.permute.xlu0 7
        %3764 = vperm.xlu0 %3763, %v3643
        %v3765 = vpop.permute.xlu0 %3764
        %3766 = vset.pattern.permute.xlu0 7
        %3767 = vperm.xlu0 %3766, %v3644
        %v3768 = vpop.permute.xlu0 %3767
        %3769 = vset.pattern.permute.xlu0 7
        %3770 = vperm.xlu0 %3769, %v3645
        %v3771 = vpop.permute.xlu0 %3770
        %3772 = vset.pattern.permute.xlu0 7
        %3773 = vperm.xlu0 %3772, %v3646
        %v3774 = vpop.permute.xlu0 %3773
        %3775 = vset.pattern.permute.xlu0 7
        %3776 = vperm.xlu0 %3775, %v3647
        %v3777 = vpop.permute.xlu0 %3776
        %3778 = vset.pattern.permute.xlu0 7
        %3779 = vperm.xlu0 %3778, %v3648
        %v3780 = vpop.permute.xlu0 %3779
        %3781 = vset.pattern.permute.xlu0 7
        %3782 = vperm.xlu0 %3781, %v3649
        %v3783 = vpop.permute.xlu0 %3782
        %3784 = vset.pattern.permute.xlu0 7
        %3785 = vperm.xlu0 %3784, %v3650
        %v3786 = vpop.permute.xlu0 %3785
        %3787 = vset.pattern.permute.xlu0 7
        %3788 = vperm.xlu0 %3787, %v3651
        %v3789 = vpop.permute.xlu0 %3788
        %3790 = vset.pattern.permute.xlu0 7
        %3791 = vperm.xlu0 %3790, %v3652
        %v3792 = vpop.permute.xlu0 %3791
        %3793 = vset.pattern.permute.xlu0 7
        %3794 = vperm.xlu0 %3793, %v3653
        %v3795 = vpop.permute.xlu0 %3794
        %3796 = vset.pattern.permute.xlu0 7
        %3797 = vperm.xlu0 %3796, %v3654
        %v3798 = vpop.permute.xlu0 %3797
        %vm3799 = vcmp.eq.s32.totalorder %v351, %v3753
        %vm3800 = vcmp.eq.s32.totalorder %v352, %v3753
        %vm3801 = vcmp.eq.s32.totalorder %v353, %v3753
        %vm3802 = vcmp.eq.s32.totalorder %v351, %v3756
        %vm3803 = vcmp.eq.s32.totalorder %v352, %v3756
        %vm3804 = vcmp.eq.s32.totalorder %v353, %v3756
        %vm3805 = vcmp.eq.s32.totalorder %v351, %v3759
        %vm3806 = vcmp.eq.s32.totalorder %v352, %v3759
        %vm3807 = vcmp.eq.s32.totalorder %v353, %v3759
        %vm3808 = vcmp.eq.s32.totalorder %v351, %v3762
        %vm3809 = vcmp.eq.s32.totalorder %v352, %v3762
        %vm3810 = vcmp.eq.s32.totalorder %v353, %v3762
        %vm3811 = vcmp.eq.s32.totalorder %v351, %v3765
        %vm3812 = vcmp.eq.s32.totalorder %v352, %v3765
        %vm3813 = vcmp.eq.s32.totalorder %v353, %v3765
        %vm3814 = vcmp.eq.s32.totalorder %v351, %v3768
        %vm3815 = vcmp.eq.s32.totalorder %v352, %v3768
        %vm3816 = vcmp.eq.s32.totalorder %v353, %v3768
        %vm3817 = vcmp.eq.s32.totalorder %v351, %v3771
        %vm3818 = vcmp.eq.s32.totalorder %v352, %v3771
        %vm3819 = vcmp.eq.s32.totalorder %v353, %v3771
        %vm3820 = vcmp.eq.s32.totalorder %v351, %v3774
        %vm3821 = vcmp.eq.s32.totalorder %v352, %v3774
        %vm3822 = vcmp.eq.s32.totalorder %v353, %v3774
        %vm3823 = vcmp.eq.s32.totalorder %v351, %v3777
        %vm3824 = vcmp.eq.s32.totalorder %v352, %v3777
        %vm3825 = vcmp.eq.s32.totalorder %v353, %v3777
        %vm3826 = vcmp.eq.s32.totalorder %v351, %v3780
        %vm3827 = vcmp.eq.s32.totalorder %v352, %v3780
        %vm3828 = vcmp.eq.s32.totalorder %v353, %v3780
        %vm3829 = vcmp.eq.s32.totalorder %v351, %v3783
        %vm3830 = vcmp.eq.s32.totalorder %v352, %v3783
        %vm3831 = vcmp.eq.s32.totalorder %v353, %v3783
        %vm3832 = vcmp.eq.s32.totalorder %v351, %v3786
        %vm3833 = vcmp.eq.s32.totalorder %v352, %v3786
        %vm3834 = vcmp.eq.s32.totalorder %v353, %v3786
        %vm3835 = vcmp.eq.s32.totalorder %v351, %v3789
        %vm3836 = vcmp.eq.s32.totalorder %v352, %v3789
        %vm3837 = vcmp.eq.s32.totalorder %v353, %v3789
        %vm3838 = vcmp.eq.s32.totalorder %v351, %v3792
        %vm3839 = vcmp.eq.s32.totalorder %v352, %v3792
        %vm3840 = vcmp.eq.s32.totalorder %v353, %v3792
        %vm3841 = vcmp.eq.s32.totalorder %v351, %v3795
        %vm3842 = vcmp.eq.s32.totalorder %v352, %v3795
        %vm3843 = vcmp.eq.s32.totalorder %v353, %v3795
        %vm3844 = vcmp.eq.s32.totalorder %v351, %v3798
        %vm3845 = vcmp.eq.s32.totalorder %v352, %v3798
        %vm3846 = vcmp.eq.s32.totalorder %v353, %v3798
        %vm3847 = vmor %vm3703, %vm3799
        %vm3848 = vmor %vm3704, %vm3800
        %vm3849 = vmor %vm3705, %vm3801
        %vm3850 = vmor %vm3706, %vm3802
        %vm3851 = vmor %vm3707, %vm3803
        %vm3852 = vmor %vm3708, %vm3804
        %vm3853 = vmor %vm3709, %vm3805
        %vm3854 = vmor %vm3710, %vm3806
        %vm3855 = vmor %vm3711, %vm3807
        %vm3856 = vmor %vm3712, %vm3808
        %vm3857 = vmor %vm3713, %vm3809
        %vm3858 = vmor %vm3714, %vm3810
        %vm3859 = vmor %vm3715, %vm3811
        %vm3860 = vmor %vm3716, %vm3812
        %vm3861 = vmor %vm3717, %vm3813
        %vm3862 = vmor %vm3718, %vm3814
        %vm3863 = vmor %vm3719, %vm3815
        %vm3864 = vmor %vm3720, %vm3816
        %vm3865 = vmor %vm3721, %vm3817
        %vm3866 = vmor %vm3722, %vm3818
        %vm3867 = vmor %vm3723, %vm3819
        %vm3868 = vmor %vm3724, %vm3820
        %vm3869 = vmor %vm3725, %vm3821
        %vm3870 = vmor %vm3726, %vm3822
        %vm3871 = vmor %vm3727, %vm3823
        %vm3872 = vmor %vm3728, %vm3824
        %vm3873 = vmor %vm3729, %vm3825
        %vm3874 = vmor %vm3730, %vm3826
        %vm3875 = vmor %vm3731, %vm3827
        %vm3876 = vmor %vm3732, %vm3828
        %vm3877 = vmor %vm3733, %vm3829
        %vm3878 = vmor %vm3734, %vm3830
        %vm3879 = vmor %vm3735, %vm3831
        %vm3880 = vmor %vm3736, %vm3832
        %vm3881 = vmor %vm3737, %vm3833
        %vm3882 = vmor %vm3738, %vm3834
        %vm3883 = vmor %vm3739, %vm3835
        %vm3884 = vmor %vm3740, %vm3836
        %vm3885 = vmor %vm3741, %vm3837
        %vm3886 = vmor %vm3742, %vm3838
        %vm3887 = vmor %vm3743, %vm3839
        %vm3888 = vmor %vm3744, %vm3840
        %vm3889 = vmor %vm3745, %vm3841
        %vm3890 = vmor %vm3746, %vm3842
        %vm3891 = vmor %vm3747, %vm3843
        %vm3892 = vmor %vm3748, %vm3844
        %vm3893 = vmor %vm3749, %vm3845
        %vm3894 = vmor %vm3750, %vm3846
        %v3895 = vsel %vm3847, 1, 0
        %v3896 = vsel %vm3848, 1, 0
        %v3897 = vsel %vm3849, 1, 0
        %v3898 = vsel %vm3850, 1, 0
        %v3899 = vsel %vm3851, 1, 0
        %v3900 = vsel %vm3852, 1, 0
        %v3901 = vsel %vm3853, 1, 0
        %v3902 = vsel %vm3854, 1, 0
        %v3903 = vsel %vm3855, 1, 0
        %v3904 = vsel %vm3856, 1, 0
        %v3905 = vsel %vm3857, 1, 0
        %v3906 = vsel %vm3858, 1, 0
        %v3907 = vsel %vm3859, 1, 0
        %v3908 = vsel %vm3860, 1, 0
        %v3909 = vsel %vm3861, 1, 0
        %v3910 = vsel %vm3862, 1, 0
        %v3911 = vsel %vm3863, 1, 0
        %v3912 = vsel %vm3864, 1, 0
        %v3913 = vsel %vm3865, 1, 0
        %v3914 = vsel %vm3866, 1, 0
        %v3915 = vsel %vm3867, 1, 0
        %v3916 = vsel %vm3868, 1, 0
        %v3917 = vsel %vm3869, 1, 0
        %v3918 = vsel %vm3870, 1, 0
        %v3919 = vsel %vm3871, 1, 0
        %v3920 = vsel %vm3872, 1, 0
        %v3921 = vsel %vm3873, 1, 0
        %v3922 = vsel %vm3874, 1, 0
        %v3923 = vsel %vm3875, 1, 0
        %v3924 = vsel %vm3876, 1, 0
        %v3925 = vsel %vm3877, 1, 0
        %v3926 = vsel %vm3878, 1, 0
        %v3927 = vsel %vm3879, 1, 0
        %v3928 = vsel %vm3880, 1, 0
        %v3929 = vsel %vm3881, 1, 0
        %v3930 = vsel %vm3882, 1, 0
        %v3931 = vsel %vm3883, 1, 0
        %v3932 = vsel %vm3884, 1, 0
        %v3933 = vsel %vm3885, 1, 0
        %v3934 = vsel %vm3886, 1, 0
        %v3935 = vsel %vm3887, 1, 0
        %v3936 = vsel %vm3888, 1, 0
        %v3937 = vsel %vm3889, 1, 0
        %v3938 = vsel %vm3890, 1, 0
        %v3939 = vsel %vm3891, 1, 0
        %v3940 = vsel %vm3892, 1, 0
        %v3941 = vsel %vm3893, 1, 0
        %v3942 = vsel %vm3894, 1, 0
        %v3943 = vcvt.s32.f32 %v3895
        %v3944 = vcvt.s32.f32 %v3896
        %v3945 = vcvt.s32.f32 %v3897
        %v3946 = vcvt.s32.f32 %v3898
        %v3947 = vcvt.s32.f32 %v3899
        %v3948 = vcvt.s32.f32 %v3900
        %v3949 = vcvt.s32.f32 %v3901
        %v3950 = vcvt.s32.f32 %v3902
        %v3951 = vcvt.s32.f32 %v3903
        %v3952 = vcvt.s32.f32 %v3904
        %v3953 = vcvt.s32.f32 %v3905
        %v3954 = vcvt.s32.f32 %v3906
        %v3955 = vcvt.s32.f32 %v3907
        %v3956 = vcvt.s32.f32 %v3908
        %v3957 = vcvt.s32.f32 %v3909
        %v3958 = vcvt.s32.f32 %v3910
        %v3959 = vcvt.s32.f32 %v3911
        %v3960 = vcvt.s32.f32 %v3912
        %v3961 = vcvt.s32.f32 %v3913
        %v3962 = vcvt.s32.f32 %v3914
        %v3963 = vcvt.s32.f32 %v3915
        %v3964 = vcvt.s32.f32 %v3916
        %v3965 = vcvt.s32.f32 %v3917
        %v3966 = vcvt.s32.f32 %v3918
        %v3967 = vcvt.s32.f32 %v3919
        %v3968 = vcvt.s32.f32 %v3920
        %v3969 = vcvt.s32.f32 %v3921
        %v3970 = vcvt.s32.f32 %v3922
        %v3971 = vcvt.s32.f32 %v3923
        %v3972 = vcvt.s32.f32 %v3924
        %v3973 = vcvt.s32.f32 %v3925
        %v3974 = vcvt.s32.f32 %v3926
        %v3975 = vcvt.s32.f32 %v3927
        %v3976 = vcvt.s32.f32 %v3928
        %v3977 = vcvt.s32.f32 %v3929
        %v3978 = vcvt.s32.f32 %v3930
        %v3979 = vcvt.s32.f32 %v3931
        %v3980 = vcvt.s32.f32 %v3932
        %v3981 = vcvt.s32.f32 %v3933
        %v3982 = vcvt.s32.f32 %v3934
        %v3983 = vcvt.s32.f32 %v3935
        %v3984 = vcvt.s32.f32 %v3936
        %v3985 = vcvt.s32.f32 %v3937
        %v3986 = vcvt.s32.f32 %v3938
        %v3987 = vcvt.s32.f32 %v3939
        %v3988 = vcvt.s32.f32 %v3940
        %v3989 = vcvt.s32.f32 %v3941
        %v3990 = vcvt.s32.f32 %v3942
        %v3991 = vpack.c.bf16 %v3946, %v3943
        %v3992 = vpack.c.bf16 %v3947, %v3944
        %v3993 = vpack.c.bf16 %v3948, %v3945
        %v3994 = vpack.c.bf16 %v3952, %v3949
        %v3995 = vpack.c.bf16 %v3953, %v3950
        %v3996 = vpack.c.bf16 %v3954, %v3951
        %v3997 = vpack.c.bf16 %v3958, %v3955
        %v3998 = vpack.c.bf16 %v3959, %v3956
        %v3999 = vpack.c.bf16 %v3960, %v3957
        %v4000 = vpack.c.bf16 %v3964, %v3961
        %v4001 = vpack.c.bf16 %v3965, %v3962
        %v4002 = vpack.c.bf16 %v3966, %v3963
        %v4003 = vpack.c.bf16 %v3970, %v3967
        %v4004 = vpack.c.bf16 %v3971, %v3968
        %v4005 = vpack.c.bf16 %v3972, %v3969
        %v4006 = vpack.c.bf16 %v3976, %v3973
        %v4007 = vpack.c.bf16 %v3977, %v3974
        %v4008 = vpack.c.bf16 %v3978, %v3975
        %v4009 = vpack.c.bf16 %v3982, %v3979
        %v4010 = vpack.c.bf16 %v3983, %v3980
        %v4011 = vpack.c.bf16 %v3984, %v3981
        %v4012 = vpack.c.bf16 %v3988, %v3985
        %v4013 = vpack.c.bf16 %v3989, %v3986
        %v4014 = vpack.c.bf16 %v3990, %v3987
        %v4015 = vld [vmem:[#allocation8] sm:$0xff]
        %v4016 = vld [vmem:[#allocation8 + $0x8] sm:$0xff]
        %v4017 = vld [vmem:[#allocation8 + $0x10] sm:$0xff]
        %v4018 = vld [vmem:[#allocation8 + $0x18] sm:$0xff]
        %v4019 = vld [vmem:[#allocation8 + $0x20] sm:$0xff]
        %v4020 = vld [vmem:[#allocation8 + $0x28] sm:$0xff]
        %v4021 = vld [vmem:[#allocation8 + $0x30] sm:$0xff]
        %v4022 = vld [vmem:[#allocation8 + $0x38] sm:$0xff]
        %v4023 = vld [vmem:[#allocation8 + $0x40] sm:$0xff]
        %v4024 = vld [vmem:[#allocation8 + $0x48] sm:$0xff]
        %v4025 = vld [vmem:[#allocation8 + $0x50] sm:$0xff]
        %v4026 = vld [vmem:[#allocation8 + $0x58] sm:$0xff]
        %v4027 = vld [vmem:[#allocation8 + $0x60] sm:$0xff]
        %v4028 = vld [vmem:[#allocation8 + $0x68] sm:$0xff]
        %v4029 = vld [vmem:[#allocation8 + $0x70] sm:$0xff]
        %v4030 = vld [vmem:[#allocation8 + $0x78] sm:$0xff]
        %v4031 = vld [vmem:[#allocation8 + $0x80] sm:$0xff]
        %v4032 = vld [vmem:[#allocation8 + $0x88] sm:$0xff]
        %v4033 = vld [vmem:[#allocation8 + $0x90] sm:$0xff]
        %v4034 = vld [vmem:[#allocation8 + $0x98] sm:$0xff]
        %v4035 = vld [vmem:[#allocation8 + $0xa0] sm:$0xff]
        %v4036 = vld [vmem:[#allocation8 + $0xa8] sm:$0xff]
        %v4037 = vld [vmem:[#allocation8 + $0xb0] sm:$0xff]
        %v4038 = vld [vmem:[#allocation8 + $0xb8] sm:$0xff]
        %v4039 = vld [vmem:[#allocation8 + $0xc0] sm:$0xff]
        %v4040 = vld [vmem:[#allocation8 + $0xc8] sm:$0xff]
        %v4041 = vld [vmem:[#allocation8 + $0xd0] sm:$0xff]
        %v4042 = vld [vmem:[#allocation8 + $0xd8] sm:$0xff]
        %v4043 = vld [vmem:[#allocation8 + $0xe0] sm:$0xff]
        %v4044 = vld [vmem:[#allocation8 + $0xe8] sm:$0xff]
        %v4045 = vld [vmem:[#allocation8 + $0xf0] sm:$0xff]
        %v4046 = vld [vmem:[#allocation8 + $0xf8] sm:$0xff]
        %v4047 = vld [vmem:[#allocation8 + $0x100] sm:$0xff]
        %v4048 = vld [vmem:[#allocation8 + $0x108] sm:$0xff]
        %v4049 = vld [vmem:[#allocation8 + $0x110] sm:$0xff]
        %v4050 = vld [vmem:[#allocation8 + $0x118] sm:$0xff]
        %v4051 = vld [vmem:[#allocation8 + $0x120] sm:$0xff]
        %v4052 = vld [vmem:[#allocation8 + $0x128] sm:$0xff]
        %v4053 = vld [vmem:[#allocation8 + $0x130] sm:$0xff]
        %v4054 = vld [vmem:[#allocation8 + $0x138] sm:$0xff]
        %v4055 = vld [vmem:[#allocation8 + $0x140] sm:$0xff]
        %v4056 = vld [vmem:[#allocation8 + $0x148] sm:$0xff]
        %v4057 = vld [vmem:[#allocation8 + $0x150] sm:$0xff]
        %v4058 = vld [vmem:[#allocation8 + $0x158] sm:$0xff]
        %v4059 = vld [vmem:[#allocation8 + $0x160] sm:$0xff]
        %v4060 = vld [vmem:[#allocation8 + $0x168] sm:$0xff]
        %v4061 = vld [vmem:[#allocation8 + $0x170] sm:$0xff]
        %v4062 = vld [vmem:[#allocation8 + $0x178] sm:$0xff]
        %v4111 = vunpack.c.l.b16 %v4015
        %v4112 = vunpack.c.h.b16 %v4015
        %v4113 = vunpack.c.l.b16 %v4016
        %v4114 = vunpack.c.h.b16 %v4016
        %v4115 = vunpack.c.l.b16 %v4017
        %v4116 = vunpack.c.h.b16 %v4017
        %v4117 = vunpack.c.l.b16 %v4018
        %v4118 = vunpack.c.h.b16 %v4018
        %v4119 = vunpack.c.l.b16 %v4019
        %v4120 = vunpack.c.h.b16 %v4019
        %v4121 = vunpack.c.l.b16 %v4020
        %v4122 = vunpack.c.h.b16 %v4020
        %v4123 = vunpack.c.l.b16 %v4021
        %v4124 = vunpack.c.h.b16 %v4021
        %v4125 = vunpack.c.l.b16 %v4022
        %v4126 = vunpack.c.h.b16 %v4022
        %v4127 = vunpack.c.l.b16 %v4023
        %v4128 = vunpack.c.h.b16 %v4023
        %v4129 = vunpack.c.l.b16 %v4024
        %v4130 = vunpack.c.h.b16 %v4024
        %v4131 = vunpack.c.l.b16 %v4025
        %v4132 = vunpack.c.h.b16 %v4025
        %v4133 = vunpack.c.l.b16 %v4026
        %v4134 = vunpack.c.h.b16 %v4026
        %v4135 = vunpack.c.l.b16 %v4027
        %v4136 = vunpack.c.h.b16 %v4027
        %v4137 = vunpack.c.l.b16 %v4028
        %v4138 = vunpack.c.h.b16 %v4028
        %v4139 = vunpack.c.l.b16 %v4029
        %v4140 = vunpack.c.h.b16 %v4029
        %v4141 = vunpack.c.l.b16 %v4030
        %v4142 = vunpack.c.h.b16 %v4030
        %v4143 = vunpack.c.l.b16 %v4031
        %v4144 = vunpack.c.h.b16 %v4031
        %v4145 = vunpack.c.l.b16 %v4032
        %v4146 = vunpack.c.h.b16 %v4032
        %v4147 = vunpack.c.l.b16 %v4033
        %v4148 = vunpack.c.h.b16 %v4033
        %v4149 = vunpack.c.l.b16 %v4034
        %v4150 = vunpack.c.h.b16 %v4034
        %v4151 = vunpack.c.l.b16 %v4035
        %v4152 = vunpack.c.h.b16 %v4035
        %v4153 = vunpack.c.l.b16 %v4036
        %v4154 = vunpack.c.h.b16 %v4036
        %v4155 = vunpack.c.l.b16 %v4037
        %v4156 = vunpack.c.h.b16 %v4037
        %v4157 = vunpack.c.l.b16 %v4038
        %v4158 = vunpack.c.h.b16 %v4038
        %v4159 = vunpack.c.l.b16 %v4039
        %v4160 = vunpack.c.h.b16 %v4039
        %v4161 = vunpack.c.l.b16 %v4040
        %v4162 = vunpack.c.h.b16 %v4040
        %v4163 = vunpack.c.l.b16 %v4041
        %v4164 = vunpack.c.h.b16 %v4041
        %v4165 = vunpack.c.l.b16 %v4042
        %v4166 = vunpack.c.h.b16 %v4042
        %v4167 = vunpack.c.l.b16 %v4043
        %v4168 = vunpack.c.h.b16 %v4043
        %v4169 = vunpack.c.l.b16 %v4044
        %v4170 = vunpack.c.h.b16 %v4044
        %v4171 = vunpack.c.l.b16 %v4045
        %v4172 = vunpack.c.h.b16 %v4045
        %v4173 = vunpack.c.l.b16 %v4046
        %v4174 = vunpack.c.h.b16 %v4046
        %v4175 = vunpack.c.l.b16 %v4047
        %v4176 = vunpack.c.h.b16 %v4047
        %v4177 = vunpack.c.l.b16 %v4048
        %v4178 = vunpack.c.h.b16 %v4048
        %v4179 = vunpack.c.l.b16 %v4049
        %v4180 = vunpack.c.h.b16 %v4049
        %v4181 = vunpack.c.l.b16 %v4050
        %v4182 = vunpack.c.h.b16 %v4050
        %v4183 = vunpack.c.l.b16 %v4051
        %v4184 = vunpack.c.h.b16 %v4051
        %v4185 = vunpack.c.l.b16 %v4052
        %v4186 = vunpack.c.h.b16 %v4052
        %v4187 = vunpack.c.l.b16 %v4053
        %v4188 = vunpack.c.h.b16 %v4053
        %v4189 = vunpack.c.l.b16 %v4054
        %v4190 = vunpack.c.h.b16 %v4054
        %v4191 = vunpack.c.l.b16 %v4055
        %v4192 = vunpack.c.h.b16 %v4055
        %v4193 = vunpack.c.l.b16 %v4056
        %v4194 = vunpack.c.h.b16 %v4056
        %v4195 = vunpack.c.l.b16 %v4057
        %v4196 = vunpack.c.h.b16 %v4057
        %v4197 = vunpack.c.l.b16 %v4058
        %v4198 = vunpack.c.h.b16 %v4058
        %v4199 = vunpack.c.l.b16 %v4059
        %v4200 = vunpack.c.h.b16 %v4059
        %v4201 = vunpack.c.l.b16 %v4060
        %v4202 = vunpack.c.h.b16 %v4060
        %v4203 = vunpack.c.l.b16 %v4061
        %v4204 = vunpack.c.h.b16 %v4061
        %v4205 = vunpack.c.l.b16 %v4062
        %v4206 = vunpack.c.h.b16 %v4062
        %v4207 = vpack.c.b16 %v4113, %v4111
        %v4208 = vpack.c.b16 %v4114, %v4112
        %v4209 = vpack.c.b16 %v4117, %v4115
        %v4210 = vpack.c.b16 %v4118, %v4116
        %v4211 = vpack.c.b16 %v4121, %v4119
        %v4212 = vpack.c.b16 %v4122, %v4120
        %v4213 = vpack.c.b16 %v4125, %v4123
        %v4214 = vpack.c.b16 %v4126, %v4124
        %v4215 = vpack.c.b16 %v4129, %v4127
        %v4216 = vpack.c.b16 %v4130, %v4128
        %v4217 = vpack.c.b16 %v4133, %v4131
        %v4218 = vpack.c.b16 %v4134, %v4132
        %v4219 = vpack.c.b16 %v4137, %v4135
        %v4220 = vpack.c.b16 %v4138, %v4136
        %v4221 = vpack.c.b16 %v4141, %v4139
        %v4222 = vpack.c.b16 %v4142, %v4140
        %v4223 = vpack.c.b16 %v4145, %v4143
        %v4224 = vpack.c.b16 %v4146, %v4144
        %v4225 = vpack.c.b16 %v4149, %v4147
        %v4226 = vpack.c.b16 %v4150, %v4148
        %v4227 = vpack.c.b16 %v4153, %v4151
        %v4228 = vpack.c.b16 %v4154, %v4152
        %v4229 = vpack.c.b16 %v4157, %v4155
        %v4230 = vpack.c.b16 %v4158, %v4156
        %v4231 = vpack.c.b16 %v4161, %v4159
        %v4232 = vpack.c.b16 %v4162, %v4160
        %v4233 = vpack.c.b16 %v4165, %v4163
        %v4234 = vpack.c.b16 %v4166, %v4164
        %v4235 = vpack.c.b16 %v4169, %v4167
        %v4236 = vpack.c.b16 %v4170, %v4168
        %v4237 = vpack.c.b16 %v4173, %v4171
        %v4238 = vpack.c.b16 %v4174, %v4172
        %v4239 = vpack.c.b16 %v4177, %v4175
        %v4240 = vpack.c.b16 %v4178, %v4176
        %v4241 = vpack.c.b16 %v4181, %v4179
        %v4242 = vpack.c.b16 %v4182, %v4180
        %v4243 = vpack.c.b16 %v4185, %v4183
        %v4244 = vpack.c.b16 %v4186, %v4184
        %v4245 = vpack.c.b16 %v4189, %v4187
        %v4246 = vpack.c.b16 %v4190, %v4188
        %v4247 = vpack.c.b16 %v4193, %v4191
        %v4248 = vpack.c.b16 %v4194, %v4192
        %v4249 = vpack.c.b16 %v4197, %v4195
        %v4250 = vpack.c.b16 %v4198, %v4196
        %v4251 = vpack.c.b16 %v4201, %v4199
        %v4252 = vpack.c.b16 %v4202, %v4200
        %v4253 = vpack.c.b16 %v4205, %v4203
        %v4254 = vpack.c.b16 %v4206, %v4204
        %4303 = vmatpush.bf16.msra.mxu0 %v4221
        %4304 = vmatpush.bf16.msra.mxu0 %v4219
        %4305 = vmatpush.bf16.msra.mxu0 %v4217
        %4306 = vmatpush.bf16.msra.mxu0 %v4215
        %4307 = vmatpush.bf16.msra.mxu0 %v4213
        %4308 = vmatpush.bf16.msra.mxu0 %v4211
        %4309 = vmatpush.bf16.msra.mxu0 %v4209
        %4310 = vmatpush.bf16.msra.mxu0 %v4207
        %4311 = vmatmul.bf16.gmra.mxu0 %v3991
        %v4312 = vpop.f32.mrf.mxu0
        %v4313 = vadd.f32 0.0, %v4312
        %v4314 = vpop.f32.mrf.mxu0
        %v4315 = vadd.f32 0.0, %v4314
        %4316 = vmatmul.bf16.gmra.mxu0 %v3994
        %v4317 = vpop.f32.mrf.mxu0
        %v4318 = vadd.f32 0.0, %v4317
        %v4319 = vpop.f32.mrf.mxu0
        %v4320 = vadd.f32 0.0, %v4319
        %4321 = vmatmul.bf16.gmra.mxu0 %v3997
        %v4322 = vpop.f32.mrf.mxu0
        %v4323 = vadd.f32 0.0, %v4322
        %v4324 = vpop.f32.mrf.mxu0
        %v4325 = vadd.f32 0.0, %v4324
        %4326 = vmatmul.bf16.gmra.mxu0 %v4000
        %v4327 = vpop.f32.mrf.mxu0
        %v4328 = vadd.f32 0.0, %v4327
        %v4329 = vpop.f32.mrf.mxu0
        %v4330 = vadd.f32 0.0, %v4329
        %4331 = vmatmul.bf16.gmra.mxu0 %v4003
        %v4332 = vpop.f32.mrf.mxu0
        %v4333 = vadd.f32 0.0, %v4332
        %v4334 = vpop.f32.mrf.mxu0
        %v4335 = vadd.f32 0.0, %v4334
        %4336 = vmatmul.bf16.gmra.mxu0 %v4006
        %v4337 = vpop.f32.mrf.mxu0
        %v4338 = vadd.f32 0.0, %v4337
        %v4339 = vpop.f32.mrf.mxu0
        %v4340 = vadd.f32 0.0, %v4339
        %4341 = vmatmul.bf16.gmra.mxu0 %v4009
        %v4342 = vpop.f32.mrf.mxu0
        %v4343 = vadd.f32 0.0, %v4342
        %v4344 = vpop.f32.mrf.mxu0
        %v4345 = vadd.f32 0.0, %v4344
        %4346 = vmatmul.bf16.gmra.mxu0 %v4012
        %v4347 = vpop.f32.mrf.mxu0
        %v4348 = vadd.f32 0.0, %v4347
        %v4349 = vpop.f32.mrf.mxu0
        %v4350 = vadd.f32 0.0, %v4349
        %4351 = vdwg.mxu0
        %4352 = vmatpush.bf16.msra.mxu0 %v4237
        %4353 = vmatpush.bf16.msra.mxu0 %v4235
        %4354 = vmatpush.bf16.msra.mxu0 %v4233
        %4355 = vmatpush.bf16.msra.mxu0 %v4231
        %4356 = vmatpush.bf16.msra.mxu0 %v4229
        %4357 = vmatpush.bf16.msra.mxu0 %v4227
        %4358 = vmatpush.bf16.msra.mxu0 %v4225
        %4359 = vmatpush.bf16.msra.mxu0 %v4223
        %4360 = vmatmul.bf16.gmra.mxu0 %v3992
        %v4361 = vpop.f32.mrf.mxu0
        %v4362 = vadd.f32 %v4313, %v4361
        %v4363 = vpop.f32.mrf.mxu0
        %v4364 = vadd.f32 %v4315, %v4363
        %4365 = vmatmul.bf16.gmra.mxu0 %v3995
        %v4366 = vpop.f32.mrf.mxu0
        %v4367 = vadd.f32 %v4318, %v4366
        %v4368 = vpop.f32.mrf.mxu0
        %v4369 = vadd.f32 %v4320, %v4368
        %4370 = vmatmul.bf16.gmra.mxu0 %v3998
        %v4371 = vpop.f32.mrf.mxu0
        %v4372 = vadd.f32 %v4323, %v4371
        %v4373 = vpop.f32.mrf.mxu0
        %v4374 = vadd.f32 %v4325, %v4373
        %4375 = vmatmul.bf16.gmra.mxu0 %v4001
        %v4376 = vpop.f32.mrf.mxu0
        %v4377 = vadd.f32 %v4328, %v4376
        %v4378 = vpop.f32.mrf.mxu0
        %v4379 = vadd.f32 %v4330, %v4378
        %4380 = vmatmul.bf16.gmra.mxu0 %v4004
        %v4381 = vpop.f32.mrf.mxu0
        %v4382 = vadd.f32 %v4333, %v4381
        %v4383 = vpop.f32.mrf.mxu0
        %v4384 = vadd.f32 %v4335, %v4383
        %4385 = vmatmul.bf16.gmra.mxu0 %v4007
        %v4386 = vpop.f32.mrf.mxu0
        %v4387 = vadd.f32 %v4338, %v4386
        %v4388 = vpop.f32.mrf.mxu0
        %v4389 = vadd.f32 %v4340, %v4388
        %4390 = vmatmul.bf16.gmra.mxu0 %v4010
        %v4391 = vpop.f32.mrf.mxu0
        %v4392 = vadd.f32 %v4343, %v4391
        %v4393 = vpop.f32.mrf.mxu0
        %v4394 = vadd.f32 %v4345, %v4393
        %4395 = vmatmul.bf16.gmra.mxu0 %v4013
        %v4396 = vpop.f32.mrf.mxu0
        %v4397 = vadd.f32 %v4348, %v4396
        %v4398 = vpop.f32.mrf.mxu0
        %v4399 = vadd.f32 %v4350, %v4398
        %4400 = vdwg.mxu0
        %4401 = vmatpush.bf16.msra.mxu0 %v4253
        %4402 = vmatpush.bf16.msra.mxu0 %v4251
        %4403 = vmatpush.bf16.msra.mxu0 %v4249
        %4404 = vmatpush.bf16.msra.mxu0 %v4247
        %4405 = vmatpush.bf16.msra.mxu0 %v4245
        %4406 = vmatpush.bf16.msra.mxu0 %v4243
        %4407 = vmatpush.bf16.msra.mxu0 %v4241
        %4408 = vmatpush.bf16.msra.mxu0 %v4239
        %4409 = vmatmul.bf16.gmra.mxu0 %v3993
        %v4410 = vpop.f32.mrf.mxu0
        %v4411 = vadd.f32 %v4362, %v4410
        %v4412 = vpop.f32.mrf.mxu0
        %v4413 = vadd.f32 %v4364, %v4412
        %4414 = vmatmul.bf16.gmra.mxu0 %v3996
        %v4415 = vpop.f32.mrf.mxu0
        %v4416 = vadd.f32 %v4367, %v4415
        %v4417 = vpop.f32.mrf.mxu0
        %v4418 = vadd.f32 %v4369, %v4417
        %4419 = vmatmul.bf16.gmra.mxu0 %v3999
        %v4420 = vpop.f32.mrf.mxu0
        %v4421 = vadd.f32 %v4372, %v4420
        %v4422 = vpop.f32.mrf.mxu0
        %v4423 = vadd.f32 %v4374, %v4422
        %4424 = vmatmul.bf16.gmra.mxu0 %v4002
        %v4425 = vpop.f32.mrf.mxu0
        %v4426 = vadd.f32 %v4377, %v4425
        %v4427 = vpop.f32.mrf.mxu0
        %v4428 = vadd.f32 %v4379, %v4427
        %4429 = vmatmul.bf16.gmra.mxu0 %v4005
        %v4430 = vpop.f32.mrf.mxu0
        %v4431 = vadd.f32 %v4382, %v4430
        %v4432 = vpop.f32.mrf.mxu0
        %v4433 = vadd.f32 %v4384, %v4432
        %4434 = vmatmul.bf16.gmra.mxu0 %v4008
        %v4435 = vpop.f32.mrf.mxu0
        %v4436 = vadd.f32 %v4387, %v4435
        %v4437 = vpop.f32.mrf.mxu0
        %v4438 = vadd.f32 %v4389, %v4437
        %4439 = vmatmul.bf16.gmra.mxu0 %v4011
        %v4440 = vpop.f32.mrf.mxu0
        %v4441 = vadd.f32 %v4392, %v4440
        %v4442 = vpop.f32.mrf.mxu0
        %v4443 = vadd.f32 %v4394, %v4442
        %4444 = vmatmul.bf16.gmra.mxu0 %v4014
        %v4445 = vpop.f32.mrf.mxu0
        %v4446 = vadd.f32 %v4397, %v4445
        %v4447 = vpop.f32.mrf.mxu0
        %v4448 = vadd.f32 %v4399, %v4447
        %4449 = vdwg.mxu0
        %4450 = vmatpush.bf16.msra.mxu0 %v4222
        %4451 = vmatpush.bf16.msra.mxu0 %v4220
        %4452 = vmatpush.bf16.msra.mxu0 %v4218
        %4453 = vmatpush.bf16.msra.mxu0 %v4216
        %4454 = vmatpush.bf16.msra.mxu0 %v4214
        %4455 = vmatpush.bf16.msra.mxu0 %v4212
        %4456 = vmatpush.bf16.msra.mxu0 %v4210
        %4457 = vmatpush.bf16.msra.mxu0 %v4208
        %4458 = vmatmul.bf16.gmra.mxu0 %v3991
        %v4459 = vpop.f32.mrf.mxu0
        %v4460 = vadd.f32 0.0, %v4459
        %v4461 = vpop.f32.mrf.mxu0
        %v4462 = vadd.f32 0.0, %v4461
        %4463 = vmatmul.bf16.gmra.mxu0 %v3994
        %v4464 = vpop.f32.mrf.mxu0
        %v4465 = vadd.f32 0.0, %v4464
        %v4466 = vpop.f32.mrf.mxu0
        %v4467 = vadd.f32 0.0, %v4466
        %4468 = vmatmul.bf16.gmra.mxu0 %v3997
        %v4469 = vpop.f32.mrf.mxu0
        %v4470 = vadd.f32 0.0, %v4469
        %v4471 = vpop.f32.mrf.mxu0
        %v4472 = vadd.f32 0.0, %v4471
        %4473 = vmatmul.bf16.gmra.mxu0 %v4000
        %v4474 = vpop.f32.mrf.mxu0
        %v4475 = vadd.f32 0.0, %v4474
        %v4476 = vpop.f32.mrf.mxu0
        %v4477 = vadd.f32 0.0, %v4476
        %4478 = vmatmul.bf16.gmra.mxu0 %v4003
        %v4479 = vpop.f32.mrf.mxu0
        %v4480 = vadd.f32 0.0, %v4479
        %v4481 = vpop.f32.mrf.mxu0
        %v4482 = vadd.f32 0.0, %v4481
        %4483 = vmatmul.bf16.gmra.mxu0 %v4006
        %v4484 = vpop.f32.mrf.mxu0
        %v4485 = vadd.f32 0.0, %v4484
        %v4486 = vpop.f32.mrf.mxu0
        %v4487 = vadd.f32 0.0, %v4486
        %4488 = vmatmul.bf16.gmra.mxu0 %v4009
        %v4489 = vpop.f32.mrf.mxu0
        %v4490 = vadd.f32 0.0, %v4489
        %v4491 = vpop.f32.mrf.mxu0
        %v4492 = vadd.f32 0.0, %v4491
        %4493 = vmatmul.bf16.gmra.mxu0 %v4012
        %v4494 = vpop.f32.mrf.mxu0
        %v4495 = vadd.f32 0.0, %v4494
        %v4496 = vpop.f32.mrf.mxu0
        %v4497 = vadd.f32 0.0, %v4496
        %4498 = vdwg.mxu0
        %4499 = vmatpush.bf16.msra.mxu0 %v4238
        %4500 = vmatpush.bf16.msra.mxu0 %v4236
        %4501 = vmatpush.bf16.msra.mxu0 %v4234
        %4502 = vmatpush.bf16.msra.mxu0 %v4232
        %4503 = vmatpush.bf16.msra.mxu0 %v4230
        %4504 = vmatpush.bf16.msra.mxu0 %v4228
        %4505 = vmatpush.bf16.msra.mxu0 %v4226
        %4506 = vmatpush.bf16.msra.mxu0 %v4224
        %4507 = vmatmul.bf16.gmra.mxu0 %v3992
        %v4508 = vpop.f32.mrf.mxu0
        %v4509 = vadd.f32 %v4460, %v4508
        %v4510 = vpop.f32.mrf.mxu0
        %v4511 = vadd.f32 %v4462, %v4510
        %4512 = vmatmul.bf16.gmra.mxu0 %v3995
        %v4513 = vpop.f32.mrf.mxu0
        %v4514 = vadd.f32 %v4465, %v4513
        %v4515 = vpop.f32.mrf.mxu0
        %v4516 = vadd.f32 %v4467, %v4515
        %4517 = vmatmul.bf16.gmra.mxu0 %v3998
        %v4518 = vpop.f32.mrf.mxu0
        %v4519 = vadd.f32 %v4470, %v4518
        %v4520 = vpop.f32.mrf.mxu0
        %v4521 = vadd.f32 %v4472, %v4520
        %4522 = vmatmul.bf16.gmra.mxu0 %v4001
        %v4523 = vpop.f32.mrf.mxu0
        %v4524 = vadd.f32 %v4475, %v4523
        %v4525 = vpop.f32.mrf.mxu0
        %v4526 = vadd.f32 %v4477, %v4525
        %4527 = vmatmul.bf16.gmra.mxu0 %v4004
        %v4528 = vpop.f32.mrf.mxu0
        %v4529 = vadd.f32 %v4480, %v4528
        %v4530 = vpop.f32.mrf.mxu0
        %v4531 = vadd.f32 %v4482, %v4530
        %4532 = vmatmul.bf16.gmra.mxu0 %v4007
        %v4533 = vpop.f32.mrf.mxu0
        %v4534 = vadd.f32 %v4485, %v4533
        %v4535 = vpop.f32.mrf.mxu0
        %v4536 = vadd.f32 %v4487, %v4535
        %4537 = vmatmul.bf16.gmra.mxu0 %v4010
        %v4538 = vpop.f32.mrf.mxu0
        %v4539 = vadd.f32 %v4490, %v4538
        %v4540 = vpop.f32.mrf.mxu0
        %v4541 = vadd.f32 %v4492, %v4540
        %4542 = vmatmul.bf16.gmra.mxu0 %v4013
        %v4543 = vpop.f32.mrf.mxu0
        %v4544 = vadd.f32 %v4495, %v4543
        %v4545 = vpop.f32.mrf.mxu0
        %v4546 = vadd.f32 %v4497, %v4545
        %4547 = vdwg.mxu0
        %4548 = vmatpush.bf16.msra.mxu0 %v4254
        %4549 = vmatpush.bf16.msra.mxu0 %v4252
        %4550 = vmatpush.bf16.msra.mxu0 %v4250
        %4551 = vmatpush.bf16.msra.mxu0 %v4248
        %4552 = vmatpush.bf16.msra.mxu0 %v4246
        %4553 = vmatpush.bf16.msra.mxu0 %v4244
        %4554 = vmatpush.bf16.msra.mxu0 %v4242
        %4555 = vmatpush.bf16.msra.mxu0 %v4240
        %4556 = vmatmul.bf16.gmra.mxu0 %v3993
        %v4557 = vpop.f32.mrf.mxu0
        %v4558 = vadd.f32 %v4509, %v4557
        %v4559 = vpop.f32.mrf.mxu0
        %v4560 = vadd.f32 %v4511, %v4559
        %4561 = vmatmul.bf16.gmra.mxu0 %v3996
        %v4562 = vpop.f32.mrf.mxu0
        %v4563 = vadd.f32 %v4514, %v4562
        %v4564 = vpop.f32.mrf.mxu0
        %v4565 = vadd.f32 %v4516, %v4564
        %4566 = vmatmul.bf16.gmra.mxu0 %v3999
        %v4567 = vpop.f32.mrf.mxu0
        %v4568 = vadd.f32 %v4519, %v4567
        %v4569 = vpop.f32.mrf.mxu0
        %v4570 = vadd.f32 %v4521, %v4569
        %4571 = vmatmul.bf16.gmra.mxu0 %v4002
        %v4572 = vpop.f32.mrf.mxu0
        %v4573 = vadd.f32 %v4524, %v4572
        %v4574 = vpop.f32.mrf.mxu0
        %v4575 = vadd.f32 %v4526, %v4574
        %4576 = vmatmul.bf16.gmra.mxu0 %v4005
        %v4577 = vpop.f32.mrf.mxu0
        %v4578 = vadd.f32 %v4529, %v4577
        %v4579 = vpop.f32.mrf.mxu0
        %v4580 = vadd.f32 %v4531, %v4579
        %4581 = vmatmul.bf16.gmra.mxu0 %v4008
        %v4582 = vpop.f32.mrf.mxu0
        %v4583 = vadd.f32 %v4534, %v4582
        %v4584 = vpop.f32.mrf.mxu0
        %v4585 = vadd.f32 %v4536, %v4584
        %4586 = vmatmul.bf16.gmra.mxu0 %v4011
        %v4587 = vpop.f32.mrf.mxu0
        %v4588 = vadd.f32 %v4539, %v4587
        %v4589 = vpop.f32.mrf.mxu0
        %v4590 = vadd.f32 %v4541, %v4589
        %4591 = vmatmul.bf16.gmra.mxu0 %v4014
        %v4592 = vpop.f32.mrf.mxu0
        %v4593 = vadd.f32 %v4544, %v4592
        %v4594 = vpop.f32.mrf.mxu0
        %v4595 = vadd.f32 %v4546, %v4594
        %4596 = vdwg.mxu0
        %v4597 = vadd.f32 %v4411, %v4558
        %v4598 = vadd.f32 %v4413, %v4560
        %v4599 = vadd.f32 %v4416, %v4563
        %v4600 = vadd.f32 %v4418, %v4565
        %v4601 = vadd.f32 %v4421, %v4568
        %v4602 = vadd.f32 %v4423, %v4570
        %v4603 = vadd.f32 %v4426, %v4573
        %v4604 = vadd.f32 %v4428, %v4575
        %v4605 = vadd.f32 %v4431, %v4578
        %v4606 = vadd.f32 %v4433, %v4580
        %v4607 = vadd.f32 %v4436, %v4583
        %v4608 = vadd.f32 %v4438, %v4585
        %v4609 = vadd.f32 %v4441, %v4588
        %v4610 = vadd.f32 %v4443, %v4590
        %v4611 = vadd.f32 %v4446, %v4593
        %v4612 = vadd.f32 %v4448, %v4595
        %4613 = vst [vmem:[%s297 + $0x18] sm:$0xff] %v4597
        %4614 = vst [vmem:[%s297 + $0x38] sm:$0xff] %v4598
        %4615 = vst [vmem:[%s297 + $0x58] sm:$0xff] %v4599
        %4616 = vst [vmem:[%s297 + $0x78] sm:$0xff] %v4600
        %4617 = vst [vmem:[%s297 + $0x98] sm:$0xff] %v4601
        %4618 = vst [vmem:[%s297 + $0xb8] sm:$0xff] %v4602
        %4619 = vst [vmem:[%s297 + $0xd8] sm:$0xff] %v4603
        %4620 = vst [vmem:[%s297 + $0xf8] sm:$0xff] %v4604
        %4621 = vst [vmem:[%s297 + $0x118] sm:$0xff] %v4605
        %4622 = vst [vmem:[%s297 + $0x138] sm:$0xff] %v4606
        %4623 = vst [vmem:[%s297 + $0x158] sm:$0xff] %v4607
        %4624 = vst [vmem:[%s297 + $0x178] sm:$0xff] %v4608
        %4625 = vst [vmem:[%s297 + $0x198] sm:$0xff] %v4609
        %4626 = vst [vmem:[%s297 + $0x1b8] sm:$0xff] %v4610
        %4627 = vst [vmem:[%s297 + $0x1d8] sm:$0xff] %v4611
        %4628 = vst [vmem:[%s297 + $0x1f8] sm:$0xff] %v4612
        %s4629 = sand.u32 %s140, 1
        %s4630 = scalar_lea.sflag [#allocation4], %s4629
        %s4631 = sand.u32 %s140, 1
        %s4632 = smul.addr %s4631, 512
        %s4633 = scalar_lea.vmem [#allocation10], %s4632
        // Predicated region
        $region57: #{tpu_custom_call.1} parent=39 // pred_check
          %p4634 = pneg %p150
        $region58: #{tpu_custom_call.1} parent=39 // pred_check_branch
          %4636 = sbr.rel (%p4634) target = $region60
        $region59: #{tpu_custom_call.1} parent=39 // pred_region
          %s4637 = smul.u32 16, %s22
          %s4638 = ssub.s32 25, %s4637
          %p4639 = scmp.lt.s32.totalorder %s4638, 16
          %s4640 = scalar_select %p4639, %s4638, 16
          %s4641 = smul.u32 8, %s4640
          %s4642 = smul.u32 %s4641, 4
          %s4643 = ssub.s32 512, %s4642
          %s4644 = sshll.u32 %s4643, 4
          %4645 = vsyncadd %s4630, %s4644
          %p4646 = scmp.ne.s32.totalorder 0, %s4642
          %s4647 = smul.addr %s4637, 4
          %s4648 = smul.addr %s4647, 8
          %s4649 = scalar_lea.hbm %s5, %s4648
          %s4650 = smul.u32 32, %s4640
          %s4651 = sshll.u32 %s4633, 4
          %s4652 = int_to_ptr.vmem [resolvable:$true] %s4651
          %s4653 = sshll.u32 %s4649, 4
          %s4654 = int_to_ptr.hbm [resolvable:$true] %s4653
          %s4655 = sshll.u32 %s4650, 4
          %4659 = dma.vmem_to_hbm [thread:$0]  (%p4646), %s4652, %s4655, %s4654, %s4630, 512, 512, 32
        $region60: #{tpu_custom_call.1} parent=39 // pred_fallthru
          _
      $region40: #{tpu_custom_call.1} parent=5 // pred_fallthru
        _
      %p4660 = scmp.le.s32.totalorder 2, %s17
      // Predicated region
      $region61: #{tpu_custom_call.1} parent=5 // pred_check
        %p4661 = pneg %p4660
      $region62: #{tpu_custom_call.1} parent=5 // pred_check_branch
        %4663 = sbr.rel (%p4661) target = $region64
      $region63: #{tpu_custom_call.1} parent=5 // pred_region
        %s4664 = ssub.s32 %s17, 2
        // Predicated region
        $region65: #{tpu_custom_call.1} parent=63 // pred_check
          %p4665 = pneg %p156
        $region66: #{tpu_custom_call.1} parent=63 // pred_check_branch
          %4667 = sbr.rel (%p4665) target = $region68
        $region67: #{tpu_custom_call.1} parent=63 // pred_region
          %s4668 = sand.u32 %s141, 1
          %s4669 = scalar_lea.sflag [#allocation4], %s4668
          %s4670 = sand.u32 %s141, 1
          %s4671 = smul.addr %s4670, 512
          %s4672 = scalar_lea.vmem [#allocation10], %s4671
          %4674 = dma.done %s4669, 8192
        $region68: #{tpu_custom_call.1} parent=63 // pred_fallthru
          _
      $region64: #{tpu_custom_call.1} parent=5 // pred_fallthru
        _
    $region6: #{tpu_custom_call.1} parent=1 // loop_footer
      %s21 = sadd.s32 1, %s17
    $region7: #{tpu_custom_call.1} parent=1 // loop_footer_branch
      %16 = sbr.rel target = $region3
    $region8: #{tpu_custom_call.1} parent=1 // loop_exit
      _
    %4675 = vsyncpa [#allocation3], 1
    %s4676 = scalar_lea.sflag [#allocation3], 1
    %4677 = vsyncpa %s4676, 1
    %4678 = vsyncpa [#allocation6], 1
    %4679 = vsyncpa [#allocation9], 1
    %4680 = vsyncpa [#allocation4], 1
    %s4681 = scalar_lea.sflag [#allocation4], 1
    %4682 = vsyncpa %s4681, 1

</llo_original>
